<compile_context>
chip_gen: v7x
topology: tpu7x:2x2x1
jax: 0.10.0
libtpu: 0.0.40
codegen_flags: <defaults>
</compile_context>

<pallas_src>
import jax
import jax.numpy as jnp
from jax import lax
from jax.experimental import pallas as pl
from jax.experimental.pallas import tpu as pltpu


# ----------------------------------------------------------------------------
# Pallas kernel
# ----------------------------------------------------------------------------
def _make_kernel(batch_tile, seq_lens, hid):
    t1, t2, c3 = seq_lens

    def kernel(idx1_ref, idx2_ref, idx3_ref,        # SMEM scalar-prefetch (B,T*) int32
               emb1_ref, emb2_ref, emb3_ref,        # VMEM embedding tables (V*, H)
               w_ref,                               # VMEM stacked folded weights (T_total, H)
               bias_ref,                            # SMEM (1,1) f32 folded bias
               o_ref,                               # VMEM (batch_tile, 1) output block
               acc_ref):                            # VMEM scratch (batch_tile, H)
        base = pl.program_id(0) * batch_tile

        sections = ((idx1_ref, emb1_ref, t1),
                    (idx2_ref, emb2_ref, t2),
                    (idx3_ref, emb3_ref, c3))

        def row_body(r, carry):
            row = base + r
            # Two accumulators: halves the serial vadd chain so gather loads
            # and FMAs can overlap.
            acc0 = jnp.zeros((1, hid), jnp.float32)
            acc1 = jnp.zeros((1, hid), jnp.float32)
            pos = 0                                  # static: position in stacked weight
            for idx_ref, emb_ref, length in sections:
                for t in range(length):              # static unroll over token positions
                    tok = idx_ref[row, t]             # scalar read from SMEM
                    contrib = emb_ref[pl.ds(tok, 1), :] * w_ref[pos:pos + 1, :]
                    if pos & 1:
                        acc1 = acc1 + contrib
                    else:
                        acc0 = acc0 + contrib
                    pos += 1
            acc_ref[pl.ds(r, 1), :] = acc0 + acc1
            return carry

        # Unroll small batch tiles for LLO visibility; loop larger ones to keep
        # code size / vreg live ranges bounded.
        lax.fori_loop(0, batch_tile, row_body, 0, unroll=(batch_tile <= 16))

        # Single vectorized lane reduce + a single store for the whole tile.
        o_ref[...] = jnp.sum(acc_ref[...], axis=1, keepdims=True) + bias_ref[0, 0]

    return kernel


# ----------------------------------------------------------------------------
# Wrapper: one pallas_call does the whole forward pass
# ----------------------------------------------------------------------------
def three_inputs_net_forward(params, whole_input, *, batch_tile=None):
    """`params` must come from prepare_kernel_params()."""
    input1, input2, input3 = whole_input
    b, t1 = input1.shape
    _, t2 = input2.shape
    _, c3 = input3.shape
    hid = params["title_emb"].shape[1]

    if batch_tile is None:
        batch_tile = 8 if (b % 8 == 0) else b        # keep sublane dim (8,.)-friendly
    assert b % batch_tile == 0, "batch must be a multiple of batch_tile"
    grid = (b // batch_tile,)

    kernel = _make_kernel(batch_tile, (t1, t2, c3), hid)

    def resident(arr):
        # Full-array block + constant index map -> fetched once, VMEM-resident.
        shape = arr.shape
        return pl.BlockSpec(shape, lambda *_: (0,) * len(shape))

    return pl.pallas_call(
        kernel,
        out_shape=jax.ShapeDtypeStruct((b, 1), jnp.float32),
        grid_spec=pltpu.PrefetchScalarGridSpec(
            num_scalar_prefetch=3,          # input1/input2/input3 -> SMEM
            grid=grid,
            in_specs=[
                resident(params["title_emb"]),
                resident(params["full_emb"]),
                resident(params["category_out"]),
                resident(params["w_fold"]),
                pl.BlockSpec(memory_space=pltpu.MemorySpace.SMEM),   # folded bias
            ],
            out_specs=pl.BlockSpec((batch_tile, 1), lambda i, *_: (i, 0)),
            scratch_shapes=[pltpu.VMEM((batch_tile, hid), jnp.float32)],
        ),
        compiler_params=pltpu.CompilerParams(
            dimension_semantics=("parallel",),   # batch tiles shard across TCs (v7x)
        ),
    )(
        input1.astype(jnp.int32), input2.astype(jnp.int32), input3.astype(jnp.int32),
        params["title_emb"], params["full_emb"], params["category_out"],
        params["w_fold"], params["bias_fold"],
    )


# ----------------------------------------------------------------------------
# Parameter handling
# ----------------------------------------------------------------------------
def init_torch_params(key, n_tokens, n_cat_features, concat_features, hid_size):
    """Parameters in the exact layout nn.Module uses (weight = (out, in))."""
    ks = jax.random.split(key, 7)
    return {
        "title_emb": jax.random.normal(ks[0], (n_tokens, hid_size), jnp.float32),
        "full_emb": jax.random.normal(ks[1], (n_tokens, hid_size), jnp.float32),
        "category_out": jax.random.normal(ks[2], (n_cat_features, hid_size), jnp.float32),
        "inter_w": 0.05 * jax.random.normal(ks[3], (hid_size * 2, concat_features), jnp.float32),
        "inter_b": 0.05 * jax.random.normal(ks[4], (hid_size * 2,), jnp.float32),
        "final_w": 0.05 * jax.random.normal(ks[5], (1, hid_size * 2), jnp.float32),
        "final_b": 0.05 * jax.random.normal(ks[6], (1,), jnp.float32),
    }


def prepare_kernel_params(torch_params, seq_lens):
    """One-time offline prep: fold the two Linears and undo permute(0,2,1)."""
    t1, t2, c3 = seq_lens
    hid = torch_params["title_emb"].shape[1]

    w1 = torch_params["inter_w"]        # (2H, F)
    b1 = torch_params["inter_b"]        # (2H,)
    w2 = torch_params["final_w"]        # (1, 2H)
    b2 = torch_params["final_b"]        # (1,)

    # Exact fold: no activation between the two Linear layers in the module.
    w_fold = (w1.T @ w2.T)[:, 0]                    # (F,)
    b_fold = (b1 @ w2.T + b2).reshape(1, 1)         # (1, 1)

    # PyTorch flatten order within each section is [h*T + t]; the kernel
    # consumes natural gather order [t, h] -> reshape (H,T).T per section,
    # then stack the three sections into one (T_total, H) weight.
    sections = []
    off = 0
    for t in (t1, t2, c3):
        sec = w_fold[off:off + hid * t].reshape(hid, t).T    # (T, H)
        sections.append(sec)
        off += hid * t
    w_stack = jnp.concatenate(sections, axis=0).astype(jnp.float32)  # (T_total, H)

    return {
        "title_emb": jnp.asarray(torch_params["title_emb"], jnp.float32),
        "full_emb": jnp.asarray(torch_params["full_emb"], jnp.float32),
        "category_out": jnp.asarray(torch_params["category_out"], jnp.float32),
        "w_fold": w_stack,
        "bias_fold": jnp.asarray(b_fold, jnp.float32),
    }


# ----------------------------------------------------------------------------
# Pure-JAX reference of the original PyTorch math (unfolded, unpermuted)
# ----------------------------------------------------------------------------
def ref_forward(torch_params, inputs):
    i1, i2, i3 = inputs

    def embed_perm_flatten(table, idx):
        e = jnp.take(table, idx, axis=0)            # (B, T, H)
        e = jnp.transpose(e, (0, 2, 1))             # (B, H, T)
        return e.reshape(e.shape[0], -1)            # (B, H*T)

    x = jnp.concatenate(
        [embed_perm_flatten(torch_params["title_emb"], i1),
         embed_perm_flatten(torch_params["full_emb"], i2),
         embed_perm_flatten(torch_params["category_out"], i3)], axis=1)
    h = x @ torch_params["inter_w"].T + torch_params["inter_b"]
    return h @ torch_params["final_w"].T + torch_params["final_b"]


if __name__ == "__main__":
    B = 16
    T1 = 8
    T2 = 8
    C3 = 3
    HID = 32
    N_TOKENS = 50
    N_CAT_FEATURES = 10
    CONCAT_FEATURES = HID * (T1 + T2 + C3)          # 608

    key = jax.random.PRNGKey(0)
    k_p, k1, k2, k3 = jax.random.split(key, 4)

    torch_params = init_torch_params(k_p, N_TOKENS, N_CAT_FEATURES, CONCAT_FEATURES, HID)
    kparams = prepare_kernel_params(torch_params, (T1, T2, C3))

    input1 = jax.random.randint(k1, (B, T1), 0, N_TOKENS, dtype=jnp.int32)
    input2 = jax.random.randint(k2, (B, T2), 0, N_TOKENS, dtype=jnp.int32)
    input3 = jax.random.randint(k3, (B, C3), 0, N_CAT_FEATURES, dtype=jnp.int32)

    out = three_inputs_net_forward(kparams, (input1, input2, input3))
    out = jax.block_until_ready(out)

    ref = ref_forward(torch_params, (input1, input2, input3))
    assert out.shape == (B, 1), out.shape
    assert jnp.allclose(out, ref, atol=1e-4, rtol=1e-4), (out, ref)

    print("KERNEL_OK")
</pallas_src>

<mosaic_0001>
module attributes {stable_mosaic.version = 11 : i64} {
  func.func @kernel(%arg0: i32, %arg1: memref<16x8xi32, #tpu.memory_space<smem>>, %arg2: memref<16x8xi32, #tpu.memory_space<smem>>, %arg3: memref<16x3xi32, #tpu.memory_space<smem>>, %arg4: memref<50x32xf32, #tpu.memory_space<vmem>>, %arg5: memref<50x32xf32, #tpu.memory_space<vmem>>, %arg6: memref<10x32xf32, #tpu.memory_space<vmem>>, %arg7: memref<19x32xf32, #tpu.memory_space<vmem>>, %arg8: memref<1x1xf32, #tpu.memory_space<smem>>, %arg9: memref<8x1xf32, #tpu.memory_space<vmem>>, %arg10: memref<8x32xf32, #tpu.memory_space<vmem>>) attributes {dimension_semantics = [#tpu.dimension_semantics<parallel>], iteration_bounds = array<i64: 2>, scalar_prefetch = 3 : i64, scratch_operands = 1 : i64, tpu.core_type = #tpu.core_type<tc>, window_params = [{pipeline_mode = #tpu.pipeline_mode<synchronous>, transform_indices = @transform_0, window_bounds = array<i64: 50, 32>}, {pipeline_mode = #tpu.pipeline_mode<synchronous>, transform_indices = @transform_1, window_bounds = array<i64: 50, 32>}, {pipeline_mode = #tpu.pipeline_mode<synchronous>, transform_indices = @transform_2, window_bounds = array<i64: 10, 32>}, {pipeline_mode = #tpu.pipeline_mode<synchronous>, transform_indices = @transform_3, window_bounds = array<i64: 19, 32>}, {transform_indices = @transform_4, window_bounds = array<i64: 1, 1>}, {transform_indices = @transform_5, window_bounds = array<i64: 8, 1>}]} {
    %c8_i32 = arith.constant 8 : i32
    %0 = arith.muli %arg0, %c8_i32 : i32
    %c0_i32 = arith.constant 0 : i32
    %1 = arith.addi %0, %c0_i32 : i32
    %cst = arith.constant 0.000000e+00 : f32
    %2 = vector.broadcast %cst : f32 to vector<1x32xf32>
    %cst_0 = arith.constant 0.000000e+00 : f32
    %3 = vector.broadcast %cst_0 : f32 to vector<1x32xf32>
    %4 = arith.index_cast %1 : i32 to index
    %c0 = arith.constant 0 : index
    %5 = memref.load %arg1[%4, %c0] : memref<16x8xi32, #tpu.memory_space<smem>>
    %6 = arith.index_cast %5 : i32 to index
    %c0_1 = arith.constant 0 : index
    %7 = vector.load %arg4[%6, %c0_1] : memref<50x32xf32, #tpu.memory_space<vmem>>, vector<1x32xf32>
    %c0_2 = arith.constant 0 : index
    %c0_3 = arith.constant 0 : index
    %8 = vector.load %arg7[%c0_2, %c0_3] : memref<19x32xf32, #tpu.memory_space<vmem>>, vector<1x32xf32>
    %9 = arith.mulf %7, %8 : vector<1x32xf32>
    %10 = arith.addf %2, %9 : vector<1x32xf32>
    %11 = arith.index_cast %1 : i32 to index
    %c1 = arith.constant 1 : index
    %12 = memref.load %arg1[%11, %c1] : memref<16x8xi32, #tpu.memory_space<smem>>
    %13 = arith.index_cast %12 : i32 to index
    %c0_4 = arith.constant 0 : index
    %14 = vector.load %arg4[%13, %c0_4] : memref<50x32xf32, #tpu.memory_space<vmem>>, vector<1x32xf32>
    %c1_5 = arith.constant 1 : index
    %c0_6 = arith.constant 0 : index
    %15 = vector.load %arg7[%c1_5, %c0_6] : memref<19x32xf32, #tpu.memory_space<vmem>>, vector<1x32xf32>
    %16 = arith.mulf %14, %15 : vector<1x32xf32>
    %17 = arith.addf %3, %16 : vector<1x32xf32>
    %18 = arith.index_cast %1 : i32 to index
    %c2 = arith.constant 2 : index
    %19 = memref.load %arg1[%18, %c2] : memref<16x8xi32, #tpu.memory_space<smem>>
    %20 = arith.index_cast %19 : i32 to index
    %c0_7 = arith.constant 0 : index
    %21 = vector.load %arg4[%20, %c0_7] : memref<50x32xf32, #tpu.memory_space<vmem>>, vector<1x32xf32>
    %c2_8 = arith.constant 2 : index
    %c0_9 = arith.constant 0 : index
    %22 = vector.load %arg7[%c2_8, %c0_9] : memref<19x32xf32, #tpu.memory_space<vmem>>, vector<1x32xf32>
    %23 = arith.mulf %21, %22 : vector<1x32xf32>
    %24 = arith.addf %10, %23 : vector<1x32xf32>
    %25 = arith.index_cast %1 : i32 to index
    %c3 = arith.constant 3 : index
    %26 = memref.load %arg1[%25, %c3] : memref<16x8xi32, #tpu.memory_space<smem>>
    %27 = arith.index_cast %26 : i32 to index
    %c0_10 = arith.constant 0 : index
    %28 = vector.load %arg4[%27, %c0_10] : memref<50x32xf32, #tpu.memory_space<vmem>>, vector<1x32xf32>
    %c3_11 = arith.constant 3 : index
    %c0_12 = arith.constant 0 : index
    %29 = vector.load %arg7[%c3_11, %c0_12] : memref<19x32xf32, #tpu.memory_space<vmem>>, vector<1x32xf32>
    %30 = arith.mulf %28, %29 : vector<1x32xf32>
    %31 = arith.addf %17, %30 : vector<1x32xf32>
    %32 = arith.index_cast %1 : i32 to index
    %c4 = arith.constant 4 : index
    %33 = memref.load %arg1[%32, %c4] : memref<16x8xi32, #tpu.memory_space<smem>>
    %34 = arith.index_cast %33 : i32 to index
    %c0_13 = arith.constant 0 : index
    %35 = vector.load %arg4[%34, %c0_13] : memref<50x32xf32, #tpu.memory_space<vmem>>, vector<1x32xf32>
    %c4_14 = arith.constant 4 : index
    %c0_15 = arith.constant 0 : index
    %36 = vector.load %arg7[%c4_14, %c0_15] : memref<19x32xf32, #tpu.memory_space<vmem>>, vector<1x32xf32>
    %37 = arith.mulf %35, %36 : vector<1x32xf32>
    %38 = arith.addf %24, %37 : vector<1x32xf32>
    %39 = arith.index_cast %1 : i32 to index
    %c5 = arith.constant 5 : index
    %40 = memref.load %arg1[%39, %c5] : memref<16x8xi32, #tpu.memory_space<smem>>
    %41 = arith.index_cast %40 : i32 to index
    %c0_16 = arith.constant 0 : index
    %42 = vector.load %arg4[%41, %c0_16] : memref<50x32xf32, #tpu.memory_space<vmem>>, vector<1x32xf32>
    %c5_17 = arith.constant 5 : index
    %c0_18 = arith.constant 0 : index
    %43 = vector.load %arg7[%c5_17, %c0_18] : memref<19x32xf32, #tpu.memory_space<vmem>>, vector<1x32xf32>
    %44 = arith.mulf %42, %43 : vector<1x32xf32>
    %45 = arith.addf %31, %44 : vector<1x32xf32>
    %46 = arith.index_cast %1 : i32 to index
    %c6 = arith.constant 6 : index
    %47 = memref.load %arg1[%46, %c6] : memref<16x8xi32, #tpu.memory_space<smem>>
    %48 = arith.index_cast %47 : i32 to index
    %c0_19 = arith.constant 0 : index
    %49 = vector.load %arg4[%48, %c0_19] : memref<50x32xf32, #tpu.memory_space<vmem>>, vector<1x32xf32>
    %c6_20 = arith.constant 6 : index
    %c0_21 = arith.constant 0 : index
    %50 = vector.load %arg7[%c6_20, %c0_21] : memref<19x32xf32, #tpu.memory_space<vmem>>, vector<1x32xf32>
    %51 = arith.mulf %49, %50 : vector<1x32xf32>
    %52 = arith.addf %38, %51 : vector<1x32xf32>
    %53 = arith.index_cast %1 : i32 to index
    %c7 = arith.constant 7 : index
    %54 = memref.load %arg1[%53, %c7] : memref<16x8xi32, #tpu.memory_space<smem>>
    %55 = arith.index_cast %54 : i32 to index
    %c0_22 = arith.constant 0 : index
    %56 = vector.load %arg4[%55, %c0_22] : memref<50x32xf32, #tpu.memory_space<vmem>>, vector<1x32xf32>
    %c7_23 = arith.constant 7 : index
    %c0_24 = arith.constant 0 : index
    %57 = vector.load %arg7[%c7_23, %c0_24] : memref<19x32xf32, #tpu.memory_space<vmem>>, vector<1x32xf32>
    %58 = arith.mulf %56, %57 : vector<1x32xf32>
    %59 = arith.addf %45, %58 : vector<1x32xf32>
    %60 = arith.index_cast %1 : i32 to index
    %c0_25 = arith.constant 0 : index
    %61 = memref.load %arg2[%60, %c0_25] : memref<16x8xi32, #tpu.memory_space<smem>>
    %62 = arith.index_cast %61 : i32 to index
    %c0_26 = arith.constant 0 : index
    %63 = vector.load %arg5[%62, %c0_26] : memref<50x32xf32, #tpu.memory_space<vmem>>, vector<1x32xf32>
    %c8 = arith.constant 8 : index
    %c0_27 = arith.constant 0 : index
    %64 = vector.load %arg7[%c8, %c0_27] : memref<19x32xf32, #tpu.memory_space<vmem>>, vector<1x32xf32>
    %65 = arith.mulf %63, %64 : vector<1x32xf32>
    %66 = arith.addf %52, %65 : vector<1x32xf32>
    %67 = arith.index_cast %1 : i32 to index
    %c1_28 = arith.constant 1 : index
    %68 = memref.load %arg2[%67, %c1_28] : memref<16x8xi32, #tpu.memory_space<smem>>
    %69 = arith.index_cast %68 : i32 to index
    %c0_29 = arith.constant 0 : index
    %70 = vector.load %arg5[%69, %c0_29] : memref<50x32xf32, #tpu.memory_space<vmem>>, vector<1x32xf32>
    %c9 = arith.constant 9 : index
    %c0_30 = arith.constant 0 : index
    %71 = vector.load %arg7[%c9, %c0_30] : memref<19x32xf32, #tpu.memory_space<vmem>>, vector<1x32xf32>
    %72 = arith.mulf %70, %71 : vector<1x32xf32>
    %73 = arith.addf %59, %72 : vector<1x32xf32>
    %74 = arith.index_cast %1 : i32 to index
    %c2_31 = arith.constant 2 : index
    %75 = memref.load %arg2[%74, %c2_31] : memref<16x8xi32, #tpu.memory_space<smem>>
    %76 = arith.index_cast %75 : i32 to index
    %c0_32 = arith.constant 0 : index
    %77 = vector.load %arg5[%76, %c0_32] : memref<50x32xf32, #tpu.memory_space<vmem>>, vector<1x32xf32>
    %c10 = arith.constant 10 : index
    %c0_33 = arith.constant 0 : index
    %78 = vector.load %arg7[%c10, %c0_33] : memref<19x32xf32, #tpu.memory_space<vmem>>, vector<1x32xf32>
    %79 = arith.mulf %77, %78 : vector<1x32xf32>
    %80 = arith.addf %66, %79 : vector<1x32xf32>
    %81 = arith.index_cast %1 : i32 to index
    %c3_34 = arith.constant 3 : index
    %82 = memref.load %arg2[%81, %c3_34] : memref<16x8xi32, #tpu.memory_space<smem>>
    %83 = arith.index_cast %82 : i32 to index
    %c0_35 = arith.constant 0 : index
    %84 = vector.load %arg5[%83, %c0_35] : memref<50x32xf32, #tpu.memory_space<vmem>>, vector<1x32xf32>
    %c11 = arith.constant 11 : index
    %c0_36 = arith.constant 0 : index
    %85 = vector.load %arg7[%c11, %c0_36] : memref<19x32xf32, #tpu.memory_space<vmem>>, vector<1x32xf32>
    %86 = arith.mulf %84, %85 : vector<1x32xf32>
    %87 = arith.addf %73, %86 : vector<1x32xf32>
    %88 = arith.index_cast %1 : i32 to index
    %c4_37 = arith.constant 4 : index
    %89 = memref.load %arg2[%88, %c4_37] : memref<16x8xi32, #tpu.memory_space<smem>>
    %90 = arith.index_cast %89 : i32 to index
    %c0_38 = arith.constant 0 : index
    %91 = vector.load %arg5[%90, %c0_38] : memref<50x32xf32, #tpu.memory_space<vmem>>, vector<1x32xf32>
    %c12 = arith.constant 12 : index
    %c0_39 = arith.constant 0 : index
    %92 = vector.load %arg7[%c12, %c0_39] : memref<19x32xf32, #tpu.memory_space<vmem>>, vector<1x32xf32>
    %93 = arith.mulf %91, %92 : vector<1x32xf32>
    %94 = arith.addf %80, %93 : vector<1x32xf32>
    %95 = arith.index_cast %1 : i32 to index
    %c5_40 = arith.constant 5 : index
    %96 = memref.load %arg2[%95, %c5_40] : memref<16x8xi32, #tpu.memory_space<smem>>
    %97 = arith.index_cast %96 : i32 to index
    %c0_41 = arith.constant 0 : index
    %98 = vector.load %arg5[%97, %c0_41] : memref<50x32xf32, #tpu.memory_space<vmem>>, vector<1x32xf32>
    %c13 = arith.constant 13 : index
    %c0_42 = arith.constant 0 : index
    %99 = vector.load %arg7[%c13, %c0_42] : memref<19x32xf32, #tpu.memory_space<vmem>>, vector<1x32xf32>
    %100 = arith.mulf %98, %99 : vector<1x32xf32>
    %101 = arith.addf %87, %100 : vector<1x32xf32>
    %102 = arith.index_cast %1 : i32 to index
    %c6_43 = arith.constant 6 : index
    %103 = memref.load %arg2[%102, %c6_43] : memref<16x8xi32, #tpu.memory_space<smem>>
    %104 = arith.index_cast %103 : i32 to index
    %c0_44 = arith.constant 0 : index
    %105 = vector.load %arg5[%104, %c0_44] : memref<50x32xf32, #tpu.memory_space<vmem>>, vector<1x32xf32>
    %c14 = arith.constant 14 : index
    %c0_45 = arith.constant 0 : index
    %106 = vector.load %arg7[%c14, %c0_45] : memref<19x32xf32, #tpu.memory_space<vmem>>, vector<1x32xf32>
    %107 = arith.mulf %105, %106 : vector<1x32xf32>
    %108 = arith.addf %94, %107 : vector<1x32xf32>
    %109 = arith.index_cast %1 : i32 to index
    %c7_46 = arith.constant 7 : index
    %110 = memref.load %arg2[%109, %c7_46] : memref<16x8xi32, #tpu.memory_space<smem>>
    %111 = arith.index_cast %110 : i32 to index
    %c0_47 = arith.constant 0 : index
    %112 = vector.load %arg5[%111, %c0_47] : memref<50x32xf32, #tpu.memory_space<vmem>>, vector<1x32xf32>
    %c15 = arith.constant 15 : index
    %c0_48 = arith.constant 0 : index
    %113 = vector.load %arg7[%c15, %c0_48] : memref<19x32xf32, #tpu.memory_space<vmem>>, vector<1x32xf32>
    %114 = arith.mulf %112, %113 : vector<1x32xf32>
    %115 = arith.addf %101, %114 : vector<1x32xf32>
    %116 = arith.index_cast %1 : i32 to index
    %c0_49 = arith.constant 0 : index
    %117 = memref.load %arg3[%116, %c0_49] : memref<16x3xi32, #tpu.memory_space<smem>>
    %118 = arith.index_cast %117 : i32 to index
    %c0_50 = arith.constant 0 : index
    %119 = vector.load %arg6[%118, %c0_50] : memref<10x32xf32, #tpu.memory_space<vmem>>, vector<1x32xf32>
    %c16 = arith.constant 16 : index
    %c0_51 = arith.constant 0 : index
    %120 = vector.load %arg7[%c16, %c0_51] : memref<19x32xf32, #tpu.memory_space<vmem>>, vector<1x32xf32>
    %121 = arith.mulf %119, %120 : vector<1x32xf32>
    %122 = arith.addf %108, %121 : vector<1x32xf32>
    %123 = arith.index_cast %1 : i32 to index
    %c1_52 = arith.constant 1 : index
    %124 = memref.load %arg3[%123, %c1_52] : memref<16x3xi32, #tpu.memory_space<smem>>
    %125 = arith.index_cast %124 : i32 to index
    %c0_53 = arith.constant 0 : index
    %126 = vector.load %arg6[%125, %c0_53] : memref<10x32xf32, #tpu.memory_space<vmem>>, vector<1x32xf32>
    %c17 = arith.constant 17 : index
    %c0_54 = arith.constant 0 : index
    %127 = vector.load %arg7[%c17, %c0_54] : memref<19x32xf32, #tpu.memory_space<vmem>>, vector<1x32xf32>
    %128 = arith.mulf %126, %127 : vector<1x32xf32>
    %129 = arith.addf %115, %128 : vector<1x32xf32>
    %130 = arith.index_cast %1 : i32 to index
    %c2_55 = arith.constant 2 : index
    %131 = memref.load %arg3[%130, %c2_55] : memref<16x3xi32, #tpu.memory_space<smem>>
    %132 = arith.index_cast %131 : i32 to index
    %c0_56 = arith.constant 0 : index
    %133 = vector.load %arg6[%132, %c0_56] : memref<10x32xf32, #tpu.memory_space<vmem>>, vector<1x32xf32>
    %c18 = arith.constant 18 : index
    %c0_57 = arith.constant 0 : index
    %134 = vector.load %arg7[%c18, %c0_57] : memref<19x32xf32, #tpu.memory_space<vmem>>, vector<1x32xf32>
    %135 = arith.mulf %133, %134 : vector<1x32xf32>
    %136 = arith.addf %122, %135 : vector<1x32xf32>
    %137 = arith.addf %136, %129 : vector<1x32xf32>
    %138 = arith.index_cast %c0_i32 : i32 to index
    %c0_58 = arith.constant 0 : index
    %139 = vector.load %arg10[%138, %c0_58] : memref<8x32xf32, #tpu.memory_space<vmem>>, vector<1x32xf32>
    tpu.vector_store %arg10[%138, %c0_58], %137 {strides = array<i32>} : memref<8x32xf32, #tpu.memory_space<vmem>>, vector<1x32xf32>,
    %c1_i32 = arith.constant 1 : i32
    %140 = arith.addi %0, %c1_i32 : i32
    %cst_59 = arith.constant 0.000000e+00 : f32
    %141 = vector.broadcast %cst_59 : f32 to vector<1x32xf32>
    %cst_60 = arith.constant 0.000000e+00 : f32
    %142 = vector.broadcast %cst_60 : f32 to vector<1x32xf32>
    %143 = arith.index_cast %140 : i32 to index
    %c0_61 = arith.constant 0 : index
    %144 = memref.load %arg1[%143, %c0_61] : memref<16x8xi32, #tpu.memory_space<smem>>
    %145 = arith.index_cast %144 : i32 to index
    %c0_62 = arith.constant 0 : index
    %146 = vector.load %arg4[%145, %c0_62] : memref<50x32xf32, #tpu.memory_space<vmem>>, vector<1x32xf32>
    %c0_63 = arith.constant 0 : index
    %c0_64 = arith.constant 0 : index
    %147 = vector.load %arg7[%c0_63, %c0_64] : memref<19x32xf32, #tpu.memory_space<vmem>>, vector<1x32xf32>
    %148 = arith.mulf %146, %147 : vector<1x32xf32>
    %149 = arith.addf %141, %148 : vector<1x32xf32>
    %150 = arith.index_cast %140 : i32 to index
    %c1_65 = arith.constant 1 : index
    %151 = memref.load %arg1[%150, %c1_65] : memref<16x8xi32, #tpu.memory_space<smem>>
    %152 = arith.index_cast %151 : i32 to index
    %c0_66 = arith.constant 0 : index
    %153 = vector.load %arg4[%152, %c0_66] : memref<50x32xf32, #tpu.memory_space<vmem>>, vector<1x32xf32>
    %c1_67 = arith.constant 1 : index
    %c0_68 = arith.constant 0 : index
    %154 = vector.load %arg7[%c1_67, %c0_68] : memref<19x32xf32, #tpu.memory_space<vmem>>, vector<1x32xf32>
    %155 = arith.mulf %153, %154 : vector<1x32xf32>
    %156 = arith.addf %142, %155 : vector<1x32xf32>
    %157 = arith.index_cast %140 : i32 to index
    %c2_69 = arith.constant 2 : index
    %158 = memref.load %arg1[%157, %c2_69] : memref<16x8xi32, #tpu.memory_space<smem>>
    %159 = arith.index_cast %158 : i32 to index
    %c0_70 = arith.constant 0 : index
    %160 = vector.load %arg4[%159, %c0_70] : memref<50x32xf32, #tpu.memory_space<vmem>>, vector<1x32xf32>
    %c2_71 = arith.constant 2 : index
    %c0_72 = arith.constant 0 : index
    %161 = vector.load %arg7[%c2_71, %c0_72] : memref<19x32xf32, #tpu.memory_space<vmem>>, vector<1x32xf32>
    %162 = arith.mulf %160, %161 : vector<1x32xf32>
    %163 = arith.addf %149, %162 : vector<1x32xf32>
    %164 = arith.index_cast %140 : i32 to index
    %c3_73 = arith.constant 3 : index
    %165 = memref.load %arg1[%164, %c3_73] : memref<16x8xi32, #tpu.memory_space<smem>>
    %166 = arith.index_cast %165 : i32 to index
    %c0_74 = arith.constant 0 : index
    %167 = vector.load %arg4[%166, %c0_74] : memref<50x32xf32, #tpu.memory_space<vmem>>, vector<1x32xf32>
    %c3_75 = arith.constant 3 : index
    %c0_76 = arith.constant 0 : index
    %168 = vector.load %arg7[%c3_75, %c0_76] : memref<19x32xf32, #tpu.memory_space<vmem>>, vector<1x32xf32>
    %169 = arith.mulf %167, %168 : vector<1x32xf32>
    %170 = arith.addf %156, %169 : vector<1x32xf32>
    %171 = arith.index_cast %140 : i32 to index
    %c4_77 = arith.constant 4 : index
    %172 = memref.load %arg1[%171, %c4_77] : memref<16x8xi32, #tpu.memory_space<smem>>
    %173 = arith.index_cast %172 : i32 to index
    %c0_78 = arith.constant 0 : index
    %174 = vector.load %arg4[%173, %c0_78] : memref<50x32xf32, #tpu.memory_space<vmem>>, vector<1x32xf32>
    %c4_79 = arith.constant 4 : index
    %c0_80 = arith.constant 0 : index
    %175 = vector.load %arg7[%c4_79, %c0_80] : memref<19x32xf32, #tpu.memory_space<vmem>>, vector<1x32xf32>
    %176 = arith.mulf %174, %175 : vector<1x32xf32>
    %177 = arith.addf %163, %176 : vector<1x32xf32>
    %178 = arith.index_cast %140 : i32 to index
    %c5_81 = arith.constant 5 : index
    %179 = memref.load %arg1[%178, %c5_81] : memref<16x8xi32, #tpu.memory_space<smem>>
    %180 = arith.index_cast %179 : i32 to index
    %c0_82 = arith.constant 0 : index
    %181 = vector.load %arg4[%180, %c0_82] : memref<50x32xf32, #tpu.memory_space<vmem>>, vector<1x32xf32>
    %c5_83 = arith.constant 5 : index
    %c0_84 = arith.constant 0 : index
    %182 = vector.load %arg7[%c5_83, %c0_84] : memref<19x32xf32, #tpu.memory_space<vmem>>, vector<1x32xf32>
    %183 = arith.mulf %181, %182 : vector<1x32xf32>
    %184 = arith.addf %170, %183 : vector<1x32xf32>
    %185 = arith.index_cast %140 : i32 to index
    %c6_85 = arith.constant 6 : index
    %186 = memref.load %arg1[%185, %c6_85] : memref<16x8xi32, #tpu.memory_space<smem>>
    %187 = arith.index_cast %186 : i32 to index
    %c0_86 = arith.constant 0 : index
    %188 = vector.load %arg4[%187, %c0_86] : memref<50x32xf32, #tpu.memory_space<vmem>>, vector<1x32xf32>
    %c6_87 = arith.constant 6 : index
    %c0_88 = arith.constant 0 : index
    %189 = vector.load %arg7[%c6_87, %c0_88] : memref<19x32xf32, #tpu.memory_space<vmem>>, vector<1x32xf32>
    %190 = arith.mulf %188, %189 : vector<1x32xf32>
    %191 = arith.addf %177, %190 : vector<1x32xf32>
    %192 = arith.index_cast %140 : i32 to index
    %c7_89 = arith.constant 7 : index
    %193 = memref.load %arg1[%192, %c7_89] : memref<16x8xi32, #tpu.memory_space<smem>>
    %194 = arith.index_cast %193 : i32 to index
    %c0_90 = arith.constant 0 : index
    %195 = vector.load %arg4[%194, %c0_90] : memref<50x32xf32, #tpu.memory_space<vmem>>, vector<1x32xf32>
    %c7_91 = arith.constant 7 : index
    %c0_92 = arith.constant 0 : index
    %196 = vector.load %arg7[%c7_91, %c0_92] : memref<19x32xf32, #tpu.memory_space<vmem>>, vector<1x32xf32>
    %197 = arith.mulf %195, %196 : vector<1x32xf32>
    %198 = arith.addf %184, %197 : vector<1x32xf32>
    %199 = arith.index_cast %140 : i32 to index
    %c0_93 = arith.constant 0 : index
    %200 = memref.load %arg2[%199, %c0_93] : memref<16x8xi32, #tpu.memory_space<smem>>
    %201 = arith.index_cast %200 : i32 to index
    %c0_94 = arith.constant 0 : index
    %202 = vector.load %arg5[%201, %c0_94] : memref<50x32xf32, #tpu.memory_space<vmem>>, vector<1x32xf32>
    %c8_95 = arith.constant 8 : index
    %c0_96 = arith.constant 0 : index
    %203 = vector.load %arg7[%c8_95, %c0_96] : memref<19x32xf32, #tpu.memory_space<vmem>>, vector<1x32xf32>
    %204 = arith.mulf %202, %203 : vector<1x32xf32>
    %205 = arith.addf %191, %204 : vector<1x32xf32>
    %206 = arith.index_cast %140 : i32 to index
    %c1_97 = arith.constant 1 : index
    %207 = memref.load %arg2[%206, %c1_97] : memref<16x8xi32, #tpu.memory_space<smem>>
    %208 = arith.index_cast %207 : i32 to index
    %c0_98 = arith.constant 0 : index
    %209 = vector.load %arg5[%208, %c0_98] : memref<50x32xf32, #tpu.memory_space<vmem>>, vector<1x32xf32>
    %c9_99 = arith.constant 9 : index
    %c0_100 = arith.constant 0 : index
    %210 = vector.load %arg7[%c9_99, %c0_100] : memref<19x32xf32, #tpu.memory_space<vmem>>, vector<1x32xf32>
    %211 = arith.mulf %209, %210 : vector<1x32xf32>
    %212 = arith.addf %198, %211 : vector<1x32xf32>
    %213 = arith.index_cast %140 : i32 to index
    %c2_101 = arith.constant 2 : index
    %214 = memref.load %arg2[%213, %c2_101] : memref<16x8xi32, #tpu.memory_space<smem>>
    %215 = arith.index_cast %214 : i32 to index
    %c0_102 = arith.constant 0 : index
    %216 = vector.load %arg5[%215, %c0_102] : memref<50x32xf32, #tpu.memory_space<vmem>>, vector<1x32xf32>
    %c10_103 = arith.constant 10 : index
    %c0_104 = arith.constant 0 : index
    %217 = vector.load %arg7[%c10_103, %c0_104] : memref<19x32xf32, #tpu.memory_space<vmem>>, vector<1x32xf32>
    %218 = arith.mulf %216, %217 : vector<1x32xf32>
    %219 = arith.addf %205, %218 : vector<1x32xf32>
    %220 = arith.index_cast %140 : i32 to index
    %c3_105 = arith.constant 3 : index
    %221 = memref.load %arg2[%220, %c3_105] : memref<16x8xi32, #tpu.memory_space<smem>>
    %222 = arith.index_cast %221 : i32 to index
    %c0_106 = arith.constant 0 : index
    %223 = vector.load %arg5[%222, %c0_106] : memref<50x32xf32, #tpu.memory_space<vmem>>, vector<1x32xf32>
    %c11_107 = arith.constant 11 : index
    %c0_108 = arith.constant 0 : index
    %224 = vector.load %arg7[%c11_107, %c0_108] : memref<19x32xf32, #tpu.memory_space<vmem>>, vector<1x32xf32>
    %225 = arith.mulf %223, %224 : vector<1x32xf32>
    %226 = arith.addf %212, %225 : vector<1x32xf32>
    %227 = arith.index_cast %140 : i32 to index
    %c4_109 = arith.constant 4 : index
    %228 = memref.load %arg2[%227, %c4_109] : memref<16x8xi32, #tpu.memory_space<smem>>
    %229 = arith.index_cast %228 : i32 to index
    %c0_110 = arith.constant 0 : index
    %230 = vector.load %arg5[%229, %c0_110] : memref<50x32xf32, #tpu.memory_space<vmem>>, vector<1x32xf32>
    %c12_111 = arith.constant 12 : index
    %c0_112 = arith.constant 0 : index
    %231 = vector.load %arg7[%c12_111, %c0_112] : memref<19x32xf32, #tpu.memory_space<vmem>>, vector<1x32xf32>
    %232 = arith.mulf %230, %231 : vector<1x32xf32>
    %233 = arith.addf %219, %232 : vector<1x32xf32>
    %234 = arith.index_cast %140 : i32 to index
    %c5_113 = arith.constant 5 : index
    %235 = memref.load %arg2[%234, %c5_113] : memref<16x8xi32, #tpu.memory_space<smem>>
    %236 = arith.index_cast %235 : i32 to index
    %c0_114 = arith.constant 0 : index
    %237 = vector.load %arg5[%236, %c0_114] : memref<50x32xf32, #tpu.memory_space<vmem>>, vector<1x32xf32>
    %c13_115 = arith.constant 13 : index
    %c0_116 = arith.constant 0 : index
    %238 = vector.load %arg7[%c13_115, %c0_116] : memref<19x32xf32, #tpu.memory_space<vmem>>, vector<1x32xf32>
    %239 = arith.mulf %237, %238 : vector<1x32xf32>
    %240 = arith.addf %226, %239 : vector<1x32xf32>
    %241 = arith.index_cast %140 : i32 to index
    %c6_117 = arith.constant 6 : index
    %242 = memref.load %arg2[%241, %c6_117] : memref<16x8xi32, #tpu.memory_space<smem>>
    %243 = arith.index_cast %242 : i32 to index
    %c0_118 = arith.constant 0 : index
    %244 = vector.load %arg5[%243, %c0_118] : memref<50x32xf32, #tpu.memory_space<vmem>>, vector<1x32xf32>
    %c14_119 = arith.constant 14 : index
    %c0_120 = arith.constant 0 : index
    %245 = vector.load %arg7[%c14_119, %c0_120] : memref<19x32xf32, #tpu.memory_space<vmem>>, vector<1x32xf32>
    %246 = arith.mulf %244, %245 : vector<1x32xf32>
    %247 = arith.addf %233, %246 : vector<1x32xf32>
    %248 = arith.index_cast %140 : i32 to index
    %c7_121 = arith.constant 7 : index
    %249 = memref.load %arg2[%248, %c7_121] : memref<16x8xi32, #tpu.memory_space<smem>>
    %250 = arith.index_cast %249 : i32 to index
    %c0_122 = arith.constant 0 : index
    %251 = vector.load %arg5[%250, %c0_122] : memref<50x32xf32, #tpu.memory_space<vmem>>, vector<1x32xf32>
    %c15_123 = arith.constant 15 : index
    %c0_124 = arith.constant 0 : index
    %252 = vector.load %arg7[%c15_123, %c0_124] : memref<19x32xf32, #tpu.memory_space<vmem>>, vector<1x32xf32>
    %253 = arith.mulf %251, %252 : vector<1x32xf32>
    %254 = arith.addf %240, %253 : vector<1x32xf32>
    %255 = arith.index_cast %140 : i32 to index
    %c0_125 = arith.constant 0 : index
    %256 = memref.load %arg3[%255, %c0_125] : memref<16x3xi32, #tpu.memory_space<smem>>
    %257 = arith.index_cast %256 : i32 to index
    %c0_126 = arith.constant 0 : index
    %258 = vector.load %arg6[%257, %c0_126] : memref<10x32xf32, #tpu.memory_space<vmem>>, vector<1x32xf32>
    %c16_127 = arith.constant 16 : index
    %c0_128 = arith.constant 0 : index
    %259 = vector.load %arg7[%c16_127, %c0_128] : memref<19x32xf32, #tpu.memory_space<vmem>>, vector<1x32xf32>
    %260 = arith.mulf %258, %259 : vector<1x32xf32>
    %261 = arith.addf %247, %260 : vector<1x32xf32>
    %262 = arith.index_cast %140 : i32 to index
    %c1_129 = arith.constant 1 : index
    %263 = memref.load %arg3[%262, %c1_129] : memref<16x3xi32, #tpu.memory_space<smem>>
    %264 = arith.index_cast %263 : i32 to index
    %c0_130 = arith.constant 0 : index
    %265 = vector.load %arg6[%264, %c0_130] : memref<10x32xf32, #tpu.memory_space<vmem>>, vector<1x32xf32>
    %c17_131 = arith.constant 17 : index
    %c0_132 = arith.constant 0 : index
    %266 = vector.load %arg7[%c17_131, %c0_132] : memref<19x32xf32, #tpu.memory_space<vmem>>, vector<1x32xf32>
    %267 = arith.mulf %265, %266 : vector<1x32xf32>
    %268 = arith.addf %254, %267 : vector<1x32xf32>
    %269 = arith.index_cast %140 : i32 to index
    %c2_133 = arith.constant 2 : index
    %270 = memref.load %arg3[%269, %c2_133] : memref<16x3xi32, #tpu.memory_space<smem>>
    %271 = arith.index_cast %270 : i32 to index
    %c0_134 = arith.constant 0 : index
    %272 = vector.load %arg6[%271, %c0_134] : memref<10x32xf32, #tpu.memory_space<vmem>>, vector<1x32xf32>
    %c18_135 = arith.constant 18 : index
    %c0_136 = arith.constant 0 : index
    %273 = vector.load %arg7[%c18_135, %c0_136] : memref<19x32xf32, #tpu.memory_space<vmem>>, vector<1x32xf32>
    %274 = arith.mulf %272, %273 : vector<1x32xf32>
    %275 = arith.addf %261, %274 : vector<1x32xf32>
    %276 = arith.addf %275, %268 : vector<1x32xf32>
    %277 = arith.index_cast %c1_i32 : i32 to index
    %c0_137 = arith.constant 0 : index
    %278 = vector.load %arg10[%277, %c0_137] : memref<8x32xf32, #tpu.memory_space<vmem>>, vector<1x32xf32>
    tpu.vector_store %arg10[%277, %c0_137], %276 {strides = array<i32>} : memref<8x32xf32, #tpu.memory_space<vmem>>, vector<1x32xf32>,
    %c2_i32 = arith.constant 2 : i32
    %279 = arith.addi %0, %c2_i32 : i32
    %cst_138 = arith.constant 0.000000e+00 : f32
    %280 = vector.broadcast %cst_138 : f32 to vector<1x32xf32>
    %cst_139 = arith.constant 0.000000e+00 : f32
    %281 = vector.broadcast %cst_139 : f32 to vector<1x32xf32>
    %282 = arith.index_cast %279 : i32 to index
    %c0_140 = arith.constant 0 : index
    %283 = memref.load %arg1[%282, %c0_140] : memref<16x8xi32, #tpu.memory_space<smem>>
    %284 = arith.index_cast %283 : i32 to index
    %c0_141 = arith.constant 0 : index
    %285 = vector.load %arg4[%284, %c0_141] : memref<50x32xf32, #tpu.memory_space<vmem>>, vector<1x32xf32>
    %c0_142 = arith.constant 0 : index
    %c0_143 = arith.constant 0 : index
    %286 = vector.load %arg7[%c0_142, %c0_143] : memref<19x32xf32, #tpu.memory_space<vmem>>, vector<1x32xf32>
    %287 = arith.mulf %285, %286 : vector<1x32xf32>
    %288 = arith.addf %280, %287 : vector<1x32xf32>
    %289 = arith.index_cast %279 : i32 to index
    %c1_144 = arith.constant 1 : index
    %290 = memref.load %arg1[%289, %c1_144] : memref<16x8xi32, #tpu.memory_space<smem>>
    %291 = arith.index_cast %290 : i32 to index
    %c0_145 = arith.constant 0 : index
    %292 = vector.load %arg4[%291, %c0_145] : memref<50x32xf32, #tpu.memory_space<vmem>>, vector<1x32xf32>
    %c1_146 = arith.constant 1 : index
    %c0_147 = arith.constant 0 : index
    %293 = vector.load %arg7[%c1_146, %c0_147] : memref<19x32xf32, #tpu.memory_space<vmem>>, vector<1x32xf32>
    %294 = arith.mulf %292, %293 : vector<1x32xf32>
    %295 = arith.addf %281, %294 : vector<1x32xf32>
    %296 = arith.index_cast %279 : i32 to index
    %c2_148 = arith.constant 2 : index
    %297 = memref.load %arg1[%296, %c2_148] : memref<16x8xi32, #tpu.memory_space<smem>>
    %298 = arith.index_cast %297 : i32 to index
    %c0_149 = arith.constant 0 : index
    %299 = vector.load %arg4[%298, %c0_149] : memref<50x32xf32, #tpu.memory_space<vmem>>, vector<1x32xf32>
    %c2_150 = arith.constant 2 : index
    %c0_151 = arith.constant 0 : index
    %300 = vector.load %arg7[%c2_150, %c0_151] : memref<19x32xf32, #tpu.memory_space<vmem>>, vector<1x32xf32>
    %301 = arith.mulf %299, %300 : vector<1x32xf32>
    %302 = arith.addf %288, %301 : vector<1x32xf32>
    %303 = arith.index_cast %279 : i32 to index
    %c3_152 = arith.constant 3 : index
    %304 = memref.load %arg1[%303, %c3_152] : memref<16x8xi32, #tpu.memory_space<smem>>
    %305 = arith.index_cast %304 : i32 to index
    %c0_153 = arith.constant 0 : index
    %306 = vector.load %arg4[%305, %c0_153] : memref<50x32xf32, #tpu.memory_space<vmem>>, vector<1x32xf32>
    %c3_154 = arith.constant 3 : index
    %c0_155 = arith.constant 0 : index
    %307 = vector.load %arg7[%c3_154, %c0_155] : memref<19x32xf32, #tpu.memory_space<vmem>>, vector<1x32xf32>
    %308 = arith.mulf %306, %307 : vector<1x32xf32>
    %309 = arith.addf %295, %308 : vector<1x32xf32>
    %310 = arith.index_cast %279 : i32 to index
    %c4_156 = arith.constant 4 : index
    %311 = memref.load %arg1[%310, %c4_156] : memref<16x8xi32, #tpu.memory_space<smem>>
    %312 = arith.index_cast %311 : i32 to index
    %c0_157 = arith.constant 0 : index
    %313 = vector.load %arg4[%312, %c0_157] : memref<50x32xf32, #tpu.memory_space<vmem>>, vector<1x32xf32>
    %c4_158 = arith.constant 4 : index
    %c0_159 = arith.constant 0 : index
    %314 = vector.load %arg7[%c4_158, %c0_159] : memref<19x32xf32, #tpu.memory_space<vmem>>, vector<1x32xf32>
    %315 = arith.mulf %313, %314 : vector<1x32xf32>
    %316 = arith.addf %302, %315 : vector<1x32xf32>
    %317 = arith.index_cast %279 : i32 to index
    %c5_160 = arith.constant 5 : index
    %318 = memref.load %arg1[%317, %c5_160] : memref<16x8xi32, #tpu.memory_space<smem>>
    %319 = arith.index_cast %318 : i32 to index
    %c0_161 = arith.constant 0 : index
    %320 = vector.load %arg4[%319, %c0_161] : memref<50x32xf32, #tpu.memory_space<vmem>>, vector<1x32xf32>
    %c5_162 = arith.constant 5 : index
    %c0_163 = arith.constant 0 : index
    %321 = vector.load %arg7[%c5_162, %c0_163] : memref<19x32xf32, #tpu.memory_space<vmem>>, vector<1x32xf32>
    %322 = arith.mulf %320, %321 : vector<1x32xf32>
    %323 = arith.addf %309, %322 : vector<1x32xf32>
    %324 = arith.index_cast %279 : i32 to index
    %c6_164 = arith.constant 6 : index
    %325 = memref.load %arg1[%324, %c6_164] : memref<16x8xi32, #tpu.memory_space<smem>>
    %326 = arith.index_cast %325 : i32 to index
    %c0_165 = arith.constant 0 : index
    %327 = vector.load %arg4[%326, %c0_165] : memref<50x32xf32, #tpu.memory_space<vmem>>, vector<1x32xf32>
    %c6_166 = arith.constant 6 : index
    %c0_167 = arith.constant 0 : index
    %328 = vector.load %arg7[%c6_166, %c0_167] : memref<19x32xf32, #tpu.memory_space<vmem>>, vector<1x32xf32>
    %329 = arith.mulf %327, %328 : vector<1x32xf32>
    %330 = arith.addf %316, %329 : vector<1x32xf32>
    %331 = arith.index_cast %279 : i32 to index
    %c7_168 = arith.constant 7 : index
    %332 = memref.load %arg1[%331, %c7_168] : memref<16x8xi32, #tpu.memory_space<smem>>
    %333 = arith.index_cast %332 : i32 to index
    %c0_169 = arith.constant 0 : index
    %334 = vector.load %arg4[%333, %c0_169] : memref<50x32xf32, #tpu.memory_space<vmem>>, vector<1x32xf32>
    %c7_170 = arith.constant 7 : index
    %c0_171 = arith.constant 0 : index
    %335 = vector.load %arg7[%c7_170, %c0_171] : memref<19x32xf32, #tpu.memory_space<vmem>>, vector<1x32xf32>
    %336 = arith.mulf %334, %335 : vector<1x32xf32>
    %337 = arith.addf %323, %336 : vector<1x32xf32>
    %338 = arith.index_cast %279 : i32 to index
    %c0_172 = arith.constant 0 : index
    %339 = memref.load %arg2[%338, %c0_172] : memref<16x8xi32, #tpu.memory_space<smem>>
    %340 = arith.index_cast %339 : i32 to index
    %c0_173 = arith.constant 0 : index
    %341 = vector.load %arg5[%340, %c0_173] : memref<50x32xf32, #tpu.memory_space<vmem>>, vector<1x32xf32>
    %c8_174 = arith.constant 8 : index
    %c0_175 = arith.constant 0 : index
    %342 = vector.load %arg7[%c8_174, %c0_175] : memref<19x32xf32, #tpu.memory_space<vmem>>, vector<1x32xf32>
    %343 = arith.mulf %341, %342 : vector<1x32xf32>
    %344 = arith.addf %330, %343 : vector<1x32xf32>
    %345 = arith.index_cast %279 : i32 to index
    %c1_176 = arith.constant 1 : index
    %346 = memref.load %arg2[%345, %c1_176] : memref<16x8xi32, #tpu.memory_space<smem>>
    %347 = arith.index_cast %346 : i32 to index
    %c0_177 = arith.constant 0 : index
    %348 = vector.load %arg5[%347, %c0_177] : memref<50x32xf32, #tpu.memory_space<vmem>>, vector<1x32xf32>
    %c9_178 = arith.constant 9 : index
    %c0_179 = arith.constant 0 : index
    %349 = vector.load %arg7[%c9_178, %c0_179] : memref<19x32xf32, #tpu.memory_space<vmem>>, vector<1x32xf32>
    %350 = arith.mulf %348, %349 : vector<1x32xf32>
    %351 = arith.addf %337, %350 : vector<1x32xf32>
    %352 = arith.index_cast %279 : i32 to index
    %c2_180 = arith.constant 2 : index
    %353 = memref.load %arg2[%352, %c2_180] : memref<16x8xi32, #tpu.memory_space<smem>>
    %354 = arith.index_cast %353 : i32 to index
    %c0_181 = arith.constant 0 : index
    %355 = vector.load %arg5[%354, %c0_181] : memref<50x32xf32, #tpu.memory_space<vmem>>, vector<1x32xf32>
    %c10_182 = arith.constant 10 : index
    %c0_183 = arith.constant 0 : index
    %356 = vector.load %arg7[%c10_182, %c0_183] : memref<19x32xf32, #tpu.memory_space<vmem>>, vector<1x32xf32>
    %357 = arith.mulf %355, %356 : vector<1x32xf32>
    %358 = arith.addf %344, %357 : vector<1x32xf32>
    %359 = arith.index_cast %279 : i32 to index
    %c3_184 = arith.constant 3 : index
    %360 = memref.load %arg2[%359, %c3_184] : memref<16x8xi32, #tpu.memory_space<smem>>
    %361 = arith.index_cast %360 : i32 to index
    %c0_185 = arith.constant 0 : index
    %362 = vector.load %arg5[%361, %c0_185] : memref<50x32xf32, #tpu.memory_space<vmem>>, vector<1x32xf32>
    %c11_186 = arith.constant 11 : index
    %c0_187 = arith.constant 0 : index
    %363 = vector.load %arg7[%c11_186, %c0_187] : memref<19x32xf32, #tpu.memory_space<vmem>>, vector<1x32xf32>
    %364 = arith.mulf %362, %363 : vector<1x32xf32>
    %365 = arith.addf %351, %364 : vector<1x32xf32>
    %366 = arith.index_cast %279 : i32 to index
    %c4_188 = arith.constant 4 : index
    %367 = memref.load %arg2[%366, %c4_188] : memref<16x8xi32, #tpu.memory_space<smem>>
    %368 = arith.index_cast %367 : i32 to index
    %c0_189 = arith.constant 0 : index
    %369 = vector.load %arg5[%368, %c0_189] : memref<50x32xf32, #tpu.memory_space<vmem>>, vector<1x32xf32>
    %c12_190 = arith.constant 12 : index
    %c0_191 = arith.constant 0 : index
    %370 = vector.load %arg7[%c12_190, %c0_191] : memref<19x32xf32, #tpu.memory_space<vmem>>, vector<1x32xf32>
    %371 = arith.mulf %369, %370 : vector<1x32xf32>
    %372 = arith.addf %358, %371 : vector<1x32xf32>
    %373 = arith.index_cast %279 : i32 to index
    %c5_192 = arith.constant 5 : index
    %374 = memref.load %arg2[%373, %c5_192] : memref<16x8xi32, #tpu.memory_space<smem>>
    %375 = arith.index_cast %374 : i32 to index
    %c0_193 = arith.constant 0 : index
    %376 = vector.load %arg5[%375, %c0_193] : memref<50x32xf32, #tpu.memory_space<vmem>>, vector<1x32xf32>
    %c13_194 = arith.constant 13 : index
    %c0_195 = arith.constant 0 : index
    %377 = vector.load %arg7[%c13_194, %c0_195] : memref<19x32xf32, #tpu.memory_space<vmem>>, vector<1x32xf32>
    %378 = arith.mulf %376, %377 : vector<1x32xf32>
    %379 = arith.addf %365, %378 : vector<1x32xf32>
    %380 = arith.index_cast %279 : i32 to index
    %c6_196 = arith.constant 6 : index
    %381 = memref.load %arg2[%380, %c6_196] : memref<16x8xi32, #tpu.memory_space<smem>>
    %382 = arith.index_cast %381 : i32 to index
    %c0_197 = arith.constant 0 : index
    %383 = vector.load %arg5[%382, %c0_197] : memref<50x32xf32, #tpu.memory_space<vmem>>, vector<1x32xf32>
    %c14_198 = arith.constant 14 : index
    %c0_199 = arith.constant 0 : index
    %384 = vector.load %arg7[%c14_198, %c0_199] : memref<19x32xf32, #tpu.memory_space<vmem>>, vector<1x32xf32>
    %385 = arith.mulf %383, %384 : vector<1x32xf32>
    %386 = arith.addf %372, %385 : vector<1x32xf32>
    %387 = arith.index_cast %279 : i32 to index
    %c7_200 = arith.constant 7 : index
    %388 = memref.load %arg2[%387, %c7_200] : memref<16x8xi32, #tpu.memory_space<smem>>
    %389 = arith.index_cast %388 : i32 to index
    %c0_201 = arith.constant 0 : index
    %390 = vector.load %arg5[%389, %c0_201] : memref<50x32xf32, #tpu.memory_space<vmem>>, vector<1x32xf32>
    %c15_202 = arith.constant 15 : index
    %c0_203 = arith.constant 0 : index
    %391 = vector.load %arg7[%c15_202, %c0_203] : memref<19x32xf32, #tpu.memory_space<vmem>>, vector<1x32xf32>
    %392 = arith.mulf %390, %391 : vector<1x32xf32>
    %393 = arith.addf %379, %392 : vector<1x32xf32>
    %394 = arith.index_cast %279 : i32 to index
    %c0_204 = arith.constant 0 : index
    %395 = memref.load %arg3[%394, %c0_204] : memref<16x3xi32, #tpu.memory_space<smem>>
    %396 = arith.index_cast %395 : i32 to index
    %c0_205 = arith.constant 0 : index
    %397 = vector.load %arg6[%396, %c0_205] : memref<10x32xf32, #tpu.memory_space<vmem>>, vector<1x32xf32>
    %c16_206 = arith.constant 16 : index
    %c0_207 = arith.constant 0 : index
    %398 = vector.load %arg7[%c16_206, %c0_207] : memref<19x32xf32, #tpu.memory_space<vmem>>, vector<1x32xf32>
    %399 = arith.mulf %397, %398 : vector<1x32xf32>
    %400 = arith.addf %386, %399 : vector<1x32xf32>
    %401 = arith.index_cast %279 : i32 to index
    %c1_208 = arith.constant 1 : index
    %402 = memref.load %arg3[%401, %c1_208] : memref<16x3xi32, #tpu.memory_space<smem>>
    %403 = arith.index_cast %402 : i32 to index
    %c0_209 = arith.constant 0 : index
    %404 = vector.load %arg6[%403, %c0_209] : memref<10x32xf32, #tpu.memory_space<vmem>>, vector<1x32xf32>
    %c17_210 = arith.constant 17 : index
    %c0_211 = arith.constant 0 : index
    %405 = vector.load %arg7[%c17_210, %c0_211] : memref<19x32xf32, #tpu.memory_space<vmem>>, vector<1x32xf32>
    %406 = arith.mulf %404, %405 : vector<1x32xf32>
    %407 = arith.addf %393, %406 : vector<1x32xf32>
    %408 = arith.index_cast %279 : i32 to index
    %c2_212 = arith.constant 2 : index
    %409 = memref.load %arg3[%408, %c2_212] : memref<16x3xi32, #tpu.memory_space<smem>>
    %410 = arith.index_cast %409 : i32 to index
    %c0_213 = arith.constant 0 : index
    %411 = vector.load %arg6[%410, %c0_213] : memref<10x32xf32, #tpu.memory_space<vmem>>, vector<1x32xf32>
    %c18_214 = arith.constant 18 : index
    %c0_215 = arith.constant 0 : index
    %412 = vector.load %arg7[%c18_214, %c0_215] : memref<19x32xf32, #tpu.memory_space<vmem>>, vector<1x32xf32>
    %413 = arith.mulf %411, %412 : vector<1x32xf32>
    %414 = arith.addf %400, %413 : vector<1x32xf32>
    %415 = arith.addf %414, %407 : vector<1x32xf32>
    %416 = arith.index_cast %c2_i32 : i32 to index
    %c0_216 = arith.constant 0 : index
    %417 = vector.load %arg10[%416, %c0_216] : memref<8x32xf32, #tpu.memory_space<vmem>>, vector<1x32xf32>
    tpu.vector_store %arg10[%416, %c0_216], %415 {strides = array<i32>} : memref<8x32xf32, #tpu.memory_space<vmem>>, vector<1x32xf32>,
    %c3_i32 = arith.constant 3 : i32
    %418 = arith.addi %0, %c3_i32 : i32
    %cst_217 = arith.constant 0.000000e+00 : f32
    %419 = vector.broadcast %cst_217 : f32 to vector<1x32xf32>
    %cst_218 = arith.constant 0.000000e+00 : f32
    %420 = vector.broadcast %cst_218 : f32 to vector<1x32xf32>
    %421 = arith.index_cast %418 : i32 to index
    %c0_219 = arith.constant 0 : index
    %422 = memref.load %arg1[%421, %c0_219] : memref<16x8xi32, #tpu.memory_space<smem>>
    %423 = arith.index_cast %422 : i32 to index
    %c0_220 = arith.constant 0 : index
    %424 = vector.load %arg4[%423, %c0_220] : memref<50x32xf32, #tpu.memory_space<vmem>>, vector<1x32xf32>
    %c0_221 = arith.constant 0 : index
    %c0_222 = arith.constant 0 : index
    %425 = vector.load %arg7[%c0_221, %c0_222] : memref<19x32xf32, #tpu.memory_space<vmem>>, vector<1x32xf32>
    %426 = arith.mulf %424, %425 : vector<1x32xf32>
    %427 = arith.addf %419, %426 : vector<1x32xf32>
    %428 = arith.index_cast %418 : i32 to index
    %c1_223 = arith.constant 1 : index
    %429 = memref.load %arg1[%428, %c1_223] : memref<16x8xi32, #tpu.memory_space<smem>>
    %430 = arith.index_cast %429 : i32 to index
    %c0_224 = arith.constant 0 : index
    %431 = vector.load %arg4[%430, %c0_224] : memref<50x32xf32, #tpu.memory_space<vmem>>, vector<1x32xf32>
    %c1_225 = arith.constant 1 : index
    %c0_226 = arith.constant 0 : index
    %432 = vector.load %arg7[%c1_225, %c0_226] : memref<19x32xf32, #tpu.memory_space<vmem>>, vector<1x32xf32>
    %433 = arith.mulf %431, %432 : vector<1x32xf32>
    %434 = arith.addf %420, %433 : vector<1x32xf32>
    %435 = arith.index_cast %418 : i32 to index
    %c2_227 = arith.constant 2 : index
    %436 = memref.load %arg1[%435, %c2_227] : memref<16x8xi32, #tpu.memory_space<smem>>
    %437 = arith.index_cast %436 : i32 to index
    %c0_228 = arith.constant 0 : index
    %438 = vector.load %arg4[%437, %c0_228] : memref<50x32xf32, #tpu.memory_space<vmem>>, vector<1x32xf32>
    %c2_229 = arith.constant 2 : index
    %c0_230 = arith.constant 0 : index
    %439 = vector.load %arg7[%c2_229, %c0_230] : memref<19x32xf32, #tpu.memory_space<vmem>>, vector<1x32xf32>
    %440 = arith.mulf %438, %439 : vector<1x32xf32>
    %441 = arith.addf %427, %440 : vector<1x32xf32>
    %442 = arith.index_cast %418 : i32 to index
    %c3_231 = arith.constant 3 : index
    %443 = memref.load %arg1[%442, %c3_231] : memref<16x8xi32, #tpu.memory_space<smem>>
    %444 = arith.index_cast %443 : i32 to index
    %c0_232 = arith.constant 0 : index
    %445 = vector.load %arg4[%444, %c0_232] : memref<50x32xf32, #tpu.memory_space<vmem>>, vector<1x32xf32>
    %c3_233 = arith.constant 3 : index
    %c0_234 = arith.constant 0 : index
    %446 = vector.load %arg7[%c3_233, %c0_234] : memref<19x32xf32, #tpu.memory_space<vmem>>, vector<1x32xf32>
    %447 = arith.mulf %445, %446 : vector<1x32xf32>
    %448 = arith.addf %434, %447 : vector<1x32xf32>
    %449 = arith.index_cast %418 : i32 to index
    %c4_235 = arith.constant 4 : index
    %450 = memref.load %arg1[%449, %c4_235] : memref<16x8xi32, #tpu.memory_space<smem>>
    %451 = arith.index_cast %450 : i32 to index
    %c0_236 = arith.constant 0 : index
    %452 = vector.load %arg4[%451, %c0_236] : memref<50x32xf32, #tpu.memory_space<vmem>>, vector<1x32xf32>
    %c4_237 = arith.constant 4 : index
    %c0_238 = arith.constant 0 : index
    %453 = vector.load %arg7[%c4_237, %c0_238] : memref<19x32xf32, #tpu.memory_space<vmem>>, vector<1x32xf32>
    %454 = arith.mulf %452, %453 : vector<1x32xf32>
    %455 = arith.addf %441, %454 : vector<1x32xf32>
    %456 = arith.index_cast %418 : i32 to index
    %c5_239 = arith.constant 5 : index
    %457 = memref.load %arg1[%456, %c5_239] : memref<16x8xi32, #tpu.memory_space<smem>>
    %458 = arith.index_cast %457 : i32 to index
    %c0_240 = arith.constant 0 : index
    %459 = vector.load %arg4[%458, %c0_240] : memref<50x32xf32, #tpu.memory_space<vmem>>, vector<1x32xf32>
    %c5_241 = arith.constant 5 : index
    %c0_242 = arith.constant 0 : index
    %460 = vector.load %arg7[%c5_241, %c0_242] : memref<19x32xf32, #tpu.memory_space<vmem>>, vector<1x32xf32>
    %461 = arith.mulf %459, %460 : vector<1x32xf32>
    %462 = arith.addf %448, %461 : vector<1x32xf32>
    %463 = arith.index_cast %418 : i32 to index
    %c6_243 = arith.constant 6 : index
    %464 = memref.load %arg1[%463, %c6_243] : memref<16x8xi32, #tpu.memory_space<smem>>
    %465 = arith.index_cast %464 : i32 to index
    %c0_244 = arith.constant 0 : index
    %466 = vector.load %arg4[%465, %c0_244] : memref<50x32xf32, #tpu.memory_space<vmem>>, vector<1x32xf32>
    %c6_245 = arith.constant 6 : index
    %c0_246 = arith.constant 0 : index
    %467 = vector.load %arg7[%c6_245, %c0_246] : memref<19x32xf32, #tpu.memory_space<vmem>>, vector<1x32xf32>
    %468 = arith.mulf %466, %467 : vector<1x32xf32>
    %469 = arith.addf %455, %468 : vector<1x32xf32>
    %470 = arith.index_cast %418 : i32 to index
    %c7_247 = arith.constant 7 : index
    %471 = memref.load %arg1[%470, %c7_247] : memref<16x8xi32, #tpu.memory_space<smem>>
    %472 = arith.index_cast %471 : i32 to index
    %c0_248 = arith.constant 0 : index
    %473 = vector.load %arg4[%472, %c0_248] : memref<50x32xf32, #tpu.memory_space<vmem>>, vector<1x32xf32>
    %c7_249 = arith.constant 7 : index
    %c0_250 = arith.constant 0 : index
    %474 = vector.load %arg7[%c7_249, %c0_250] : memref<19x32xf32, #tpu.memory_space<vmem>>, vector<1x32xf32>
    %475 = arith.mulf %473, %474 : vector<1x32xf32>
    %476 = arith.addf %462, %475 : vector<1x32xf32>
    %477 = arith.index_cast %418 : i32 to index
    %c0_251 = arith.constant 0 : index
    %478 = memref.load %arg2[%477, %c0_251] : memref<16x8xi32, #tpu.memory_space<smem>>
    %479 = arith.index_cast %478 : i32 to index
    %c0_252 = arith.constant 0 : index
    %480 = vector.load %arg5[%479, %c0_252] : memref<50x32xf32, #tpu.memory_space<vmem>>, vector<1x32xf32>
    %c8_253 = arith.constant 8 : index
    %c0_254 = arith.constant 0 : index
    %481 = vector.load %arg7[%c8_253, %c0_254] : memref<19x32xf32, #tpu.memory_space<vmem>>, vector<1x32xf32>
    %482 = arith.mulf %480, %481 : vector<1x32xf32>
    %483 = arith.addf %469, %482 : vector<1x32xf32>
    %484 = arith.index_cast %418 : i32 to index
    %c1_255 = arith.constant 1 : index
    %485 = memref.load %arg2[%484, %c1_255] : memref<16x8xi32, #tpu.memory_space<smem>>
    %486 = arith.index_cast %485 : i32 to index
    %c0_256 = arith.constant 0 : index
    %487 = vector.load %arg5[%486, %c0_256] : memref<50x32xf32, #tpu.memory_space<vmem>>, vector<1x32xf32>
    %c9_257 = arith.constant 9 : index
    %c0_258 = arith.constant 0 : index
    %488 = vector.load %arg7[%c9_257, %c0_258] : memref<19x32xf32, #tpu.memory_space<vmem>>, vector<1x32xf32>
    %489 = arith.mulf %487, %488 : vector<1x32xf32>
    %490 = arith.addf %476, %489 : vector<1x32xf32>
    %491 = arith.index_cast %418 : i32 to index
    %c2_259 = arith.constant 2 : index
    %492 = memref.load %arg2[%491, %c2_259] : memref<16x8xi32, #tpu.memory_space<smem>>
    %493 = arith.index_cast %492 : i32 to index
    %c0_260 = arith.constant 0 : index
    %494 = vector.load %arg5[%493, %c0_260] : memref<50x32xf32, #tpu.memory_space<vmem>>, vector<1x32xf32>
    %c10_261 = arith.constant 10 : index
    %c0_262 = arith.constant 0 : index
    %495 = vector.load %arg7[%c10_261, %c0_262] : memref<19x32xf32, #tpu.memory_space<vmem>>, vector<1x32xf32>
    %496 = arith.mulf %494, %495 : vector<1x32xf32>
    %497 = arith.addf %483, %496 : vector<1x32xf32>
    %498 = arith.index_cast %418 : i32 to index
    %c3_263 = arith.constant 3 : index
    %499 = memref.load %arg2[%498, %c3_263] : memref<16x8xi32, #tpu.memory_space<smem>>
    %500 = arith.index_cast %499 : i32 to index
    %c0_264 = arith.constant 0 : index
    %501 = vector.load %arg5[%500, %c0_264] : memref<50x32xf32, #tpu.memory_space<vmem>>, vector<1x32xf32>
    %c11_265 = arith.constant 11 : index
    %c0_266 = arith.constant 0 : index
    %502 = vector.load %arg7[%c11_265, %c0_266] : memref<19x32xf32, #tpu.memory_space<vmem>>, vector<1x32xf32>
    %503 = arith.mulf %501, %502 : vector<1x32xf32>
    %504 = arith.addf %490, %503 : vector<1x32xf32>
    %505 = arith.index_cast %418 : i32 to index
    %c4_267 = arith.constant 4 : index
    %506 = memref.load %arg2[%505, %c4_267] : memref<16x8xi32, #tpu.memory_space<smem>>
    %507 = arith.index_cast %506 : i32 to index
    %c0_268 = arith.constant 0 : index
    %508 = vector.load %arg5[%507, %c0_268] : memref<50x32xf32, #tpu.memory_space<vmem>>, vector<1x32xf32>
    %c12_269 = arith.constant 12 : index
    %c0_270 = arith.constant 0 : index
    %509 = vector.load %arg7[%c12_269, %c0_270] : memref<19x32xf32, #tpu.memory_space<vmem>>, vector<1x32xf32>
    %510 = arith.mulf %508, %509 : vector<1x32xf32>
    %511 = arith.addf %497, %510 : vector<1x32xf32>
    %512 = arith.index_cast %418 : i32 to index
    %c5_271 = arith.constant 5 : index
    %513 = memref.load %arg2[%512, %c5_271] : memref<16x8xi32, #tpu.memory_space<smem>>
    %514 = arith.index_cast %513 : i32 to index
    %c0_272 = arith.constant 0 : index
    %515 = vector.load %arg5[%514, %c0_272] : memref<50x32xf32, #tpu.memory_space<vmem>>, vector<1x32xf32>
    %c13_273 = arith.constant 13 : index
    %c0_274 = arith.constant 0 : index
    %516 = vector.load %arg7[%c13_273, %c0_274] : memref<19x32xf32, #tpu.memory_space<vmem>>, vector<1x32xf32>
    %517 = arith.mulf %515, %516 : vector<1x32xf32>
    %518 = arith.addf %504, %517 : vector<1x32xf32>
    %519 = arith.index_cast %418 : i32 to index
    %c6_275 = arith.constant 6 : index
    %520 = memref.load %arg2[%519, %c6_275] : memref<16x8xi32, #tpu.memory_space<smem>>
    %521 = arith.index_cast %520 : i32 to index
    %c0_276 = arith.constant 0 : index
    %522 = vector.load %arg5[%521, %c0_276] : memref<50x32xf32, #tpu.memory_space<vmem>>, vector<1x32xf32>
    %c14_277 = arith.constant 14 : index
    %c0_278 = arith.constant 0 : index
    %523 = vector.load %arg7[%c14_277, %c0_278] : memref<19x32xf32, #tpu.memory_space<vmem>>, vector<1x32xf32>
    %524 = arith.mulf %522, %523 : vector<1x32xf32>
    %525 = arith.addf %511, %524 : vector<1x32xf32>
    %526 = arith.index_cast %418 : i32 to index
    %c7_279 = arith.constant 7 : index
    %527 = memref.load %arg2[%526, %c7_279] : memref<16x8xi32, #tpu.memory_space<smem>>
    %528 = arith.index_cast %527 : i32 to index
    %c0_280 = arith.constant 0 : index
    %529 = vector.load %arg5[%528, %c0_280] : memref<50x32xf32, #tpu.memory_space<vmem>>, vector<1x32xf32>
    %c15_281 = arith.constant 15 : index
    %c0_282 = arith.constant 0 : index
    %530 = vector.load %arg7[%c15_281, %c0_282] : memref<19x32xf32, #tpu.memory_space<vmem>>, vector<1x32xf32>
    %531 = arith.mulf %529, %530 : vector<1x32xf32>
    %532 = arith.addf %518, %531 : vector<1x32xf32>
    %533 = arith.index_cast %418 : i32 to index
    %c0_283 = arith.constant 0 : index
    %534 = memref.load %arg3[%533, %c0_283] : memref<16x3xi32, #tpu.memory_space<smem>>
    %535 = arith.index_cast %534 : i32 to index
    %c0_284 = arith.constant 0 : index
    %536 = vector.load %arg6[%535, %c0_284] : memref<10x32xf32, #tpu.memory_space<vmem>>, vector<1x32xf32>
    %c16_285 = arith.constant 16 : index
    %c0_286 = arith.constant 0 : index
    %537 = vector.load %arg7[%c16_285, %c0_286] : memref<19x32xf32, #tpu.memory_space<vmem>>, vector<1x32xf32>
    %538 = arith.mulf %536, %537 : vector<1x32xf32>
    %539 = arith.addf %525, %538 : vector<1x32xf32>
    %540 = arith.index_cast %418 : i32 to index
    %c1_287 = arith.constant 1 : index
    %541 = memref.load %arg3[%540, %c1_287] : memref<16x3xi32, #tpu.memory_space<smem>>
    %542 = arith.index_cast %541 : i32 to index
    %c0_288 = arith.constant 0 : index
    %543 = vector.load %arg6[%542, %c0_288] : memref<10x32xf32, #tpu.memory_space<vmem>>, vector<1x32xf32>
    %c17_289 = arith.constant 17 : index
    %c0_290 = arith.constant 0 : index
    %544 = vector.load %arg7[%c17_289, %c0_290] : memref<19x32xf32, #tpu.memory_space<vmem>>, vector<1x32xf32>
    %545 = arith.mulf %543, %544 : vector<1x32xf32>
    %546 = arith.addf %532, %545 : vector<1x32xf32>
    %547 = arith.index_cast %418 : i32 to index
    %c2_291 = arith.constant 2 : index
    %548 = memref.load %arg3[%547, %c2_291] : memref<16x3xi32, #tpu.memory_space<smem>>
    %549 = arith.index_cast %548 : i32 to index
    %c0_292 = arith.constant 0 : index
    %550 = vector.load %arg6[%549, %c0_292] : memref<10x32xf32, #tpu.memory_space<vmem>>, vector<1x32xf32>
    %c18_293 = arith.constant 18 : index
    %c0_294 = arith.constant 0 : index
    %551 = vector.load %arg7[%c18_293, %c0_294] : memref<19x32xf32, #tpu.memory_space<vmem>>, vector<1x32xf32>
    %552 = arith.mulf %550, %551 : vector<1x32xf32>
    %553 = arith.addf %539, %552 : vector<1x32xf32>
    %554 = arith.addf %553, %546 : vector<1x32xf32>
    %555 = arith.index_cast %c3_i32 : i32 to index
    %c0_295 = arith.constant 0 : index
    %556 = vector.load %arg10[%555, %c0_295] : memref<8x32xf32, #tpu.memory_space<vmem>>, vector<1x32xf32>
    tpu.vector_store %arg10[%555, %c0_295], %554 {strides = array<i32>} : memref<8x32xf32, #tpu.memory_space<vmem>>, vector<1x32xf32>,
    %c4_i32 = arith.constant 4 : i32
    %557 = arith.addi %0, %c4_i32 : i32
    %cst_296 = arith.constant 0.000000e+00 : f32
    %558 = vector.broadcast %cst_296 : f32 to vector<1x32xf32>
    %cst_297 = arith.constant 0.000000e+00 : f32
    %559 = vector.broadcast %cst_297 : f32 to vector<1x32xf32>
    %560 = arith.index_cast %557 : i32 to index
    %c0_298 = arith.constant 0 : index
    %561 = memref.load %arg1[%560, %c0_298] : memref<16x8xi32, #tpu.memory_space<smem>>
    %562 = arith.index_cast %561 : i32 to index
    %c0_299 = arith.constant 0 : index
    %563 = vector.load %arg4[%562, %c0_299] : memref<50x32xf32, #tpu.memory_space<vmem>>, vector<1x32xf32>
    %c0_300 = arith.constant 0 : index
    %c0_301 = arith.constant 0 : index
    %564 = vector.load %arg7[%c0_300, %c0_301] : memref<19x32xf32, #tpu.memory_space<vmem>>, vector<1x32xf32>
    %565 = arith.mulf %563, %564 : vector<1x32xf32>
    %566 = arith.addf %558, %565 : vector<1x32xf32>
    %567 = arith.index_cast %557 : i32 to index
    %c1_302 = arith.constant 1 : index
    %568 = memref.load %arg1[%567, %c1_302] : memref<16x8xi32, #tpu.memory_space<smem>>
    %569 = arith.index_cast %568 : i32 to index
    %c0_303 = arith.constant 0 : index
    %570 = vector.load %arg4[%569, %c0_303] : memref<50x32xf32, #tpu.memory_space<vmem>>, vector<1x32xf32>
    %c1_304 = arith.constant 1 : index
    %c0_305 = arith.constant 0 : index
    %571 = vector.load %arg7[%c1_304, %c0_305] : memref<19x32xf32, #tpu.memory_space<vmem>>, vector<1x32xf32>
    %572 = arith.mulf %570, %571 : vector<1x32xf32>
    %573 = arith.addf %559, %572 : vector<1x32xf32>
    %574 = arith.index_cast %557 : i32 to index
    %c2_306 = arith.constant 2 : index
    %575 = memref.load %arg1[%574, %c2_306] : memref<16x8xi32, #tpu.memory_space<smem>>
    %576 = arith.index_cast %575 : i32 to index
    %c0_307 = arith.constant 0 : index
    %577 = vector.load %arg4[%576, %c0_307] : memref<50x32xf32, #tpu.memory_space<vmem>>, vector<1x32xf32>
    %c2_308 = arith.constant 2 : index
    %c0_309 = arith.constant 0 : index
    %578 = vector.load %arg7[%c2_308, %c0_309] : memref<19x32xf32, #tpu.memory_space<vmem>>, vector<1x32xf32>
    %579 = arith.mulf %577, %578 : vector<1x32xf32>
    %580 = arith.addf %566, %579 : vector<1x32xf32>
    %581 = arith.index_cast %557 : i32 to index
    %c3_310 = arith.constant 3 : index
    %582 = memref.load %arg1[%581, %c3_310] : memref<16x8xi32, #tpu.memory_space<smem>>
    %583 = arith.index_cast %582 : i32 to index
    %c0_311 = arith.constant 0 : index
    %584 = vector.load %arg4[%583, %c0_311] : memref<50x32xf32, #tpu.memory_space<vmem>>, vector<1x32xf32>
    %c3_312 = arith.constant 3 : index
    %c0_313 = arith.constant 0 : index
    %585 = vector.load %arg7[%c3_312, %c0_313] : memref<19x32xf32, #tpu.memory_space<vmem>>, vector<1x32xf32>
    %586 = arith.mulf %584, %585 : vector<1x32xf32>
    %587 = arith.addf %573, %586 : vector<1x32xf32>
    %588 = arith.index_cast %557 : i32 to index
    %c4_314 = arith.constant 4 : index
    %589 = memref.load %arg1[%588, %c4_314] : memref<16x8xi32, #tpu.memory_space<smem>>
    %590 = arith.index_cast %589 : i32 to index
    %c0_315 = arith.constant 0 : index
    %591 = vector.load %arg4[%590, %c0_315] : memref<50x32xf32, #tpu.memory_space<vmem>>, vector<1x32xf32>
    %c4_316 = arith.constant 4 : index
    %c0_317 = arith.constant 0 : index
    %592 = vector.load %arg7[%c4_316, %c0_317] : memref<19x32xf32, #tpu.memory_space<vmem>>, vector<1x32xf32>
    %593 = arith.mulf %591, %592 : vector<1x32xf32>
    %594 = arith.addf %580, %593 : vector<1x32xf32>
    %595 = arith.index_cast %557 : i32 to index
    %c5_318 = arith.constant 5 : index
    %596 = memref.load %arg1[%595, %c5_318] : memref<16x8xi32, #tpu.memory_space<smem>>
    %597 = arith.index_cast %596 : i32 to index
    %c0_319 = arith.constant 0 : index
    %598 = vector.load %arg4[%597, %c0_319] : memref<50x32xf32, #tpu.memory_space<vmem>>, vector<1x32xf32>
    %c5_320 = arith.constant 5 : index
    %c0_321 = arith.constant 0 : index
    %599 = vector.load %arg7[%c5_320, %c0_321] : memref<19x32xf32, #tpu.memory_space<vmem>>, vector<1x32xf32>
    %600 = arith.mulf %598, %599 : vector<1x32xf32>
    %601 = arith.addf %587, %600 : vector<1x32xf32>
    %602 = arith.index_cast %557 : i32 to index
    %c6_322 = arith.constant 6 : index
    %603 = memref.load %arg1[%602, %c6_322] : memref<16x8xi32, #tpu.memory_space<smem>>
    %604 = arith.index_cast %603 : i32 to index
    %c0_323 = arith.constant 0 : index
    %605 = vector.load %arg4[%604, %c0_323] : memref<50x32xf32, #tpu.memory_space<vmem>>, vector<1x32xf32>
    %c6_324 = arith.constant 6 : index
    %c0_325 = arith.constant 0 : index
    %606 = vector.load %arg7[%c6_324, %c0_325] : memref<19x32xf32, #tpu.memory_space<vmem>>, vector<1x32xf32>
    %607 = arith.mulf %605, %606 : vector<1x32xf32>
    %608 = arith.addf %594, %607 : vector<1x32xf32>
    %609 = arith.index_cast %557 : i32 to index
    %c7_326 = arith.constant 7 : index
    %610 = memref.load %arg1[%609, %c7_326] : memref<16x8xi32, #tpu.memory_space<smem>>
    %611 = arith.index_cast %610 : i32 to index
    %c0_327 = arith.constant 0 : index
    %612 = vector.load %arg4[%611, %c0_327] : memref<50x32xf32, #tpu.memory_space<vmem>>, vector<1x32xf32>
    %c7_328 = arith.constant 7 : index
    %c0_329 = arith.constant 0 : index
    %613 = vector.load %arg7[%c7_328, %c0_329] : memref<19x32xf32, #tpu.memory_space<vmem>>, vector<1x32xf32>
    %614 = arith.mulf %612, %613 : vector<1x32xf32>
    %615 = arith.addf %601, %614 : vector<1x32xf32>
    %616 = arith.index_cast %557 : i32 to index
    %c0_330 = arith.constant 0 : index
    %617 = memref.load %arg2[%616, %c0_330] : memref<16x8xi32, #tpu.memory_space<smem>>
    %618 = arith.index_cast %617 : i32 to index
    %c0_331 = arith.constant 0 : index
    %619 = vector.load %arg5[%618, %c0_331] : memref<50x32xf32, #tpu.memory_space<vmem>>, vector<1x32xf32>
    %c8_332 = arith.constant 8 : index
    %c0_333 = arith.constant 0 : index
    %620 = vector.load %arg7[%c8_332, %c0_333] : memref<19x32xf32, #tpu.memory_space<vmem>>, vector<1x32xf32>
    %621 = arith.mulf %619, %620 : vector<1x32xf32>
    %622 = arith.addf %608, %621 : vector<1x32xf32>
    %623 = arith.index_cast %557 : i32 to index
    %c1_334 = arith.constant 1 : index
    %624 = memref.load %arg2[%623, %c1_334] : memref<16x8xi32, #tpu.memory_space<smem>>
    %625 = arith.index_cast %624 : i32 to index
    %c0_335 = arith.constant 0 : index
    %626 = vector.load %arg5[%625, %c0_335] : memref<50x32xf32, #tpu.memory_space<vmem>>, vector<1x32xf32>
    %c9_336 = arith.constant 9 : index
    %c0_337 = arith.constant 0 : index
    %627 = vector.load %arg7[%c9_336, %c0_337] : memref<19x32xf32, #tpu.memory_space<vmem>>, vector<1x32xf32>
    %628 = arith.mulf %626, %627 : vector<1x32xf32>
    %629 = arith.addf %615, %628 : vector<1x32xf32>
    %630 = arith.index_cast %557 : i32 to index
    %c2_338 = arith.constant 2 : index
    %631 = memref.load %arg2[%630, %c2_338] : memref<16x8xi32, #tpu.memory_space<smem>>
    %632 = arith.index_cast %631 : i32 to index
    %c0_339 = arith.constant 0 : index
    %633 = vector.load %arg5[%632, %c0_339] : memref<50x32xf32, #tpu.memory_space<vmem>>, vector<1x32xf32>
    %c10_340 = arith.constant 10 : index
    %c0_341 = arith.constant 0 : index
    %634 = vector.load %arg7[%c10_340, %c0_341] : memref<19x32xf32, #tpu.memory_space<vmem>>, vector<1x32xf32>
    %635 = arith.mulf %633, %634 : vector<1x32xf32>
    %636 = arith.addf %622, %635 : vector<1x32xf32>
    %637 = arith.index_cast %557 : i32 to index
    %c3_342 = arith.constant 3 : index
    %638 = memref.load %arg2[%637, %c3_342] : memref<16x8xi32, #tpu.memory_space<smem>>
    %639 = arith.index_cast %638 : i32 to index
    %c0_343 = arith.constant 0 : index
    %640 = vector.load %arg5[%639, %c0_343] : memref<50x32xf32, #tpu.memory_space<vmem>>, vector<1x32xf32>
    %c11_344 = arith.constant 11 : index
    %c0_345 = arith.constant 0 : index
    %641 = vector.load %arg7[%c11_344, %c0_345] : memref<19x32xf32, #tpu.memory_space<vmem>>, vector<1x32xf32>
    %642 = arith.mulf %640, %641 : vector<1x32xf32>
    %643 = arith.addf %629, %642 : vector<1x32xf32>
    %644 = arith.index_cast %557 : i32 to index
    %c4_346 = arith.constant 4 : index
    %645 = memref.load %arg2[%644, %c4_346] : memref<16x8xi32, #tpu.memory_space<smem>>
    %646 = arith.index_cast %645 : i32 to index
    %c0_347 = arith.constant 0 : index
    %647 = vector.load %arg5[%646, %c0_347] : memref<50x32xf32, #tpu.memory_space<vmem>>, vector<1x32xf32>
    %c12_348 = arith.constant 12 : index
    %c0_349 = arith.constant 0 : index
    %648 = vector.load %arg7[%c12_348, %c0_349] : memref<19x32xf32, #tpu.memory_space<vmem>>, vector<1x32xf32>
    %649 = arith.mulf %647, %648 : vector<1x32xf32>
    %650 = arith.addf %636, %649 : vector<1x32xf32>
    %651 = arith.index_cast %557 : i32 to index
    %c5_350 = arith.constant 5 : index
    %652 = memref.load %arg2[%651, %c5_350] : memref<16x8xi32, #tpu.memory_space<smem>>
    %653 = arith.index_cast %652 : i32 to index
    %c0_351 = arith.constant 0 : index
    %654 = vector.load %arg5[%653, %c0_351] : memref<50x32xf32, #tpu.memory_space<vmem>>, vector<1x32xf32>
    %c13_352 = arith.constant 13 : index
    %c0_353 = arith.constant 0 : index
    %655 = vector.load %arg7[%c13_352, %c0_353] : memref<19x32xf32, #tpu.memory_space<vmem>>, vector<1x32xf32>
    %656 = arith.mulf %654, %655 : vector<1x32xf32>
    %657 = arith.addf %643, %656 : vector<1x32xf32>
    %658 = arith.index_cast %557 : i32 to index
    %c6_354 = arith.constant 6 : index
    %659 = memref.load %arg2[%658, %c6_354] : memref<16x8xi32, #tpu.memory_space<smem>>
    %660 = arith.index_cast %659 : i32 to index
    %c0_355 = arith.constant 0 : index
    %661 = vector.load %arg5[%660, %c0_355] : memref<50x32xf32, #tpu.memory_space<vmem>>, vector<1x32xf32>
    %c14_356 = arith.constant 14 : index
    %c0_357 = arith.constant 0 : index
    %662 = vector.load %arg7[%c14_356, %c0_357] : memref<19x32xf32, #tpu.memory_space<vmem>>, vector<1x32xf32>
    %663 = arith.mulf %661, %662 : vector<1x32xf32>
    %664 = arith.addf %650, %663 : vector<1x32xf32>
    %665 = arith.index_cast %557 : i32 to index
    %c7_358 = arith.constant 7 : index
    %666 = memref.load %arg2[%665, %c7_358] : memref<16x8xi32, #tpu.memory_space<smem>>
    %667 = arith.index_cast %666 : i32 to index
    %c0_359 = arith.constant 0 : index
    %668 = vector.load %arg5[%667, %c0_359] : memref<50x32xf32, #tpu.memory_space<vmem>>, vector<1x32xf32>
    %c15_360 = arith.constant 15 : index
    %c0_361 = arith.constant 0 : index
    %669 = vector.load %arg7[%c15_360, %c0_361] : memref<19x32xf32, #tpu.memory_space<vmem>>, vector<1x32xf32>
    %670 = arith.mulf %668, %669 : vector<1x32xf32>
    %671 = arith.addf %657, %670 : vector<1x32xf32>
    %672 = arith.index_cast %557 : i32 to index
    %c0_362 = arith.constant 0 : index
    %673 = memref.load %arg3[%672, %c0_362] : memref<16x3xi32, #tpu.memory_space<smem>>
    %674 = arith.index_cast %673 : i32 to index
    %c0_363 = arith.constant 0 : index
    %675 = vector.load %arg6[%674, %c0_363] : memref<10x32xf32, #tpu.memory_space<vmem>>, vector<1x32xf32>
    %c16_364 = arith.constant 16 : index
    %c0_365 = arith.constant 0 : index
    %676 = vector.load %arg7[%c16_364, %c0_365] : memref<19x32xf32, #tpu.memory_space<vmem>>, vector<1x32xf32>
    %677 = arith.mulf %675, %676 : vector<1x32xf32>
    %678 = arith.addf %664, %677 : vector<1x32xf32>
    %679 = arith.index_cast %557 : i32 to index
    %c1_366 = arith.constant 1 : index
    %680 = memref.load %arg3[%679, %c1_366] : memref<16x3xi32, #tpu.memory_space<smem>>
    %681 = arith.index_cast %680 : i32 to index
    %c0_367 = arith.constant 0 : index
    %682 = vector.load %arg6[%681, %c0_367] : memref<10x32xf32, #tpu.memory_space<vmem>>, vector<1x32xf32>
    %c17_368 = arith.constant 17 : index
    %c0_369 = arith.constant 0 : index
    %683 = vector.load %arg7[%c17_368, %c0_369] : memref<19x32xf32, #tpu.memory_space<vmem>>, vector<1x32xf32>
    %684 = arith.mulf %682, %683 : vector<1x32xf32>
    %685 = arith.addf %671, %684 : vector<1x32xf32>
    %686 = arith.index_cast %557 : i32 to index
    %c2_370 = arith.constant 2 : index
    %687 = memref.load %arg3[%686, %c2_370] : memref<16x3xi32, #tpu.memory_space<smem>>
    %688 = arith.index_cast %687 : i32 to index
    %c0_371 = arith.constant 0 : index
    %689 = vector.load %arg6[%688, %c0_371] : memref<10x32xf32, #tpu.memory_space<vmem>>, vector<1x32xf32>
    %c18_372 = arith.constant 18 : index
    %c0_373 = arith.constant 0 : index
    %690 = vector.load %arg7[%c18_372, %c0_373] : memref<19x32xf32, #tpu.memory_space<vmem>>, vector<1x32xf32>
    %691 = arith.mulf %689, %690 : vector<1x32xf32>
    %692 = arith.addf %678, %691 : vector<1x32xf32>
    %693 = arith.addf %692, %685 : vector<1x32xf32>
    %694 = arith.index_cast %c4_i32 : i32 to index
    %c0_374 = arith.constant 0 : index
    %695 = vector.load %arg10[%694, %c0_374] : memref<8x32xf32, #tpu.memory_space<vmem>>, vector<1x32xf32>
    tpu.vector_store %arg10[%694, %c0_374], %693 {strides = array<i32>} : memref<8x32xf32, #tpu.memory_space<vmem>>, vector<1x32xf32>,
    %c5_i32 = arith.constant 5 : i32
    %696 = arith.addi %0, %c5_i32 : i32
    %cst_375 = arith.constant 0.000000e+00 : f32
    %697 = vector.broadcast %cst_375 : f32 to vector<1x32xf32>
    %cst_376 = arith.constant 0.000000e+00 : f32
    %698 = vector.broadcast %cst_376 : f32 to vector<1x32xf32>
    %699 = arith.index_cast %696 : i32 to index
    %c0_377 = arith.constant 0 : index
    %700 = memref.load %arg1[%699, %c0_377] : memref<16x8xi32, #tpu.memory_space<smem>>
    %701 = arith.index_cast %700 : i32 to index
    %c0_378 = arith.constant 0 : index
    %702 = vector.load %arg4[%701, %c0_378] : memref<50x32xf32, #tpu.memory_space<vmem>>, vector<1x32xf32>
    %c0_379 = arith.constant 0 : index
    %c0_380 = arith.constant 0 : index
    %703 = vector.load %arg7[%c0_379, %c0_380] : memref<19x32xf32, #tpu.memory_space<vmem>>, vector<1x32xf32>
    %704 = arith.mulf %702, %703 : vector<1x32xf32>
    %705 = arith.addf %697, %704 : vector<1x32xf32>
    %706 = arith.index_cast %696 : i32 to index
    %c1_381 = arith.constant 1 : index
    %707 = memref.load %arg1[%706, %c1_381] : memref<16x8xi32, #tpu.memory_space<smem>>
    %708 = arith.index_cast %707 : i32 to index
    %c0_382 = arith.constant 0 : index
    %709 = vector.load %arg4[%708, %c0_382] : memref<50x32xf32, #tpu.memory_space<vmem>>, vector<1x32xf32>
    %c1_383 = arith.constant 1 : index
    %c0_384 = arith.constant 0 : index
    %710 = vector.load %arg7[%c1_383, %c0_384] : memref<19x32xf32, #tpu.memory_space<vmem>>, vector<1x32xf32>
    %711 = arith.mulf %709, %710 : vector<1x32xf32>
    %712 = arith.addf %698, %711 : vector<1x32xf32>
    %713 = arith.index_cast %696 : i32 to index
    %c2_385 = arith.constant 2 : index
    %714 = memref.load %arg1[%713, %c2_385] : memref<16x8xi32, #tpu.memory_space<smem>>
    %715 = arith.index_cast %714 : i32 to index
    %c0_386 = arith.constant 0 : index
    %716 = vector.load %arg4[%715, %c0_386] : memref<50x32xf32, #tpu.memory_space<vmem>>, vector<1x32xf32>
    %c2_387 = arith.constant 2 : index
    %c0_388 = arith.constant 0 : index
    %717 = vector.load %arg7[%c2_387, %c0_388] : memref<19x32xf32, #tpu.memory_space<vmem>>, vector<1x32xf32>
    %718 = arith.mulf %716, %717 : vector<1x32xf32>
    %719 = arith.addf %705, %718 : vector<1x32xf32>
    %720 = arith.index_cast %696 : i32 to index
    %c3_389 = arith.constant 3 : index
    %721 = memref.load %arg1[%720, %c3_389] : memref<16x8xi32, #tpu.memory_space<smem>>
    %722 = arith.index_cast %721 : i32 to index
    %c0_390 = arith.constant 0 : index
    %723 = vector.load %arg4[%722, %c0_390] : memref<50x32xf32, #tpu.memory_space<vmem>>, vector<1x32xf32>
    %c3_391 = arith.constant 3 : index
    %c0_392 = arith.constant 0 : index
    %724 = vector.load %arg7[%c3_391, %c0_392] : memref<19x32xf32, #tpu.memory_space<vmem>>, vector<1x32xf32>
    %725 = arith.mulf %723, %724 : vector<1x32xf32>
    %726 = arith.addf %712, %725 : vector<1x32xf32>
    %727 = arith.index_cast %696 : i32 to index
    %c4_393 = arith.constant 4 : index
    %728 = memref.load %arg1[%727, %c4_393] : memref<16x8xi32, #tpu.memory_space<smem>>
    %729 = arith.index_cast %728 : i32 to index
    %c0_394 = arith.constant 0 : index
    %730 = vector.load %arg4[%729, %c0_394] : memref<50x32xf32, #tpu.memory_space<vmem>>, vector<1x32xf32>
    %c4_395 = arith.constant 4 : index
    %c0_396 = arith.constant 0 : index
    %731 = vector.load %arg7[%c4_395, %c0_396] : memref<19x32xf32, #tpu.memory_space<vmem>>, vector<1x32xf32>
    %732 = arith.mulf %730, %731 : vector<1x32xf32>
    %733 = arith.addf %719, %732 : vector<1x32xf32>
    %734 = arith.index_cast %696 : i32 to index
    %c5_397 = arith.constant 5 : index
    %735 = memref.load %arg1[%734, %c5_397] : memref<16x8xi32, #tpu.memory_space<smem>>
    %736 = arith.index_cast %735 : i32 to index
    %c0_398 = arith.constant 0 : index
    %737 = vector.load %arg4[%736, %c0_398] : memref<50x32xf32, #tpu.memory_space<vmem>>, vector<1x32xf32>
    %c5_399 = arith.constant 5 : index
    %c0_400 = arith.constant 0 : index
    %738 = vector.load %arg7[%c5_399, %c0_400] : memref<19x32xf32, #tpu.memory_space<vmem>>, vector<1x32xf32>
    %739 = arith.mulf %737, %738 : vector<1x32xf32>
    %740 = arith.addf %726, %739 : vector<1x32xf32>
    %741 = arith.index_cast %696 : i32 to index
    %c6_401 = arith.constant 6 : index
    %742 = memref.load %arg1[%741, %c6_401] : memref<16x8xi32, #tpu.memory_space<smem>>
    %743 = arith.index_cast %742 : i32 to index
    %c0_402 = arith.constant 0 : index
    %744 = vector.load %arg4[%743, %c0_402] : memref<50x32xf32, #tpu.memory_space<vmem>>, vector<1x32xf32>
    %c6_403 = arith.constant 6 : index
    %c0_404 = arith.constant 0 : index
    %745 = vector.load %arg7[%c6_403, %c0_404] : memref<19x32xf32, #tpu.memory_space<vmem>>, vector<1x32xf32>
    %746 = arith.mulf %744, %745 : vector<1x32xf32>
    %747 = arith.addf %733, %746 : vector<1x32xf32>
    %748 = arith.index_cast %696 : i32 to index
    %c7_405 = arith.constant 7 : index
    %749 = memref.load %arg1[%748, %c7_405] : memref<16x8xi32, #tpu.memory_space<smem>>
    %750 = arith.index_cast %749 : i32 to index
    %c0_406 = arith.constant 0 : index
    %751 = vector.load %arg4[%750, %c0_406] : memref<50x32xf32, #tpu.memory_space<vmem>>, vector<1x32xf32>
    %c7_407 = arith.constant 7 : index
    %c0_408 = arith.constant 0 : index
    %752 = vector.load %arg7[%c7_407, %c0_408] : memref<19x32xf32, #tpu.memory_space<vmem>>, vector<1x32xf32>
    %753 = arith.mulf %751, %752 : vector<1x32xf32>
    %754 = arith.addf %740, %753 : vector<1x32xf32>
    %755 = arith.index_cast %696 : i32 to index
    %c0_409 = arith.constant 0 : index
    %756 = memref.load %arg2[%755, %c0_409] : memref<16x8xi32, #tpu.memory_space<smem>>
    %757 = arith.index_cast %756 : i32 to index
    %c0_410 = arith.constant 0 : index
    %758 = vector.load %arg5[%757, %c0_410] : memref<50x32xf32, #tpu.memory_space<vmem>>, vector<1x32xf32>
    %c8_411 = arith.constant 8 : index
    %c0_412 = arith.constant 0 : index
    %759 = vector.load %arg7[%c8_411, %c0_412] : memref<19x32xf32, #tpu.memory_space<vmem>>, vector<1x32xf32>
    %760 = arith.mulf %758, %759 : vector<1x32xf32>
    %761 = arith.addf %747, %760 : vector<1x32xf32>
    %762 = arith.index_cast %696 : i32 to index
    %c1_413 = arith.constant 1 : index
    %763 = memref.load %arg2[%762, %c1_413] : memref<16x8xi32, #tpu.memory_space<smem>>
    %764 = arith.index_cast %763 : i32 to index
    %c0_414 = arith.constant 0 : index
    %765 = vector.load %arg5[%764, %c0_414] : memref<50x32xf32, #tpu.memory_space<vmem>>, vector<1x32xf32>
    %c9_415 = arith.constant 9 : index
    %c0_416 = arith.constant 0 : index
    %766 = vector.load %arg7[%c9_415, %c0_416] : memref<19x32xf32, #tpu.memory_space<vmem>>, vector<1x32xf32>
    %767 = arith.mulf %765, %766 : vector<1x32xf32>
    %768 = arith.addf %754, %767 : vector<1x32xf32>
    %769 = arith.index_cast %696 : i32 to index
    %c2_417 = arith.constant 2 : index
    %770 = memref.load %arg2[%769, %c2_417] : memref<16x8xi32, #tpu.memory_space<smem>>
    %771 = arith.index_cast %770 : i32 to index
    %c0_418 = arith.constant 0 : index
    %772 = vector.load %arg5[%771, %c0_418] : memref<50x32xf32, #tpu.memory_space<vmem>>, vector<1x32xf32>
    %c10_419 = arith.constant 10 : index
    %c0_420 = arith.constant 0 : index
    %773 = vector.load %arg7[%c10_419, %c0_420] : memref<19x32xf32, #tpu.memory_space<vmem>>, vector<1x32xf32>
    %774 = arith.mulf %772, %773 : vector<1x32xf32>
    %775 = arith.addf %761, %774 : vector<1x32xf32>
    %776 = arith.index_cast %696 : i32 to index
    %c3_421 = arith.constant 3 : index
    %777 = memref.load %arg2[%776, %c3_421] : memref<16x8xi32, #tpu.memory_space<smem>>
    %778 = arith.index_cast %777 : i32 to index
    %c0_422 = arith.constant 0 : index
    %779 = vector.load %arg5[%778, %c0_422] : memref<50x32xf32, #tpu.memory_space<vmem>>, vector<1x32xf32>
    %c11_423 = arith.constant 11 : index
    %c0_424 = arith.constant 0 : index
    %780 = vector.load %arg7[%c11_423, %c0_424] : memref<19x32xf32, #tpu.memory_space<vmem>>, vector<1x32xf32>
    %781 = arith.mulf %779, %780 : vector<1x32xf32>
    %782 = arith.addf %768, %781 : vector<1x32xf32>
    %783 = arith.index_cast %696 : i32 to index
    %c4_425 = arith.constant 4 : index
    %784 = memref.load %arg2[%783, %c4_425] : memref<16x8xi32, #tpu.memory_space<smem>>
    %785 = arith.index_cast %784 : i32 to index
    %c0_426 = arith.constant 0 : index
    %786 = vector.load %arg5[%785, %c0_426] : memref<50x32xf32, #tpu.memory_space<vmem>>, vector<1x32xf32>
    %c12_427 = arith.constant 12 : index
    %c0_428 = arith.constant 0 : index
    %787 = vector.load %arg7[%c12_427, %c0_428] : memref<19x32xf32, #tpu.memory_space<vmem>>, vector<1x32xf32>
    %788 = arith.mulf %786, %787 : vector<1x32xf32>
    %789 = arith.addf %775, %788 : vector<1x32xf32>
    %790 = arith.index_cast %696 : i32 to index
    %c5_429 = arith.constant 5 : index
    %791 = memref.load %arg2[%790, %c5_429] : memref<16x8xi32, #tpu.memory_space<smem>>
    %792 = arith.index_cast %791 : i32 to index
    %c0_430 = arith.constant 0 : index
    %793 = vector.load %arg5[%792, %c0_430] : memref<50x32xf32, #tpu.memory_space<vmem>>, vector<1x32xf32>
    %c13_431 = arith.constant 13 : index
    %c0_432 = arith.constant 0 : index
    %794 = vector.load %arg7[%c13_431, %c0_432] : memref<19x32xf32, #tpu.memory_space<vmem>>, vector<1x32xf32>
    %795 = arith.mulf %793, %794 : vector<1x32xf32>
    %796 = arith.addf %782, %795 : vector<1x32xf32>
    %797 = arith.index_cast %696 : i32 to index
    %c6_433 = arith.constant 6 : index
    %798 = memref.load %arg2[%797, %c6_433] : memref<16x8xi32, #tpu.memory_space<smem>>
    %799 = arith.index_cast %798 : i32 to index
    %c0_434 = arith.constant 0 : index
    %800 = vector.load %arg5[%799, %c0_434] : memref<50x32xf32, #tpu.memory_space<vmem>>, vector<1x32xf32>
    %c14_435 = arith.constant 14 : index
    %c0_436 = arith.constant 0 : index
    %801 = vector.load %arg7[%c14_435, %c0_436] : memref<19x32xf32, #tpu.memory_space<vmem>>, vector<1x32xf32>
    %802 = arith.mulf %800, %801 : vector<1x32xf32>
    %803 = arith.addf %789, %802 : vector<1x32xf32>
    %804 = arith.index_cast %696 : i32 to index
    %c7_437 = arith.constant 7 : index
    %805 = memref.load %arg2[%804, %c7_437] : memref<16x8xi32, #tpu.memory_space<smem>>
    %806 = arith.index_cast %805 : i32 to index
    %c0_438 = arith.constant 0 : index
    %807 = vector.load %arg5[%806, %c0_438] : memref<50x32xf32, #tpu.memory_space<vmem>>, vector<1x32xf32>
    %c15_439 = arith.constant 15 : index
    %c0_440 = arith.constant 0 : index
    %808 = vector.load %arg7[%c15_439, %c0_440] : memref<19x32xf32, #tpu.memory_space<vmem>>, vector<1x32xf32>
    %809 = arith.mulf %807, %808 : vector<1x32xf32>
    %810 = arith.addf %796, %809 : vector<1x32xf32>
    %811 = arith.index_cast %696 : i32 to index
    %c0_441 = arith.constant 0 : index
    %812 = memref.load %arg3[%811, %c0_441] : memref<16x3xi32, #tpu.memory_space<smem>>
    %813 = arith.index_cast %812 : i32 to index
    %c0_442 = arith.constant 0 : index
    %814 = vector.load %arg6[%813, %c0_442] : memref<10x32xf32, #tpu.memory_space<vmem>>, vector<1x32xf32>
    %c16_443 = arith.constant 16 : index
    %c0_444 = arith.constant 0 : index
    %815 = vector.load %arg7[%c16_443, %c0_444] : memref<19x32xf32, #tpu.memory_space<vmem>>, vector<1x32xf32>
    %816 = arith.mulf %814, %815 : vector<1x32xf32>
    %817 = arith.addf %803, %816 : vector<1x32xf32>
    %818 = arith.index_cast %696 : i32 to index
    %c1_445 = arith.constant 1 : index
    %819 = memref.load %arg3[%818, %c1_445] : memref<16x3xi32, #tpu.memory_space<smem>>
    %820 = arith.index_cast %819 : i32 to index
    %c0_446 = arith.constant 0 : index
    %821 = vector.load %arg6[%820, %c0_446] : memref<10x32xf32, #tpu.memory_space<vmem>>, vector<1x32xf32>
    %c17_447 = arith.constant 17 : index
    %c0_448 = arith.constant 0 : index
    %822 = vector.load %arg7[%c17_447, %c0_448] : memref<19x32xf32, #tpu.memory_space<vmem>>, vector<1x32xf32>
    %823 = arith.mulf %821, %822 : vector<1x32xf32>
    %824 = arith.addf %810, %823 : vector<1x32xf32>
    %825 = arith.index_cast %696 : i32 to index
    %c2_449 = arith.constant 2 : index
    %826 = memref.load %arg3[%825, %c2_449] : memref<16x3xi32, #tpu.memory_space<smem>>
    %827 = arith.index_cast %826 : i32 to index
    %c0_450 = arith.constant 0 : index
    %828 = vector.load %arg6[%827, %c0_450] : memref<10x32xf32, #tpu.memory_space<vmem>>, vector<1x32xf32>
    %c18_451 = arith.constant 18 : index
    %c0_452 = arith.constant 0 : index
    %829 = vector.load %arg7[%c18_451, %c0_452] : memref<19x32xf32, #tpu.memory_space<vmem>>, vector<1x32xf32>
    %830 = arith.mulf %828, %829 : vector<1x32xf32>
    %831 = arith.addf %817, %830 : vector<1x32xf32>
    %832 = arith.addf %831, %824 : vector<1x32xf32>
    %833 = arith.index_cast %c5_i32 : i32 to index
    %c0_453 = arith.constant 0 : index
    %834 = vector.load %arg10[%833, %c0_453] : memref<8x32xf32, #tpu.memory_space<vmem>>, vector<1x32xf32>
    tpu.vector_store %arg10[%833, %c0_453], %832 {strides = array<i32>} : memref<8x32xf32, #tpu.memory_space<vmem>>, vector<1x32xf32>,
    %c6_i32 = arith.constant 6 : i32
    %835 = arith.addi %0, %c6_i32 : i32
    %cst_454 = arith.constant 0.000000e+00 : f32
    %836 = vector.broadcast %cst_454 : f32 to vector<1x32xf32>
    %cst_455 = arith.constant 0.000000e+00 : f32
    %837 = vector.broadcast %cst_455 : f32 to vector<1x32xf32>
    %838 = arith.index_cast %835 : i32 to index
    %c0_456 = arith.constant 0 : index
    %839 = memref.load %arg1[%838, %c0_456] : memref<16x8xi32, #tpu.memory_space<smem>>
    %840 = arith.index_cast %839 : i32 to index
    %c0_457 = arith.constant 0 : index
    %841 = vector.load %arg4[%840, %c0_457] : memref<50x32xf32, #tpu.memory_space<vmem>>, vector<1x32xf32>
    %c0_458 = arith.constant 0 : index
    %c0_459 = arith.constant 0 : index
    %842 = vector.load %arg7[%c0_458, %c0_459] : memref<19x32xf32, #tpu.memory_space<vmem>>, vector<1x32xf32>
    %843 = arith.mulf %841, %842 : vector<1x32xf32>
    %844 = arith.addf %836, %843 : vector<1x32xf32>
    %845 = arith.index_cast %835 : i32 to index
    %c1_460 = arith.constant 1 : index
    %846 = memref.load %arg1[%845, %c1_460] : memref<16x8xi32, #tpu.memory_space<smem>>
    %847 = arith.index_cast %846 : i32 to index
    %c0_461 = arith.constant 0 : index
    %848 = vector.load %arg4[%847, %c0_461] : memref<50x32xf32, #tpu.memory_space<vmem>>, vector<1x32xf32>
    %c1_462 = arith.constant 1 : index
    %c0_463 = arith.constant 0 : index
    %849 = vector.load %arg7[%c1_462, %c0_463] : memref<19x32xf32, #tpu.memory_space<vmem>>, vector<1x32xf32>
    %850 = arith.mulf %848, %849 : vector<1x32xf32>
    %851 = arith.addf %837, %850 : vector<1x32xf32>
    %852 = arith.index_cast %835 : i32 to index
    %c2_464 = arith.constant 2 : index
    %853 = memref.load %arg1[%852, %c2_464] : memref<16x8xi32, #tpu.memory_space<smem>>
    %854 = arith.index_cast %853 : i32 to index
    %c0_465 = arith.constant 0 : index
    %855 = vector.load %arg4[%854, %c0_465] : memref<50x32xf32, #tpu.memory_space<vmem>>, vector<1x32xf32>
    %c2_466 = arith.constant 2 : index
    %c0_467 = arith.constant 0 : index
    %856 = vector.load %arg7[%c2_466, %c0_467] : memref<19x32xf32, #tpu.memory_space<vmem>>, vector<1x32xf32>
    %857 = arith.mulf %855, %856 : vector<1x32xf32>
    %858 = arith.addf %844, %857 : vector<1x32xf32>
    %859 = arith.index_cast %835 : i32 to index
    %c3_468 = arith.constant 3 : index
    %860 = memref.load %arg1[%859, %c3_468] : memref<16x8xi32, #tpu.memory_space<smem>>
    %861 = arith.index_cast %860 : i32 to index
    %c0_469 = arith.constant 0 : index
    %862 = vector.load %arg4[%861, %c0_469] : memref<50x32xf32, #tpu.memory_space<vmem>>, vector<1x32xf32>
    %c3_470 = arith.constant 3 : index
    %c0_471 = arith.constant 0 : index
    %863 = vector.load %arg7[%c3_470, %c0_471] : memref<19x32xf32, #tpu.memory_space<vmem>>, vector<1x32xf32>
    %864 = arith.mulf %862, %863 : vector<1x32xf32>
    %865 = arith.addf %851, %864 : vector<1x32xf32>
    %866 = arith.index_cast %835 : i32 to index
    %c4_472 = arith.constant 4 : index
    %867 = memref.load %arg1[%866, %c4_472] : memref<16x8xi32, #tpu.memory_space<smem>>
    %868 = arith.index_cast %867 : i32 to index
    %c0_473 = arith.constant 0 : index
    %869 = vector.load %arg4[%868, %c0_473] : memref<50x32xf32, #tpu.memory_space<vmem>>, vector<1x32xf32>
    %c4_474 = arith.constant 4 : index
    %c0_475 = arith.constant 0 : index
    %870 = vector.load %arg7[%c4_474, %c0_475] : memref<19x32xf32, #tpu.memory_space<vmem>>, vector<1x32xf32>
    %871 = arith.mulf %869, %870 : vector<1x32xf32>
    %872 = arith.addf %858, %871 : vector<1x32xf32>
    %873 = arith.index_cast %835 : i32 to index
    %c5_476 = arith.constant 5 : index
    %874 = memref.load %arg1[%873, %c5_476] : memref<16x8xi32, #tpu.memory_space<smem>>
    %875 = arith.index_cast %874 : i32 to index
    %c0_477 = arith.constant 0 : index
    %876 = vector.load %arg4[%875, %c0_477] : memref<50x32xf32, #tpu.memory_space<vmem>>, vector<1x32xf32>
    %c5_478 = arith.constant 5 : index
    %c0_479 = arith.constant 0 : index
    %877 = vector.load %arg7[%c5_478, %c0_479] : memref<19x32xf32, #tpu.memory_space<vmem>>, vector<1x32xf32>
    %878 = arith.mulf %876, %877 : vector<1x32xf32>
    %879 = arith.addf %865, %878 : vector<1x32xf32>
    %880 = arith.index_cast %835 : i32 to index
    %c6_480 = arith.constant 6 : index
    %881 = memref.load %arg1[%880, %c6_480] : memref<16x8xi32, #tpu.memory_space<smem>>
    %882 = arith.index_cast %881 : i32 to index
    %c0_481 = arith.constant 0 : index
    %883 = vector.load %arg4[%882, %c0_481] : memref<50x32xf32, #tpu.memory_space<vmem>>, vector<1x32xf32>
    %c6_482 = arith.constant 6 : index
    %c0_483 = arith.constant 0 : index
    %884 = vector.load %arg7[%c6_482, %c0_483] : memref<19x32xf32, #tpu.memory_space<vmem>>, vector<1x32xf32>
    %885 = arith.mulf %883, %884 : vector<1x32xf32>
    %886 = arith.addf %872, %885 : vector<1x32xf32>
    %887 = arith.index_cast %835 : i32 to index
    %c7_484 = arith.constant 7 : index
    %888 = memref.load %arg1[%887, %c7_484] : memref<16x8xi32, #tpu.memory_space<smem>>
    %889 = arith.index_cast %888 : i32 to index
    %c0_485 = arith.constant 0 : index
    %890 = vector.load %arg4[%889, %c0_485] : memref<50x32xf32, #tpu.memory_space<vmem>>, vector<1x32xf32>
    %c7_486 = arith.constant 7 : index
    %c0_487 = arith.constant 0 : index
    %891 = vector.load %arg7[%c7_486, %c0_487] : memref<19x32xf32, #tpu.memory_space<vmem>>, vector<1x32xf32>
    %892 = arith.mulf %890, %891 : vector<1x32xf32>
    %893 = arith.addf %879, %892 : vector<1x32xf32>
    %894 = arith.index_cast %835 : i32 to index
    %c0_488 = arith.constant 0 : index
    %895 = memref.load %arg2[%894, %c0_488] : memref<16x8xi32, #tpu.memory_space<smem>>
    %896 = arith.index_cast %895 : i32 to index
    %c0_489 = arith.constant 0 : index
    %897 = vector.load %arg5[%896, %c0_489] : memref<50x32xf32, #tpu.memory_space<vmem>>, vector<1x32xf32>
    %c8_490 = arith.constant 8 : index
    %c0_491 = arith.constant 0 : index
    %898 = vector.load %arg7[%c8_490, %c0_491] : memref<19x32xf32, #tpu.memory_space<vmem>>, vector<1x32xf32>
    %899 = arith.mulf %897, %898 : vector<1x32xf32>
    %900 = arith.addf %886, %899 : vector<1x32xf32>
    %901 = arith.index_cast %835 : i32 to index
    %c1_492 = arith.constant 1 : index
    %902 = memref.load %arg2[%901, %c1_492] : memref<16x8xi32, #tpu.memory_space<smem>>
    %903 = arith.index_cast %902 : i32 to index
    %c0_493 = arith.constant 0 : index
    %904 = vector.load %arg5[%903, %c0_493] : memref<50x32xf32, #tpu.memory_space<vmem>>, vector<1x32xf32>
    %c9_494 = arith.constant 9 : index
    %c0_495 = arith.constant 0 : index
    %905 = vector.load %arg7[%c9_494, %c0_495] : memref<19x32xf32, #tpu.memory_space<vmem>>, vector<1x32xf32>
    %906 = arith.mulf %904, %905 : vector<1x32xf32>
    %907 = arith.addf %893, %906 : vector<1x32xf32>
    %908 = arith.index_cast %835 : i32 to index
    %c2_496 = arith.constant 2 : index
    %909 = memref.load %arg2[%908, %c2_496] : memref<16x8xi32, #tpu.memory_space<smem>>
    %910 = arith.index_cast %909 : i32 to index
    %c0_497 = arith.constant 0 : index
    %911 = vector.load %arg5[%910, %c0_497] : memref<50x32xf32, #tpu.memory_space<vmem>>, vector<1x32xf32>
    %c10_498 = arith.constant 10 : index
    %c0_499 = arith.constant 0 : index
    %912 = vector.load %arg7[%c10_498, %c0_499] : memref<19x32xf32, #tpu.memory_space<vmem>>, vector<1x32xf32>
    %913 = arith.mulf %911, %912 : vector<1x32xf32>
    %914 = arith.addf %900, %913 : vector<1x32xf32>
    %915 = arith.index_cast %835 : i32 to index
    %c3_500 = arith.constant 3 : index
    %916 = memref.load %arg2[%915, %c3_500] : memref<16x8xi32, #tpu.memory_space<smem>>
    %917 = arith.index_cast %916 : i32 to index
    %c0_501 = arith.constant 0 : index
    %918 = vector.load %arg5[%917, %c0_501] : memref<50x32xf32, #tpu.memory_space<vmem>>, vector<1x32xf32>
    %c11_502 = arith.constant 11 : index
    %c0_503 = arith.constant 0 : index
    %919 = vector.load %arg7[%c11_502, %c0_503] : memref<19x32xf32, #tpu.memory_space<vmem>>, vector<1x32xf32>
    %920 = arith.mulf %918, %919 : vector<1x32xf32>
    %921 = arith.addf %907, %920 : vector<1x32xf32>
    %922 = arith.index_cast %835 : i32 to index
    %c4_504 = arith.constant 4 : index
    %923 = memref.load %arg2[%922, %c4_504] : memref<16x8xi32, #tpu.memory_space<smem>>
    %924 = arith.index_cast %923 : i32 to index
    %c0_505 = arith.constant 0 : index
    %925 = vector.load %arg5[%924, %c0_505] : memref<50x32xf32, #tpu.memory_space<vmem>>, vector<1x32xf32>
    %c12_506 = arith.constant 12 : index
    %c0_507 = arith.constant 0 : index
    %926 = vector.load %arg7[%c12_506, %c0_507] : memref<19x32xf32, #tpu.memory_space<vmem>>, vector<1x32xf32>
    %927 = arith.mulf %925, %926 : vector<1x32xf32>
    %928 = arith.addf %914, %927 : vector<1x32xf32>
    %929 = arith.index_cast %835 : i32 to index
    %c5_508 = arith.constant 5 : index
    %930 = memref.load %arg2[%929, %c5_508] : memref<16x8xi32, #tpu.memory_space<smem>>
    %931 = arith.index_cast %930 : i32 to index
    %c0_509 = arith.constant 0 : index
    %932 = vector.load %arg5[%931, %c0_509] : memref<50x32xf32, #tpu.memory_space<vmem>>, vector<1x32xf32>
    %c13_510 = arith.constant 13 : index
    %c0_511 = arith.constant 0 : index
    %933 = vector.load %arg7[%c13_510, %c0_511] : memref<19x32xf32, #tpu.memory_space<vmem>>, vector<1x32xf32>
    %934 = arith.mulf %932, %933 : vector<1x32xf32>
    %935 = arith.addf %921, %934 : vector<1x32xf32>
    %936 = arith.index_cast %835 : i32 to index
    %c6_512 = arith.constant 6 : index
    %937 = memref.load %arg2[%936, %c6_512] : memref<16x8xi32, #tpu.memory_space<smem>>
    %938 = arith.index_cast %937 : i32 to index
    %c0_513 = arith.constant 0 : index
    %939 = vector.load %arg5[%938, %c0_513] : memref<50x32xf32, #tpu.memory_space<vmem>>, vector<1x32xf32>
    %c14_514 = arith.constant 14 : index
    %c0_515 = arith.constant 0 : index
    %940 = vector.load %arg7[%c14_514, %c0_515] : memref<19x32xf32, #tpu.memory_space<vmem>>, vector<1x32xf32>
    %941 = arith.mulf %939, %940 : vector<1x32xf32>
    %942 = arith.addf %928, %941 : vector<1x32xf32>
    %943 = arith.index_cast %835 : i32 to index
    %c7_516 = arith.constant 7 : index
    %944 = memref.load %arg2[%943, %c7_516] : memref<16x8xi32, #tpu.memory_space<smem>>
    %945 = arith.index_cast %944 : i32 to index
    %c0_517 = arith.constant 0 : index
    %946 = vector.load %arg5[%945, %c0_517] : memref<50x32xf32, #tpu.memory_space<vmem>>, vector<1x32xf32>
    %c15_518 = arith.constant 15 : index
    %c0_519 = arith.constant 0 : index
    %947 = vector.load %arg7[%c15_518, %c0_519] : memref<19x32xf32, #tpu.memory_space<vmem>>, vector<1x32xf32>
    %948 = arith.mulf %946, %947 : vector<1x32xf32>
    %949 = arith.addf %935, %948 : vector<1x32xf32>
    %950 = arith.index_cast %835 : i32 to index
    %c0_520 = arith.constant 0 : index
    %951 = memref.load %arg3[%950, %c0_520] : memref<16x3xi32, #tpu.memory_space<smem>>
    %952 = arith.index_cast %951 : i32 to index
    %c0_521 = arith.constant 0 : index
    %953 = vector.load %arg6[%952, %c0_521] : memref<10x32xf32, #tpu.memory_space<vmem>>, vector<1x32xf32>
    %c16_522 = arith.constant 16 : index
    %c0_523 = arith.constant 0 : index
    %954 = vector.load %arg7[%c16_522, %c0_523] : memref<19x32xf32, #tpu.memory_space<vmem>>, vector<1x32xf32>
    %955 = arith.mulf %953, %954 : vector<1x32xf32>
    %956 = arith.addf %942, %955 : vector<1x32xf32>
    %957 = arith.index_cast %835 : i32 to index
    %c1_524 = arith.constant 1 : index
    %958 = memref.load %arg3[%957, %c1_524] : memref<16x3xi32, #tpu.memory_space<smem>>
    %959 = arith.index_cast %958 : i32 to index
    %c0_525 = arith.constant 0 : index
    %960 = vector.load %arg6[%959, %c0_525] : memref<10x32xf32, #tpu.memory_space<vmem>>, vector<1x32xf32>
    %c17_526 = arith.constant 17 : index
    %c0_527 = arith.constant 0 : index
    %961 = vector.load %arg7[%c17_526, %c0_527] : memref<19x32xf32, #tpu.memory_space<vmem>>, vector<1x32xf32>
    %962 = arith.mulf %960, %961 : vector<1x32xf32>
    %963 = arith.addf %949, %962 : vector<1x32xf32>
    %964 = arith.index_cast %835 : i32 to index
    %c2_528 = arith.constant 2 : index
    %965 = memref.load %arg3[%964, %c2_528] : memref<16x3xi32, #tpu.memory_space<smem>>
    %966 = arith.index_cast %965 : i32 to index
    %c0_529 = arith.constant 0 : index
    %967 = vector.load %arg6[%966, %c0_529] : memref<10x32xf32, #tpu.memory_space<vmem>>, vector<1x32xf32>
    %c18_530 = arith.constant 18 : index
    %c0_531 = arith.constant 0 : index
    %968 = vector.load %arg7[%c18_530, %c0_531] : memref<19x32xf32, #tpu.memory_space<vmem>>, vector<1x32xf32>
    %969 = arith.mulf %967, %968 : vector<1x32xf32>
    %970 = arith.addf %956, %969 : vector<1x32xf32>
    %971 = arith.addf %970, %963 : vector<1x32xf32>
    %972 = arith.index_cast %c6_i32 : i32 to index
    %c0_532 = arith.constant 0 : index
    %973 = vector.load %arg10[%972, %c0_532] : memref<8x32xf32, #tpu.memory_space<vmem>>, vector<1x32xf32>
    tpu.vector_store %arg10[%972, %c0_532], %971 {strides = array<i32>} : memref<8x32xf32, #tpu.memory_space<vmem>>, vector<1x32xf32>,
    %c7_i32 = arith.constant 7 : i32
    %974 = arith.addi %0, %c7_i32 : i32
    %cst_533 = arith.constant 0.000000e+00 : f32
    %975 = vector.broadcast %cst_533 : f32 to vector<1x32xf32>
    %cst_534 = arith.constant 0.000000e+00 : f32
    %976 = vector.broadcast %cst_534 : f32 to vector<1x32xf32>
    %977 = arith.index_cast %974 : i32 to index
    %c0_535 = arith.constant 0 : index
    %978 = memref.load %arg1[%977, %c0_535] : memref<16x8xi32, #tpu.memory_space<smem>>
    %979 = arith.index_cast %978 : i32 to index
    %c0_536 = arith.constant 0 : index
    %980 = vector.load %arg4[%979, %c0_536] : memref<50x32xf32, #tpu.memory_space<vmem>>, vector<1x32xf32>
    %c0_537 = arith.constant 0 : index
    %c0_538 = arith.constant 0 : index
    %981 = vector.load %arg7[%c0_537, %c0_538] : memref<19x32xf32, #tpu.memory_space<vmem>>, vector<1x32xf32>
    %982 = arith.mulf %980, %981 : vector<1x32xf32>
    %983 = arith.addf %975, %982 : vector<1x32xf32>
    %984 = arith.index_cast %974 : i32 to index
    %c1_539 = arith.constant 1 : index
    %985 = memref.load %arg1[%984, %c1_539] : memref<16x8xi32, #tpu.memory_space<smem>>
    %986 = arith.index_cast %985 : i32 to index
    %c0_540 = arith.constant 0 : index
    %987 = vector.load %arg4[%986, %c0_540] : memref<50x32xf32, #tpu.memory_space<vmem>>, vector<1x32xf32>
    %c1_541 = arith.constant 1 : index
    %c0_542 = arith.constant 0 : index
    %988 = vector.load %arg7[%c1_541, %c0_542] : memref<19x32xf32, #tpu.memory_space<vmem>>, vector<1x32xf32>
    %989 = arith.mulf %987, %988 : vector<1x32xf32>
    %990 = arith.addf %976, %989 : vector<1x32xf32>
    %991 = arith.index_cast %974 : i32 to index
    %c2_543 = arith.constant 2 : index
    %992 = memref.load %arg1[%991, %c2_543] : memref<16x8xi32, #tpu.memory_space<smem>>
    %993 = arith.index_cast %992 : i32 to index
    %c0_544 = arith.constant 0 : index
    %994 = vector.load %arg4[%993, %c0_544] : memref<50x32xf32, #tpu.memory_space<vmem>>, vector<1x32xf32>
    %c2_545 = arith.constant 2 : index
    %c0_546 = arith.constant 0 : index
    %995 = vector.load %arg7[%c2_545, %c0_546] : memref<19x32xf32, #tpu.memory_space<vmem>>, vector<1x32xf32>
    %996 = arith.mulf %994, %995 : vector<1x32xf32>
    %997 = arith.addf %983, %996 : vector<1x32xf32>
    %998 = arith.index_cast %974 : i32 to index
    %c3_547 = arith.constant 3 : index
    %999 = memref.load %arg1[%998, %c3_547] : memref<16x8xi32, #tpu.memory_space<smem>>
    %1000 = arith.index_cast %999 : i32 to index
    %c0_548 = arith.constant 0 : index
    %1001 = vector.load %arg4[%1000, %c0_548] : memref<50x32xf32, #tpu.memory_space<vmem>>, vector<1x32xf32>
    %c3_549 = arith.constant 3 : index
    %c0_550 = arith.constant 0 : index
    %1002 = vector.load %arg7[%c3_549, %c0_550] : memref<19x32xf32, #tpu.memory_space<vmem>>, vector<1x32xf32>
    %1003 = arith.mulf %1001, %1002 : vector<1x32xf32>
    %1004 = arith.addf %990, %1003 : vector<1x32xf32>
    %1005 = arith.index_cast %974 : i32 to index
    %c4_551 = arith.constant 4 : index
    %1006 = memref.load %arg1[%1005, %c4_551] : memref<16x8xi32, #tpu.memory_space<smem>>
    %1007 = arith.index_cast %1006 : i32 to index
    %c0_552 = arith.constant 0 : index
    %1008 = vector.load %arg4[%1007, %c0_552] : memref<50x32xf32, #tpu.memory_space<vmem>>, vector<1x32xf32>
    %c4_553 = arith.constant 4 : index
    %c0_554 = arith.constant 0 : index
    %1009 = vector.load %arg7[%c4_553, %c0_554] : memref<19x32xf32, #tpu.memory_space<vmem>>, vector<1x32xf32>
    %1010 = arith.mulf %1008, %1009 : vector<1x32xf32>
    %1011 = arith.addf %997, %1010 : vector<1x32xf32>
    %1012 = arith.index_cast %974 : i32 to index
    %c5_555 = arith.constant 5 : index
    %1013 = memref.load %arg1[%1012, %c5_555] : memref<16x8xi32, #tpu.memory_space<smem>>
    %1014 = arith.index_cast %1013 : i32 to index
    %c0_556 = arith.constant 0 : index
    %1015 = vector.load %arg4[%1014, %c0_556] : memref<50x32xf32, #tpu.memory_space<vmem>>, vector<1x32xf32>
    %c5_557 = arith.constant 5 : index
    %c0_558 = arith.constant 0 : index
    %1016 = vector.load %arg7[%c5_557, %c0_558] : memref<19x32xf32, #tpu.memory_space<vmem>>, vector<1x32xf32>
    %1017 = arith.mulf %1015, %1016 : vector<1x32xf32>
    %1018 = arith.addf %1004, %1017 : vector<1x32xf32>
    %1019 = arith.index_cast %974 : i32 to index
    %c6_559 = arith.constant 6 : index
    %1020 = memref.load %arg1[%1019, %c6_559] : memref<16x8xi32, #tpu.memory_space<smem>>
    %1021 = arith.index_cast %1020 : i32 to index
    %c0_560 = arith.constant 0 : index
    %1022 = vector.load %arg4[%1021, %c0_560] : memref<50x32xf32, #tpu.memory_space<vmem>>, vector<1x32xf32>
    %c6_561 = arith.constant 6 : index
    %c0_562 = arith.constant 0 : index
    %1023 = vector.load %arg7[%c6_561, %c0_562] : memref<19x32xf32, #tpu.memory_space<vmem>>, vector<1x32xf32>
    %1024 = arith.mulf %1022, %1023 : vector<1x32xf32>
    %1025 = arith.addf %1011, %1024 : vector<1x32xf32>
    %1026 = arith.index_cast %974 : i32 to index
    %c7_563 = arith.constant 7 : index
    %1027 = memref.load %arg1[%1026, %c7_563] : memref<16x8xi32, #tpu.memory_space<smem>>
    %1028 = arith.index_cast %1027 : i32 to index
    %c0_564 = arith.constant 0 : index
    %1029 = vector.load %arg4[%1028, %c0_564] : memref<50x32xf32, #tpu.memory_space<vmem>>, vector<1x32xf32>
    %c7_565 = arith.constant 7 : index
    %c0_566 = arith.constant 0 : index
    %1030 = vector.load %arg7[%c7_565, %c0_566] : memref<19x32xf32, #tpu.memory_space<vmem>>, vector<1x32xf32>
    %1031 = arith.mulf %1029, %1030 : vector<1x32xf32>
    %1032 = arith.addf %1018, %1031 : vector<1x32xf32>
    %1033 = arith.index_cast %974 : i32 to index
    %c0_567 = arith.constant 0 : index
    %1034 = memref.load %arg2[%1033, %c0_567] : memref<16x8xi32, #tpu.memory_space<smem>>
    %1035 = arith.index_cast %1034 : i32 to index
    %c0_568 = arith.constant 0 : index
    %1036 = vector.load %arg5[%1035, %c0_568] : memref<50x32xf32, #tpu.memory_space<vmem>>, vector<1x32xf32>
    %c8_569 = arith.constant 8 : index
    %c0_570 = arith.constant 0 : index
    %1037 = vector.load %arg7[%c8_569, %c0_570] : memref<19x32xf32, #tpu.memory_space<vmem>>, vector<1x32xf32>
    %1038 = arith.mulf %1036, %1037 : vector<1x32xf32>
    %1039 = arith.addf %1025, %1038 : vector<1x32xf32>
    %1040 = arith.index_cast %974 : i32 to index
    %c1_571 = arith.constant 1 : index
    %1041 = memref.load %arg2[%1040, %c1_571] : memref<16x8xi32, #tpu.memory_space<smem>>
    %1042 = arith.index_cast %1041 : i32 to index
    %c0_572 = arith.constant 0 : index
    %1043 = vector.load %arg5[%1042, %c0_572] : memref<50x32xf32, #tpu.memory_space<vmem>>, vector<1x32xf32>
    %c9_573 = arith.constant 9 : index
    %c0_574 = arith.constant 0 : index
    %1044 = vector.load %arg7[%c9_573, %c0_574] : memref<19x32xf32, #tpu.memory_space<vmem>>, vector<1x32xf32>
    %1045 = arith.mulf %1043, %1044 : vector<1x32xf32>
    %1046 = arith.addf %1032, %1045 : vector<1x32xf32>
    %1047 = arith.index_cast %974 : i32 to index
    %c2_575 = arith.constant 2 : index
    %1048 = memref.load %arg2[%1047, %c2_575] : memref<16x8xi32, #tpu.memory_space<smem>>
    %1049 = arith.index_cast %1048 : i32 to index
    %c0_576 = arith.constant 0 : index
    %1050 = vector.load %arg5[%1049, %c0_576] : memref<50x32xf32, #tpu.memory_space<vmem>>, vector<1x32xf32>
    %c10_577 = arith.constant 10 : index
    %c0_578 = arith.constant 0 : index
    %1051 = vector.load %arg7[%c10_577, %c0_578] : memref<19x32xf32, #tpu.memory_space<vmem>>, vector<1x32xf32>
    %1052 = arith.mulf %1050, %1051 : vector<1x32xf32>
    %1053 = arith.addf %1039, %1052 : vector<1x32xf32>
    %1054 = arith.index_cast %974 : i32 to index
    %c3_579 = arith.constant 3 : index
    %1055 = memref.load %arg2[%1054, %c3_579] : memref<16x8xi32, #tpu.memory_space<smem>>
    %1056 = arith.index_cast %1055 : i32 to index
    %c0_580 = arith.constant 0 : index
    %1057 = vector.load %arg5[%1056, %c0_580] : memref<50x32xf32, #tpu.memory_space<vmem>>, vector<1x32xf32>
    %c11_581 = arith.constant 11 : index
    %c0_582 = arith.constant 0 : index
    %1058 = vector.load %arg7[%c11_581, %c0_582] : memref<19x32xf32, #tpu.memory_space<vmem>>, vector<1x32xf32>
    %1059 = arith.mulf %1057, %1058 : vector<1x32xf32>
    %1060 = arith.addf %1046, %1059 : vector<1x32xf32>
    %1061 = arith.index_cast %974 : i32 to index
    %c4_583 = arith.constant 4 : index
    %1062 = memref.load %arg2[%1061, %c4_583] : memref<16x8xi32, #tpu.memory_space<smem>>
    %1063 = arith.index_cast %1062 : i32 to index
    %c0_584 = arith.constant 0 : index
    %1064 = vector.load %arg5[%1063, %c0_584] : memref<50x32xf32, #tpu.memory_space<vmem>>, vector<1x32xf32>
    %c12_585 = arith.constant 12 : index
    %c0_586 = arith.constant 0 : index
    %1065 = vector.load %arg7[%c12_585, %c0_586] : memref<19x32xf32, #tpu.memory_space<vmem>>, vector<1x32xf32>
    %1066 = arith.mulf %1064, %1065 : vector<1x32xf32>
    %1067 = arith.addf %1053, %1066 : vector<1x32xf32>
    %1068 = arith.index_cast %974 : i32 to index
    %c5_587 = arith.constant 5 : index
    %1069 = memref.load %arg2[%1068, %c5_587] : memref<16x8xi32, #tpu.memory_space<smem>>
    %1070 = arith.index_cast %1069 : i32 to index
    %c0_588 = arith.constant 0 : index
    %1071 = vector.load %arg5[%1070, %c0_588] : memref<50x32xf32, #tpu.memory_space<vmem>>, vector<1x32xf32>
    %c13_589 = arith.constant 13 : index
    %c0_590 = arith.constant 0 : index
    %1072 = vector.load %arg7[%c13_589, %c0_590] : memref<19x32xf32, #tpu.memory_space<vmem>>, vector<1x32xf32>
    %1073 = arith.mulf %1071, %1072 : vector<1x32xf32>
    %1074 = arith.addf %1060, %1073 : vector<1x32xf32>
    %1075 = arith.index_cast %974 : i32 to index
    %c6_591 = arith.constant 6 : index
    %1076 = memref.load %arg2[%1075, %c6_591] : memref<16x8xi32, #tpu.memory_space<smem>>
    %1077 = arith.index_cast %1076 : i32 to index
    %c0_592 = arith.constant 0 : index
    %1078 = vector.load %arg5[%1077, %c0_592] : memref<50x32xf32, #tpu.memory_space<vmem>>, vector<1x32xf32>
    %c14_593 = arith.constant 14 : index
    %c0_594 = arith.constant 0 : index
    %1079 = vector.load %arg7[%c14_593, %c0_594] : memref<19x32xf32, #tpu.memory_space<vmem>>, vector<1x32xf32>
    %1080 = arith.mulf %1078, %1079 : vector<1x32xf32>
    %1081 = arith.addf %1067, %1080 : vector<1x32xf32>
    %1082 = arith.index_cast %974 : i32 to index
    %c7_595 = arith.constant 7 : index
    %1083 = memref.load %arg2[%1082, %c7_595] : memref<16x8xi32, #tpu.memory_space<smem>>
    %1084 = arith.index_cast %1083 : i32 to index
    %c0_596 = arith.constant 0 : index
    %1085 = vector.load %arg5[%1084, %c0_596] : memref<50x32xf32, #tpu.memory_space<vmem>>, vector<1x32xf32>
    %c15_597 = arith.constant 15 : index
    %c0_598 = arith.constant 0 : index
    %1086 = vector.load %arg7[%c15_597, %c0_598] : memref<19x32xf32, #tpu.memory_space<vmem>>, vector<1x32xf32>
    %1087 = arith.mulf %1085, %1086 : vector<1x32xf32>
    %1088 = arith.addf %1074, %1087 : vector<1x32xf32>
    %1089 = arith.index_cast %974 : i32 to index
    %c0_599 = arith.constant 0 : index
    %1090 = memref.load %arg3[%1089, %c0_599] : memref<16x3xi32, #tpu.memory_space<smem>>
    %1091 = arith.index_cast %1090 : i32 to index
    %c0_600 = arith.constant 0 : index
    %1092 = vector.load %arg6[%1091, %c0_600] : memref<10x32xf32, #tpu.memory_space<vmem>>, vector<1x32xf32>
    %c16_601 = arith.constant 16 : index
    %c0_602 = arith.constant 0 : index
    %1093 = vector.load %arg7[%c16_601, %c0_602] : memref<19x32xf32, #tpu.memory_space<vmem>>, vector<1x32xf32>
    %1094 = arith.mulf %1092, %1093 : vector<1x32xf32>
    %1095 = arith.addf %1081, %1094 : vector<1x32xf32>
    %1096 = arith.index_cast %974 : i32 to index
    %c1_603 = arith.constant 1 : index
    %1097 = memref.load %arg3[%1096, %c1_603] : memref<16x3xi32, #tpu.memory_space<smem>>
    %1098 = arith.index_cast %1097 : i32 to index
    %c0_604 = arith.constant 0 : index
    %1099 = vector.load %arg6[%1098, %c0_604] : memref<10x32xf32, #tpu.memory_space<vmem>>, vector<1x32xf32>
    %c17_605 = arith.constant 17 : index
    %c0_606 = arith.constant 0 : index
    %1100 = vector.load %arg7[%c17_605, %c0_606] : memref<19x32xf32, #tpu.memory_space<vmem>>, vector<1x32xf32>
    %1101 = arith.mulf %1099, %1100 : vector<1x32xf32>
    %1102 = arith.addf %1088, %1101 : vector<1x32xf32>
    %1103 = arith.index_cast %974 : i32 to index
    %c2_607 = arith.constant 2 : index
    %1104 = memref.load %arg3[%1103, %c2_607] : memref<16x3xi32, #tpu.memory_space<smem>>
    %1105 = arith.index_cast %1104 : i32 to index
    %c0_608 = arith.constant 0 : index
    %1106 = vector.load %arg6[%1105, %c0_608] : memref<10x32xf32, #tpu.memory_space<vmem>>, vector<1x32xf32>
    %c18_609 = arith.constant 18 : index
    %c0_610 = arith.constant 0 : index
    %1107 = vector.load %arg7[%c18_609, %c0_610] : memref<19x32xf32, #tpu.memory_space<vmem>>, vector<1x32xf32>
    %1108 = arith.mulf %1106, %1107 : vector<1x32xf32>
    %1109 = arith.addf %1095, %1108 : vector<1x32xf32>
    %1110 = arith.addf %1109, %1102 : vector<1x32xf32>
    %1111 = arith.index_cast %c7_i32 : i32 to index
    %c0_611 = arith.constant 0 : index
    %1112 = vector.load %arg10[%1111, %c0_611] : memref<8x32xf32, #tpu.memory_space<vmem>>, vector<1x32xf32>
    tpu.vector_store %arg10[%1111, %c0_611], %1110 {strides = array<i32>} : memref<8x32xf32, #tpu.memory_space<vmem>>, vector<1x32xf32>,
    %c8_i32_612 = arith.constant 8 : i32
    %c0_613 = arith.constant 0 : index
    %c0_614 = arith.constant 0 : index
    %1113 = vector.load %arg10[%c0_613, %c0_614] : memref<8x32xf32, #tpu.memory_space<vmem>>, vector<8x32xf32>
    %cst_615 = arith.constant dense<0.000000e+00> : vector<8xf32>
    %1114 = vector.multi_reduction <add>, %1113, %cst_615 [1] : vector<8x32xf32> to vector<8xf32>
    %1115 = vector.shape_cast %1114 : vector<8xf32> to vector<8x1xf32>
    %c0_616 = arith.constant 0 : index
    %c0_617 = arith.constant 0 : index
    %1116 = memref.load %arg8[%c0_616, %c0_617] : memref<1x1xf32, #tpu.memory_space<smem>>
    %1117 = vector.broadcast %1116 : f32 to vector<8x1xf32>
    %1118 = arith.addf %1115, %1117 : vector<8x1xf32>
    %c0_618 = arith.constant 0 : index
    %c0_619 = arith.constant 0 : index
    %1119 = vector.load %arg9[%c0_618, %c0_619] : memref<8x1xf32, #tpu.memory_space<vmem>>, vector<8x1xf32>
    tpu.vector_store %arg9[%c0_618, %c0_619], %1118 {strides = array<i32>} : memref<8x1xf32, #tpu.memory_space<vmem>>, vector<8x1xf32>,
    return
  }
  func.func @transform_0(%arg0: i32, %arg1: memref<16x8xi32, #tpu.memory_space<smem>>, %arg2: memref<16x8xi32, #tpu.memory_space<smem>>, %arg3: memref<16x3xi32, #tpu.memory_space<smem>>) -> (i32, i32) {
    %c0_i32 = arith.constant 0 : i32
    %c0_i32_0 = arith.constant 0 : i32
    %c0_i32_1 = arith.constant 0 : i32
    return %c0_i32, %c0_i32_0 : i32, i32
  }
  func.func @transform_1(%arg0: i32, %arg1: memref<16x8xi32, #tpu.memory_space<smem>>, %arg2: memref<16x8xi32, #tpu.memory_space<smem>>, %arg3: memref<16x3xi32, #tpu.memory_space<smem>>) -> (i32, i32) {
    %c0_i32 = arith.constant 0 : i32
    %c0_i32_0 = arith.constant 0 : i32
    %c0_i32_1 = arith.constant 0 : i32
    return %c0_i32, %c0_i32_0 : i32, i32
  }
  func.func @transform_2(%arg0: i32, %arg1: memref<16x8xi32, #tpu.memory_space<smem>>, %arg2: memref<16x8xi32, #tpu.memory_space<smem>>, %arg3: memref<16x3xi32, #tpu.memory_space<smem>>) -> (i32, i32) {
    %c0_i32 = arith.constant 0 : i32
    %c0_i32_0 = arith.constant 0 : i32
    %c0_i32_1 = arith.constant 0 : i32
    return %c0_i32, %c0_i32_0 : i32, i32
  }
  func.func @transform_3(%arg0: i32, %arg1: memref<16x8xi32, #tpu.memory_space<smem>>, %arg2: memref<16x8xi32, #tpu.memory_space<smem>>, %arg3: memref<16x3xi32, #tpu.memory_space<smem>>) -> (i32, i32) {
    %c0_i32 = arith.constant 0 : i32
    %c0_i32_0 = arith.constant 0 : i32
    %c0_i32_1 = arith.constant 0 : i32
    return %c0_i32, %c0_i32_0 : i32, i32
  }
  func.func @transform_4(%arg0: i32, %arg1: memref<16x8xi32, #tpu.memory_space<smem>>, %arg2: memref<16x8xi32, #tpu.memory_space<smem>>, %arg3: memref<16x3xi32, #tpu.memory_space<smem>>) -> (i32, i32) {
    %c0_i32 = arith.constant 0 : i32
    %c0_i32_0 = arith.constant 0 : i32
    %c0_i32_1 = arith.constant 0 : i32
    return %c0_i32, %c0_i32_0 : i32, i32
  }
  func.func @transform_5(%arg0: i32, %arg1: memref<16x8xi32, #tpu.memory_space<smem>>, %arg2: memref<16x8xi32, #tpu.memory_space<smem>>, %arg3: memref<16x3xi32, #tpu.memory_space<smem>>) -> (i32, i32) {
    %c0_i32 = arith.constant 0 : i32
    %c0_i32_0 = arith.constant 0 : i32
    return %arg0, %c0_i32 : i32, i32
  }
}

</mosaic_0001>

<llo_original>
// kernel: tpu_custom_call.1
$region0: #{tpu_custom_call.1}
  #allocation0 [shape = 'u32[]', space=smem, size = 0x4, offset = 0x4, fixed_abs, tag = 'smem constant byte address 0x4 - core index']
  #allocation1 [shape = 'u32[144,128]{1,0:T(1,128)}', space=vmem, size = 0x12000, scoped, tag = 'internal scratch']
  #allocation2 [shape = 'f32[8,32]{1,0:T(8,128)}', space=vmem, size = 0x1000, scoped, tag = 'scratch operand']
  #allocation3 [shape = 's32[1]{0}', space=sflag, size = 0x4, scoped, tag = 'scoped memory for tpu_custom_call.1']
  #allocation4 [shape = 'u8[8192]{0}', space=smem, size = 0x2000, scoped, tag = 'prefetched SMEM operand 0']
  #allocation5 [shape = 'u8[8192]{0}', space=smem, size = 0x2000, scoped, tag = 'prefetched SMEM operand 1']
  #allocation6 [shape = 'u8[8192]{0}', space=smem, size = 0x2000, scoped, tag = 'prefetched SMEM operand 2']
  #allocation7 [shape = 'f32[1,1]{1,0:T(1,128)S(6)}', space=smem, size = 0x200, scoped, tag = 'scoped memory for tpu_custom_call.1']
  %s0 = inlined_call_operand.vmem [shape: s32[16,8], index: 0, kind: input, shape index: {}]
  %s1 = inlined_call_operand.vmem [shape: s32[16,8], index: 1, kind: input, shape index: {}]
  %s2 = inlined_call_operand.vmem [shape: s32[16,3], index: 2, kind: input, shape index: {}]
  %s3 = inlined_call_operand.vmem [shape: f32[50,32], index: 3, kind: input, shape index: {}]
  %s4 = inlined_call_operand.vmem [shape: f32[50,32], index: 4, kind: input, shape index: {}]
  %s5 = inlined_call_operand.vmem [shape: f32[10,32], index: 5, kind: input, shape index: {}]
  %s6 = inlined_call_operand.vmem [shape: f32[19,32], index: 6, kind: input, shape index: {}]
  %s7 = inlined_call_operand.<no memory space> [shape: f32[1,1], index: 7, kind: input, shape index: {}]
  %s8 = inlined_call_operand.vmem [shape: f32[16,1], index: 8, kind: output, shape index: {}]
  %s9 = sld [smem:[#allocation0]]
  $region53: #{tpu_custom_call.1} parent=0
    _
  %s11 = ssub.s32 1, %s9
  %s12 = scalar_select 0, %s11, %s9
  %s13 = sshll.u32 %s0, 4
  %s14 = int_to_ptr.vmem [resolvable:$true] %s13
  %16 = dma.vmem_to_smem %s14, 256, [#allocation4], [#allocation3]
  %s17 = sshll.u32 %s1, 4
  %s18 = int_to_ptr.vmem [resolvable:$true] %s17
  %20 = dma.vmem_to_smem %s18, 256, [#allocation5], [#allocation3]
  %s21 = sshll.u32 %s2, 4
  %s22 = int_to_ptr.vmem [resolvable:$true] %s21
  %24 = dma.vmem_to_smem %s22, 256, [#allocation6], [#allocation3]
  %25 = sst [smem:[#allocation7]] %s7
  %26 = dma.done [#allocation3], 768
  %27 = sfence
  loop: start=0, step=1, limit=4
  $region2: #{tpu_custom_call.1} parent=0 // loop_pre_header
    _
  $region3: #{tpu_custom_call.1} parent=0 // loop_header
    %s29 = sphi 0, %s33
    %p30 = scmp.ge.s32.totalorder %s29, 4
    %s37 = sphi 0, %s37
    %s39 = sphi 0, %s37
    %s40 = sphi 0, %s39
    %s54 = sphi 0, %s40
    %s58 = sphi 0, %s58
    %s60 = sphi 0, %s58
    %s61 = sphi 0, %s60
    %s75 = sphi 0, %s61
    %s79 = sphi 0, %s79
    %s81 = sphi 0, %s79
    %s82 = sphi 0, %s81
    %s96 = sphi 0, %s82
    %s100 = sphi 0, %s100
    %s102 = sphi 0, %s100
    %s103 = sphi 0, %s102
    %s117 = sphi 0, %s103
    %s121 = sphi 0, %s121
    %s123 = sphi 0, %s121
    %s124 = sphi 0, %s123
    %s138 = sphi 0, %s124
    %s144 = sphi 0, %s146
    %s147 = sphi 0, %s144
    %s148 = sphi 0, %s147
    %s164 = sphi 0, %s148
  $region4: #{tpu_custom_call.1} parent=0 // loop_header_branch
    %32 = sbr.rel (%p30) target = $region8
  $region5: #{tpu_custom_call.1} parent=0 // loop_body
    %s34 = ssub.s32 %s29, 1
    %s35 = ssub.s32 %s29, 2
    %s36 = sadd.s32 %s29, 1
    %s38 = sadd.s32 %s37, 1
    %p41 = scmp.eq.s32.totalorder %s29, 1
    %p42 = scmp.ne.s32.totalorder %s37, %s39
    %p43 = scmp.eq.s32.totalorder %s29, 0
    %p44 = por %p42, %p43
    %p45 = scmp.ne.s32.totalorder %s37, %s39
    %p46 = scmp.eq.s32.totalorder %s34, 1
    %p47 = por %p45, %p46
    %p48 = scmp.ne.s32.totalorder %s39, %s40
    %p49 = scmp.eq.s32.totalorder %s34, 0
    %p50 = por %p48, %p49
    %p51 = scmp.ne.s32.totalorder %s39, %s40
    %p52 = scmp.eq.s32.totalorder %s35, 1
    %p53 = por %p51, %p52
    %p55 = scmp.ne.s32.totalorder %s40, %s54
    %p56 = scmp.eq.s32.totalorder %s35, 0
    %p57 = por %p55, %p56
    %s59 = sadd.s32 %s58, 1
    %p62 = scmp.eq.s32.totalorder %s29, 1
    %p63 = scmp.ne.s32.totalorder %s58, %s60
    %p64 = scmp.eq.s32.totalorder %s29, 0
    %p65 = por %p63, %p64
    %p66 = scmp.ne.s32.totalorder %s58, %s60
    %p67 = scmp.eq.s32.totalorder %s34, 1
    %p68 = por %p66, %p67
    %p69 = scmp.ne.s32.totalorder %s60, %s61
    %p70 = scmp.eq.s32.totalorder %s34, 0
    %p71 = por %p69, %p70
    %p72 = scmp.ne.s32.totalorder %s60, %s61
    %p73 = scmp.eq.s32.totalorder %s35, 1
    %p74 = por %p72, %p73
    %p76 = scmp.ne.s32.totalorder %s61, %s75
    %p77 = scmp.eq.s32.totalorder %s35, 0
    %p78 = por %p76, %p77
    %s80 = sadd.s32 %s79, 1
    %p83 = scmp.eq.s32.totalorder %s29, 1
    %p84 = scmp.ne.s32.totalorder %s79, %s81
    %p85 = scmp.eq.s32.totalorder %s29, 0
    %p86 = por %p84, %p85
    %p87 = scmp.ne.s32.totalorder %s79, %s81
    %p88 = scmp.eq.s32.totalorder %s34, 1
    %p89 = por %p87, %p88
    %p90 = scmp.ne.s32.totalorder %s81, %s82
    %p91 = scmp.eq.s32.totalorder %s34, 0
    %p92 = por %p90, %p91
    %p93 = scmp.ne.s32.totalorder %s81, %s82
    %p94 = scmp.eq.s32.totalorder %s35, 1
    %p95 = por %p93, %p94
    %p97 = scmp.ne.s32.totalorder %s82, %s96
    %p98 = scmp.eq.s32.totalorder %s35, 0
    %p99 = por %p97, %p98
    %s101 = sadd.s32 %s100, 1
    %p104 = scmp.eq.s32.totalorder %s29, 1
    %p105 = scmp.ne.s32.totalorder %s100, %s102
    %p106 = scmp.eq.s32.totalorder %s29, 0
    %p107 = por %p105, %p106
    %p108 = scmp.ne.s32.totalorder %s100, %s102
    %p109 = scmp.eq.s32.totalorder %s34, 1
    %p110 = por %p108, %p109
    %p111 = scmp.ne.s32.totalorder %s102, %s103
    %p112 = scmp.eq.s32.totalorder %s34, 0
    %p113 = por %p111, %p112
    %p114 = scmp.ne.s32.totalorder %s102, %s103
    %p115 = scmp.eq.s32.totalorder %s35, 1
    %p116 = por %p114, %p115
    %p118 = scmp.ne.s32.totalorder %s103, %s117
    %p119 = scmp.eq.s32.totalorder %s35, 0
    %p120 = por %p118, %p119
    %s122 = sadd.s32 %s121, 1
    %p125 = scmp.eq.s32.totalorder %s29, 1
    %p126 = scmp.ne.s32.totalorder %s121, %s123
    %p127 = scmp.eq.s32.totalorder %s29, 0
    %p128 = por %p126, %p127
    %p129 = scmp.ne.s32.totalorder %s121, %s123
    %p130 = scmp.eq.s32.totalorder %s34, 1
    %p131 = por %p129, %p130
    %p132 = scmp.ne.s32.totalorder %s123, %s124
    %p133 = scmp.eq.s32.totalorder %s34, 0
    %p134 = por %p132, %p133
    %p135 = scmp.ne.s32.totalorder %s123, %s124
    %p136 = scmp.eq.s32.totalorder %s35, 1
    %p137 = por %p135, %p136
    %p139 = scmp.ne.s32.totalorder %s124, %s138
    %p140 = scmp.eq.s32.totalorder %s35, 0
    %p141 = por %p139, %p140
    %s142 = ssub.s32 %s29, %s36
    %p143 = scmp.eq.s32.totalorder %s142, 0
    %s145 = sadd.s32 %s144, 1
    %s146 = scalar_select %p143, %s144, %s145
    %p149 = pneg %p143
    %p150 = scmp.eq.s32.totalorder %s29, 1
    %p151 = por %p149, %p150
    %p152 = scmp.ne.s32.totalorder %s144, %s147
    %p153 = scmp.eq.s32.totalorder %s29, 0
    %p154 = por %p152, %p153
    %p155 = scmp.ne.s32.totalorder %s144, %s147
    %p156 = scmp.eq.s32.totalorder %s34, 1
    %p157 = por %p155, %p156
    %p158 = scmp.ne.s32.totalorder %s147, %s148
    %p159 = scmp.eq.s32.totalorder %s34, 0
    %p160 = por %p158, %p159
    %p161 = scmp.ne.s32.totalorder %s147, %s148
    %p162 = scmp.eq.s32.totalorder %s35, 1
    %p163 = por %p161, %p162
    %p165 = scmp.ne.s32.totalorder %s148, %s164
    %p166 = scmp.eq.s32.totalorder %s35, 0
    %p167 = por %p165, %p166
    %p168 = scmp.le.s32.totalorder 1, %s29
    %p169 = scmp.lt.s32.totalorder %s29, 3
    %p170 = pnand %p168, %p169
    %p171 = pneg %p170
    // Predicated region
    $region9: #{tpu_custom_call.1} parent=5 // pred_check
      _
    $region10: #{tpu_custom_call.1} parent=5 // pred_check_branch
      %173 = sbr.rel (%p170) target = $region12
    $region11: #{tpu_custom_call.1} parent=5 // pred_region
      %s174 = ssub.s32 %s29, 1
      // Predicated region
      $region13: #{tpu_custom_call.1} parent=11 // pred_check
        %p175 = pneg %p50
      $region14: #{tpu_custom_call.1} parent=11 // pred_check_branch
        %177 = sbr.rel (%p175) target = $region16
      $region15: #{tpu_custom_call.1} parent=11 // pred_region
        _
      $region16: #{tpu_custom_call.1} parent=11 // pred_fallthru
        _
      // Predicated region
      $region17: #{tpu_custom_call.1} parent=11 // pred_check
        %p178 = pneg %p71
      $region18: #{tpu_custom_call.1} parent=11 // pred_check_branch
        %180 = sbr.rel (%p178) target = $region20
      $region19: #{tpu_custom_call.1} parent=11 // pred_region
        _
      $region20: #{tpu_custom_call.1} parent=11 // pred_fallthru
        _
      // Predicated region
      $region21: #{tpu_custom_call.1} parent=11 // pred_check
        %p181 = pneg %p92
      $region22: #{tpu_custom_call.1} parent=11 // pred_check_branch
        %183 = sbr.rel (%p181) target = $region24
      $region23: #{tpu_custom_call.1} parent=11 // pred_region
        _
      $region24: #{tpu_custom_call.1} parent=11 // pred_fallthru
        _
      // Predicated region
      $region25: #{tpu_custom_call.1} parent=11 // pred_check
        %p184 = pneg %p113
      $region26: #{tpu_custom_call.1} parent=11 // pred_check_branch
        %186 = sbr.rel (%p184) target = $region28
      $region27: #{tpu_custom_call.1} parent=11 // pred_region
        _
      $region28: #{tpu_custom_call.1} parent=11 // pred_fallthru
        _
      // Predicated region
      $region29: #{tpu_custom_call.1} parent=11 // pred_check
        %p187 = pneg %p134
      $region30: #{tpu_custom_call.1} parent=11 // pred_check_branch
        %189 = sbr.rel (%p187) target = $region32
      $region31: #{tpu_custom_call.1} parent=11 // pred_region
        _
      $region32: #{tpu_custom_call.1} parent=11 // pred_fallthru
        _
    $region12: #{tpu_custom_call.1} parent=5 // pred_fallthru
      _
    %p190 = scmp.lt.s32.totalorder %s29, 2
    // Predicated region
    $region33: #{tpu_custom_call.1} parent=5 // pred_check
      %p191 = pneg %p190
    $region34: #{tpu_custom_call.1} parent=5 // pred_check_branch
      %193 = sbr.rel (%p191) target = $region36
    $region35: #{tpu_custom_call.1} parent=5 // pred_region
      _
    $region36: #{tpu_custom_call.1} parent=5 // pred_fallthru
      _
    %p194 = scmp.le.s32.totalorder 1, %s29
    %p195 = scmp.lt.s32.totalorder %s29, 3
    %p196 = pnand %p194, %p195
    %p197 = pneg %p196
    // Predicated region
    $region37: #{tpu_custom_call.1} parent=5 // pred_check
      _
    $region38: #{tpu_custom_call.1} parent=5 // pred_check_branch
      %199 = sbr.rel (%p196) target = $region40
    $region39: #{tpu_custom_call.1} parent=5 // pred_region
      %s200 = ssub.s32 %s29, 1
      %p201 = pneg %p50
      %p202 = pneg %p47
      %p203 = pneg %p71
      %p204 = pneg %p68
      %p205 = pneg %p92
      %p206 = pneg %p89
      %p207 = pneg %p113
      %p208 = pneg %p110
      %p209 = pneg %p134
      %p210 = pneg %p131
      %p211 = pneg %p160
      %p212 = pneg %p157
      %p213 = scmp.lt.s32.totalorder %s34, 1
      %s214 = scalar_select %p213, %s34, 1
      %s215 = smul.addr %s214, 8
      %s216 = scalar_lea.vmem %s8, %s215
      %p217 = scmp.lt.s32.totalorder %s34, 1
      %s218 = scalar_select %p217, %s34, 1
      %s219 = smul.addr %s218, 8
      %s220 = scalar_lea.vmem %s8, %s219
      %s221 = smul.u32 %s34, 8
      %s222 = smul.u32 %s221, 128
      %s223 = sld [smem:[#allocation4 + %s222]]
      %s224 = scalar_lea.vmem %s3, %s223
      %v225 = vld [vmem:[%s224] sm:$0x1]
      %v226 = vld [vmem:[%s6] sm:$0x1]
      %v227 = vmul.f32 %v225, %v226
      %v228 = vadd.f32 %v227, 0.0
      %s229 = sadd.s32 %s222, 1
      %s230 = sld [smem:[#allocation4 + %s229]]
      %s231 = scalar_lea.vmem %s3, %s230
      %v232 = vld [vmem:[%s231] sm:$0x1]
      %v233 = vld [vmem:[%s6 + $0x1] sm:$0x1]
      %v234 = vmul.f32 %v232, %v233
      %v235 = vadd.f32 %v234, 0.0
      %s236 = sadd.s32 %s222, 2
      %s237 = sld [smem:[#allocation4 + %s236]]
      %s238 = scalar_lea.vmem %s3, %s237
      %v239 = vld [vmem:[%s238] sm:$0x1]
      %v240 = vld [vmem:[%s6 + $0x2] sm:$0x1]
      %v241 = vmul.f32 %v239, %v240
      %v242 = vadd.f32 %v228, %v241
      %s243 = sadd.s32 %s222, 3
      %s244 = sld [smem:[#allocation4 + %s243]]
      %s245 = scalar_lea.vmem %s3, %s244
      %v246 = vld [vmem:[%s245] sm:$0x1]
      %v247 = vld [vmem:[%s6 + $0x3] sm:$0x1]
      %v248 = vmul.f32 %v246, %v247
      %v249 = vadd.f32 %v235, %v248
      %s250 = sadd.s32 %s222, 4
      %s251 = sld [smem:[#allocation4 + %s250]]
      %s252 = scalar_lea.vmem %s3, %s251
      %v253 = vld [vmem:[%s252] sm:$0x1]
      %v254 = vld [vmem:[%s6 + $0x4] sm:$0x1]
      %v255 = vmul.f32 %v253, %v254
      %v256 = vadd.f32 %v242, %v255
      %s257 = sadd.s32 %s222, 5
      %s258 = sld [smem:[#allocation4 + %s257]]
      %s259 = scalar_lea.vmem %s3, %s258
      %v260 = vld [vmem:[%s259] sm:$0x1]
      %v261 = vld [vmem:[%s6 + $0x5] sm:$0x1]
      %v262 = vmul.f32 %v260, %v261
      %v263 = vadd.f32 %v249, %v262
      %s264 = sadd.s32 %s222, 6
      %s265 = sld [smem:[#allocation4 + %s264]]
      %s266 = scalar_lea.vmem %s3, %s265
      %v267 = vld [vmem:[%s266] sm:$0x1]
      %v268 = vld [vmem:[%s6 + $0x6] sm:$0x1]
      %v269 = vmul.f32 %v267, %v268
      %v270 = vadd.f32 %v256, %v269
      %s271 = sadd.s32 %s222, 7
      %s272 = sld [smem:[#allocation4 + %s271]]
      %s273 = scalar_lea.vmem %s3, %s272
      %v274 = vld [vmem:[%s273] sm:$0x1]
      %v275 = vld [vmem:[%s6 + $0x7] sm:$0x1]
      %v276 = vmul.f32 %v274, %v275
      %v277 = vadd.f32 %v263, %v276
      %s278 = sld [smem:[#allocation5 + %s222]]
      %s279 = scalar_lea.vmem %s4, %s278
      %v280 = vld [vmem:[%s279] sm:$0x1]
      %v281 = vld [vmem:[%s6 + $0x8] sm:$0x1]
      %v282 = vmul.f32 %v280, %v281
      %v283 = vadd.f32 %v270, %v282
      %s284 = sld [smem:[#allocation5 + %s229]]
      %s285 = scalar_lea.vmem %s4, %s284
      %v286 = vld [vmem:[%s285] sm:$0x1]
      %v287 = vld [vmem:[%s6 + $0x9] sm:$0x1]
      %v288 = vmul.f32 %v286, %v287
      %v289 = vadd.f32 %v277, %v288
      %s290 = sld [smem:[#allocation5 + %s236]]
      %s291 = scalar_lea.vmem %s4, %s290
      %v292 = vld [vmem:[%s291] sm:$0x1]
      %v293 = vld [vmem:[%s6 + $0xa] sm:$0x1]
      %v294 = vmul.f32 %v292, %v293
      %v295 = vadd.f32 %v283, %v294
      %s296 = sld [smem:[#allocation5 + %s243]]
      %s297 = scalar_lea.vmem %s4, %s296
      %v298 = vld [vmem:[%s297] sm:$0x1]
      %v299 = vld [vmem:[%s6 + $0xb] sm:$0x1]
      %v300 = vmul.f32 %v298, %v299
      %v301 = vadd.f32 %v289, %v300
      %s302 = sld [smem:[#allocation5 + %s250]]
      %s303 = scalar_lea.vmem %s4, %s302
      %v304 = vld [vmem:[%s303] sm:$0x1]
      %v305 = vld [vmem:[%s6 + $0xc] sm:$0x1]
      %v306 = vmul.f32 %v304, %v305
      %v307 = vadd.f32 %v295, %v306
      %s308 = sld [smem:[#allocation5 + %s257]]
      %s309 = scalar_lea.vmem %s4, %s308
      %v310 = vld [vmem:[%s309] sm:$0x1]
      %v311 = vld [vmem:[%s6 + $0xd] sm:$0x1]
      %v312 = vmul.f32 %v310, %v311
      %v313 = vadd.f32 %v301, %v312
      %s314 = sld [smem:[#allocation5 + %s264]]
      %s315 = scalar_lea.vmem %s4, %s314
      %v316 = vld [vmem:[%s315] sm:$0x1]
      %v317 = vld [vmem:[%s6 + $0xe] sm:$0x1]
      %v318 = vmul.f32 %v316, %v317
      %v319 = vadd.f32 %v307, %v318
      %s320 = sld [smem:[#allocation5 + %s271]]
      %s321 = scalar_lea.vmem %s4, %s320
      %v322 = vld [vmem:[%s321] sm:$0x1]
      %v323 = vld [vmem:[%s6 + $0xf] sm:$0x1]
      %v324 = vmul.f32 %v322, %v323
      %v325 = vadd.f32 %v313, %v324
      %s326 = sld [smem:[#allocation6 + %s222]]
      %s327 = scalar_lea.vmem %s5, %s326
      %v328 = vld [vmem:[%s327] sm:$0x1]
      %v329 = vld [vmem:[%s6 + $0x10] sm:$0x1]
      %v330 = vmul.f32 %v328, %v329
      %v331 = vadd.f32 %v319, %v330
      %s332 = sld [smem:[#allocation6 + %s229]]
      %s333 = scalar_lea.vmem %s5, %s332
      %v334 = vld [vmem:[%s333] sm:$0x1]
      %v335 = vld [vmem:[%s6 + $0x11] sm:$0x1]
      %v336 = vmul.f32 %v334, %v335
      %v337 = vadd.f32 %v325, %v336
      %s338 = sld [smem:[#allocation6 + %s236]]
      %s339 = scalar_lea.vmem %s5, %s338
      %v340 = vld [vmem:[%s339] sm:$0x1]
      %v341 = vld [vmem:[%s6 + $0x12] sm:$0x1]
      %v342 = vmul.f32 %v340, %v341
      %v343 = vadd.f32 %v331, %v342
      %v344 = vadd.f32 %v343, %v337
      %vm345 = vcmask 253952
      %346 = vst.msk [vmem:[#allocation2] sm:$0x1] %vm345, %v344
      %s347 = sadd.s32 %s221, 1
      %s348 = smul.u32 %s347, 128
      %s349 = sld [smem:[#allocation4 + %s348]]
      %s350 = scalar_lea.vmem %s3, %s349
      %v351 = vld [vmem:[%s350] sm:$0x1]
      %v352 = vld [vmem:[%s6] sm:$0x1]
      %v353 = vmul.f32 %v351, %v352
      %v354 = vadd.f32 %v353, 0.0
      %s355 = sadd.s32 %s348, 1
      %s356 = sld [smem:[#allocation4 + %s355]]
      %s357 = scalar_lea.vmem %s3, %s356
      %v358 = vld [vmem:[%s357] sm:$0x1]
      %v359 = vld [vmem:[%s6 + $0x1] sm:$0x1]
      %v360 = vmul.f32 %v358, %v359
      %v361 = vadd.f32 %v360, 0.0
      %s362 = sadd.s32 %s348, 2
      %s363 = sld [smem:[#allocation4 + %s362]]
      %s364 = scalar_lea.vmem %s3, %s363
      %v365 = vld [vmem:[%s364] sm:$0x1]
      %v366 = vld [vmem:[%s6 + $0x2] sm:$0x1]
      %v367 = vmul.f32 %v365, %v366
      %v368 = vadd.f32 %v354, %v367
      %s369 = sadd.s32 %s348, 3
      %s370 = sld [smem:[#allocation4 + %s369]]
      %s371 = scalar_lea.vmem %s3, %s370
      %v372 = vld [vmem:[%s371] sm:$0x1]
      %v373 = vld [vmem:[%s6 + $0x3] sm:$0x1]
      %v374 = vmul.f32 %v372, %v373
      %v375 = vadd.f32 %v361, %v374
      %s376 = sadd.s32 %s348, 4
      %s377 = sld [smem:[#allocation4 + %s376]]
      %s378 = scalar_lea.vmem %s3, %s377
      %v379 = vld [vmem:[%s378] sm:$0x1]
      %v380 = vld [vmem:[%s6 + $0x4] sm:$0x1]
      %v381 = vmul.f32 %v379, %v380
      %v382 = vadd.f32 %v368, %v381
      %s383 = sadd.s32 %s348, 5
      %s384 = sld [smem:[#allocation4 + %s383]]
      %s385 = scalar_lea.vmem %s3, %s384
      %v386 = vld [vmem:[%s385] sm:$0x1]
      %v387 = vld [vmem:[%s6 + $0x5] sm:$0x1]
      %v388 = vmul.f32 %v386, %v387
      %v389 = vadd.f32 %v375, %v388
      %s390 = sadd.s32 %s348, 6
      %s391 = sld [smem:[#allocation4 + %s390]]
      %s392 = scalar_lea.vmem %s3, %s391
      %v393 = vld [vmem:[%s392] sm:$0x1]
      %v394 = vld [vmem:[%s6 + $0x6] sm:$0x1]
      %v395 = vmul.f32 %v393, %v394
      %v396 = vadd.f32 %v382, %v395
      %s397 = sadd.s32 %s348, 7
      %s398 = sld [smem:[#allocation4 + %s397]]
      %s399 = scalar_lea.vmem %s3, %s398
      %v400 = vld [vmem:[%s399] sm:$0x1]
      %v401 = vld [vmem:[%s6 + $0x7] sm:$0x1]
      %v402 = vmul.f32 %v400, %v401
      %v403 = vadd.f32 %v389, %v402
      %s404 = sld [smem:[#allocation5 + %s348]]
      %s405 = scalar_lea.vmem %s4, %s404
      %v406 = vld [vmem:[%s405] sm:$0x1]
      %v407 = vld [vmem:[%s6 + $0x8] sm:$0x1]
      %v408 = vmul.f32 %v406, %v407
      %v409 = vadd.f32 %v396, %v408
      %s410 = sld [smem:[#allocation5 + %s355]]
      %s411 = scalar_lea.vmem %s4, %s410
      %v412 = vld [vmem:[%s411] sm:$0x1]
      %v413 = vld [vmem:[%s6 + $0x9] sm:$0x1]
      %v414 = vmul.f32 %v412, %v413
      %v415 = vadd.f32 %v403, %v414
      %s416 = sld [smem:[#allocation5 + %s362]]
      %s417 = scalar_lea.vmem %s4, %s416
      %v418 = vld [vmem:[%s417] sm:$0x1]
      %v419 = vld [vmem:[%s6 + $0xa] sm:$0x1]
      %v420 = vmul.f32 %v418, %v419
      %v421 = vadd.f32 %v409, %v420
      %s422 = sld [smem:[#allocation5 + %s369]]
      %s423 = scalar_lea.vmem %s4, %s422
      %v424 = vld [vmem:[%s423] sm:$0x1]
      %v425 = vld [vmem:[%s6 + $0xb] sm:$0x1]
      %v426 = vmul.f32 %v424, %v425
      %v427 = vadd.f32 %v415, %v426
      %s428 = sld [smem:[#allocation5 + %s376]]
      %s429 = scalar_lea.vmem %s4, %s428
      %v430 = vld [vmem:[%s429] sm:$0x1]
      %v431 = vld [vmem:[%s6 + $0xc] sm:$0x1]
      %v432 = vmul.f32 %v430, %v431
      %v433 = vadd.f32 %v421, %v432
      %s434 = sld [smem:[#allocation5 + %s383]]
      %s435 = scalar_lea.vmem %s4, %s434
      %v436 = vld [vmem:[%s435] sm:$0x1]
      %v437 = vld [vmem:[%s6 + $0xd] sm:$0x1]
      %v438 = vmul.f32 %v436, %v437
      %v439 = vadd.f32 %v427, %v438
      %s440 = sld [smem:[#allocation5 + %s390]]
      %s441 = scalar_lea.vmem %s4, %s440
      %v442 = vld [vmem:[%s441] sm:$0x1]
      %v443 = vld [vmem:[%s6 + $0xe] sm:$0x1]
      %v444 = vmul.f32 %v442, %v443
      %v445 = vadd.f32 %v433, %v444
      %s446 = sld [smem:[#allocation5 + %s397]]
      %s447 = scalar_lea.vmem %s4, %s446
      %v448 = vld [vmem:[%s447] sm:$0x1]
      %v449 = vld [vmem:[%s6 + $0xf] sm:$0x1]
      %v450 = vmul.f32 %v448, %v449
      %v451 = vadd.f32 %v439, %v450
      %s452 = sld [smem:[#allocation6 + %s348]]
      %s453 = scalar_lea.vmem %s5, %s452
      %v454 = vld [vmem:[%s453] sm:$0x1]
      %v455 = vld [vmem:[%s6 + $0x10] sm:$0x1]
      %v456 = vmul.f32 %v454, %v455
      %v457 = vadd.f32 %v445, %v456
      %s458 = sld [smem:[#allocation6 + %s355]]
      %s459 = scalar_lea.vmem %s5, %s458
      %v460 = vld [vmem:[%s459] sm:$0x1]
      %v461 = vld [vmem:[%s6 + $0x11] sm:$0x1]
      %v462 = vmul.f32 %v460, %v461
      %v463 = vadd.f32 %v451, %v462
      %s464 = sld [smem:[#allocation6 + %s362]]
      %s465 = scalar_lea.vmem %s5, %s464
      %v466 = vld [vmem:[%s465] sm:$0x1]
      %v467 = vld [vmem:[%s6 + $0x12] sm:$0x1]
      %v468 = vmul.f32 %v466, %v467
      %v469 = vadd.f32 %v457, %v468
      %v470 = vadd.f32 %v469, %v463
      %471 = vst.msk [vmem:[#allocation2 + $0x1] sm:$0x1] %vm345, %v470
      %s472 = sadd.s32 %s221, 2
      %s473 = smul.u32 %s472, 128
      %s474 = sld [smem:[#allocation4 + %s473]]
      %s475 = scalar_lea.vmem %s3, %s474
      %v476 = vld [vmem:[%s475] sm:$0x1]
      %v477 = vld [vmem:[%s6] sm:$0x1]
      %v478 = vmul.f32 %v476, %v477
      %v479 = vadd.f32 %v478, 0.0
      %s480 = sadd.s32 %s473, 1
      %s481 = sld [smem:[#allocation4 + %s480]]
      %s482 = scalar_lea.vmem %s3, %s481
      %v483 = vld [vmem:[%s482] sm:$0x1]
      %v484 = vld [vmem:[%s6 + $0x1] sm:$0x1]
      %v485 = vmul.f32 %v483, %v484
      %v486 = vadd.f32 %v485, 0.0
      %s487 = sadd.s32 %s473, 2
      %s488 = sld [smem:[#allocation4 + %s487]]
      %s489 = scalar_lea.vmem %s3, %s488
      %v490 = vld [vmem:[%s489] sm:$0x1]
      %v491 = vld [vmem:[%s6 + $0x2] sm:$0x1]
      %v492 = vmul.f32 %v490, %v491
      %v493 = vadd.f32 %v479, %v492
      %s494 = sadd.s32 %s473, 3
      %s495 = sld [smem:[#allocation4 + %s494]]
      %s496 = scalar_lea.vmem %s3, %s495
      %v497 = vld [vmem:[%s496] sm:$0x1]
      %v498 = vld [vmem:[%s6 + $0x3] sm:$0x1]
      %v499 = vmul.f32 %v497, %v498
      %v500 = vadd.f32 %v486, %v499
      %s501 = sadd.s32 %s473, 4
      %s502 = sld [smem:[#allocation4 + %s501]]
      %s503 = scalar_lea.vmem %s3, %s502
      %v504 = vld [vmem:[%s503] sm:$0x1]
      %v505 = vld [vmem:[%s6 + $0x4] sm:$0x1]
      %v506 = vmul.f32 %v504, %v505
      %v507 = vadd.f32 %v493, %v506
      %s508 = sadd.s32 %s473, 5
      %s509 = sld [smem:[#allocation4 + %s508]]
      %s510 = scalar_lea.vmem %s3, %s509
      %v511 = vld [vmem:[%s510] sm:$0x1]
      %v512 = vld [vmem:[%s6 + $0x5] sm:$0x1]
      %v513 = vmul.f32 %v511, %v512
      %v514 = vadd.f32 %v500, %v513
      %s515 = sadd.s32 %s473, 6
      %s516 = sld [smem:[#allocation4 + %s515]]
      %s517 = scalar_lea.vmem %s3, %s516
      %v518 = vld [vmem:[%s517] sm:$0x1]
      %v519 = vld [vmem:[%s6 + $0x6] sm:$0x1]
      %v520 = vmul.f32 %v518, %v519
      %v521 = vadd.f32 %v507, %v520
      %s522 = sadd.s32 %s473, 7
      %s523 = sld [smem:[#allocation4 + %s522]]
      %s524 = scalar_lea.vmem %s3, %s523
      %v525 = vld [vmem:[%s524] sm:$0x1]
      %v526 = vld [vmem:[%s6 + $0x7] sm:$0x1]
      %v527 = vmul.f32 %v525, %v526
      %v528 = vadd.f32 %v514, %v527
      %s529 = sld [smem:[#allocation5 + %s473]]
      %s530 = scalar_lea.vmem %s4, %s529
      %v531 = vld [vmem:[%s530] sm:$0x1]
      %v532 = vld [vmem:[%s6 + $0x8] sm:$0x1]
      %v533 = vmul.f32 %v531, %v532
      %v534 = vadd.f32 %v521, %v533
      %s535 = sld [smem:[#allocation5 + %s480]]
      %s536 = scalar_lea.vmem %s4, %s535
      %v537 = vld [vmem:[%s536] sm:$0x1]
      %v538 = vld [vmem:[%s6 + $0x9] sm:$0x1]
      %v539 = vmul.f32 %v537, %v538
      %v540 = vadd.f32 %v528, %v539
      %s541 = sld [smem:[#allocation5 + %s487]]
      %s542 = scalar_lea.vmem %s4, %s541
      %v543 = vld [vmem:[%s542] sm:$0x1]
      %v544 = vld [vmem:[%s6 + $0xa] sm:$0x1]
      %v545 = vmul.f32 %v543, %v544
      %v546 = vadd.f32 %v534, %v545
      %s547 = sld [smem:[#allocation5 + %s494]]
      %s548 = scalar_lea.vmem %s4, %s547
      %v549 = vld [vmem:[%s548] sm:$0x1]
      %v550 = vld [vmem:[%s6 + $0xb] sm:$0x1]
      %v551 = vmul.f32 %v549, %v550
      %v552 = vadd.f32 %v540, %v551
      %s553 = sld [smem:[#allocation5 + %s501]]
      %s554 = scalar_lea.vmem %s4, %s553
      %v555 = vld [vmem:[%s554] sm:$0x1]
      %v556 = vld [vmem:[%s6 + $0xc] sm:$0x1]
      %v557 = vmul.f32 %v555, %v556
      %v558 = vadd.f32 %v546, %v557
      %s559 = sld [smem:[#allocation5 + %s508]]
      %s560 = scalar_lea.vmem %s4, %s559
      %v561 = vld [vmem:[%s560] sm:$0x1]
      %v562 = vld [vmem:[%s6 + $0xd] sm:$0x1]
      %v563 = vmul.f32 %v561, %v562
      %v564 = vadd.f32 %v552, %v563
      %s565 = sld [smem:[#allocation5 + %s515]]
      %s566 = scalar_lea.vmem %s4, %s565
      %v567 = vld [vmem:[%s566] sm:$0x1]
      %v568 = vld [vmem:[%s6 + $0xe] sm:$0x1]
      %v569 = vmul.f32 %v567, %v568
      %v570 = vadd.f32 %v558, %v569
      %s571 = sld [smem:[#allocation5 + %s522]]
      %s572 = scalar_lea.vmem %s4, %s571
      %v573 = vld [vmem:[%s572] sm:$0x1]
      %v574 = vld [vmem:[%s6 + $0xf] sm:$0x1]
      %v575 = vmul.f32 %v573, %v574
      %v576 = vadd.f32 %v564, %v575
      %s577 = sld [smem:[#allocation6 + %s473]]
      %s578 = scalar_lea.vmem %s5, %s577
      %v579 = vld [vmem:[%s578] sm:$0x1]
      %v580 = vld [vmem:[%s6 + $0x10] sm:$0x1]
      %v581 = vmul.f32 %v579, %v580
      %v582 = vadd.f32 %v570, %v581
      %s583 = sld [smem:[#allocation6 + %s480]]
      %s584 = scalar_lea.vmem %s5, %s583
      %v585 = vld [vmem:[%s584] sm:$0x1]
      %v586 = vld [vmem:[%s6 + $0x11] sm:$0x1]
      %v587 = vmul.f32 %v585, %v586
      %v588 = vadd.f32 %v576, %v587
      %s589 = sld [smem:[#allocation6 + %s487]]
      %s590 = scalar_lea.vmem %s5, %s589
      %v591 = vld [vmem:[%s590] sm:$0x1]
      %v592 = vld [vmem:[%s6 + $0x12] sm:$0x1]
      %v593 = vmul.f32 %v591, %v592
      %v594 = vadd.f32 %v582, %v593
      %v595 = vadd.f32 %v594, %v588
      %596 = vst.msk [vmem:[#allocation2 + $0x2] sm:$0x1] %vm345, %v595
      %s597 = sadd.s32 %s221, 3
      %s598 = smul.u32 %s597, 128
      %s599 = sld [smem:[#allocation4 + %s598]]
      %s600 = scalar_lea.vmem %s3, %s599
      %v601 = vld [vmem:[%s600] sm:$0x1]
      %v602 = vld [vmem:[%s6] sm:$0x1]
      %v603 = vmul.f32 %v601, %v602
      %v604 = vadd.f32 %v603, 0.0
      %s605 = sadd.s32 %s598, 1
      %s606 = sld [smem:[#allocation4 + %s605]]
      %s607 = scalar_lea.vmem %s3, %s606
      %v608 = vld [vmem:[%s607] sm:$0x1]
      %v609 = vld [vmem:[%s6 + $0x1] sm:$0x1]
      %v610 = vmul.f32 %v608, %v609
      %v611 = vadd.f32 %v610, 0.0
      %s612 = sadd.s32 %s598, 2
      %s613 = sld [smem:[#allocation4 + %s612]]
      %s614 = scalar_lea.vmem %s3, %s613
      %v615 = vld [vmem:[%s614] sm:$0x1]
      %v616 = vld [vmem:[%s6 + $0x2] sm:$0x1]
      %v617 = vmul.f32 %v615, %v616
      %v618 = vadd.f32 %v604, %v617
      %s619 = sadd.s32 %s598, 3
      %s620 = sld [smem:[#allocation4 + %s619]]
      %s621 = scalar_lea.vmem %s3, %s620
      %v622 = vld [vmem:[%s621] sm:$0x1]
      %v623 = vld [vmem:[%s6 + $0x3] sm:$0x1]
      %v624 = vmul.f32 %v622, %v623
      %v625 = vadd.f32 %v611, %v624
      %s626 = sadd.s32 %s598, 4
      %s627 = sld [smem:[#allocation4 + %s626]]
      %s628 = scalar_lea.vmem %s3, %s627
      %v629 = vld [vmem:[%s628] sm:$0x1]
      %v630 = vld [vmem:[%s6 + $0x4] sm:$0x1]
      %v631 = vmul.f32 %v629, %v630
      %v632 = vadd.f32 %v618, %v631
      %s633 = sadd.s32 %s598, 5
      %s634 = sld [smem:[#allocation4 + %s633]]
      %s635 = scalar_lea.vmem %s3, %s634
      %v636 = vld [vmem:[%s635] sm:$0x1]
      %v637 = vld [vmem:[%s6 + $0x5] sm:$0x1]
      %v638 = vmul.f32 %v636, %v637
      %v639 = vadd.f32 %v625, %v638
      %s640 = sadd.s32 %s598, 6
      %s641 = sld [smem:[#allocation4 + %s640]]
      %s642 = scalar_lea.vmem %s3, %s641
      %v643 = vld [vmem:[%s642] sm:$0x1]
      %v644 = vld [vmem:[%s6 + $0x6] sm:$0x1]
      %v645 = vmul.f32 %v643, %v644
      %v646 = vadd.f32 %v632, %v645
      %s647 = sadd.s32 %s598, 7
      %s648 = sld [smem:[#allocation4 + %s647]]
      %s649 = scalar_lea.vmem %s3, %s648
      %v650 = vld [vmem:[%s649] sm:$0x1]
      %v651 = vld [vmem:[%s6 + $0x7] sm:$0x1]
      %v652 = vmul.f32 %v650, %v651
      %v653 = vadd.f32 %v639, %v652
      %s654 = sld [smem:[#allocation5 + %s598]]
      %s655 = scalar_lea.vmem %s4, %s654
      %v656 = vld [vmem:[%s655] sm:$0x1]
      %v657 = vld [vmem:[%s6 + $0x8] sm:$0x1]
      %v658 = vmul.f32 %v656, %v657
      %v659 = vadd.f32 %v646, %v658
      %s660 = sld [smem:[#allocation5 + %s605]]
      %s661 = scalar_lea.vmem %s4, %s660
      %v662 = vld [vmem:[%s661] sm:$0x1]
      %v663 = vld [vmem:[%s6 + $0x9] sm:$0x1]
      %v664 = vmul.f32 %v662, %v663
      %v665 = vadd.f32 %v653, %v664
      %s666 = sld [smem:[#allocation5 + %s612]]
      %s667 = scalar_lea.vmem %s4, %s666
      %v668 = vld [vmem:[%s667] sm:$0x1]
      %v669 = vld [vmem:[%s6 + $0xa] sm:$0x1]
      %v670 = vmul.f32 %v668, %v669
      %v671 = vadd.f32 %v659, %v670
      %s672 = sld [smem:[#allocation5 + %s619]]
      %s673 = scalar_lea.vmem %s4, %s672
      %v674 = vld [vmem:[%s673] sm:$0x1]
      %v675 = vld [vmem:[%s6 + $0xb] sm:$0x1]
      %v676 = vmul.f32 %v674, %v675
      %v677 = vadd.f32 %v665, %v676
      %s678 = sld [smem:[#allocation5 + %s626]]
      %s679 = scalar_lea.vmem %s4, %s678
      %v680 = vld [vmem:[%s679] sm:$0x1]
      %v681 = vld [vmem:[%s6 + $0xc] sm:$0x1]
      %v682 = vmul.f32 %v680, %v681
      %v683 = vadd.f32 %v671, %v682
      %s684 = sld [smem:[#allocation5 + %s633]]
      %s685 = scalar_lea.vmem %s4, %s684
      %v686 = vld [vmem:[%s685] sm:$0x1]
      %v687 = vld [vmem:[%s6 + $0xd] sm:$0x1]
      %v688 = vmul.f32 %v686, %v687
      %v689 = vadd.f32 %v677, %v688
      %s690 = sld [smem:[#allocation5 + %s640]]
      %s691 = scalar_lea.vmem %s4, %s690
      %v692 = vld [vmem:[%s691] sm:$0x1]
      %v693 = vld [vmem:[%s6 + $0xe] sm:$0x1]
      %v694 = vmul.f32 %v692, %v693
      %v695 = vadd.f32 %v683, %v694
      %s696 = sld [smem:[#allocation5 + %s647]]
      %s697 = scalar_lea.vmem %s4, %s696
      %v698 = vld [vmem:[%s697] sm:$0x1]
      %v699 = vld [vmem:[%s6 + $0xf] sm:$0x1]
      %v700 = vmul.f32 %v698, %v699
      %v701 = vadd.f32 %v689, %v700
      %s702 = sld [smem:[#allocation6 + %s598]]
      %s703 = scalar_lea.vmem %s5, %s702
      %v704 = vld [vmem:[%s703] sm:$0x1]
      %v705 = vld [vmem:[%s6 + $0x10] sm:$0x1]
      %v706 = vmul.f32 %v704, %v705
      %v707 = vadd.f32 %v695, %v706
      %s708 = sld [smem:[#allocation6 + %s605]]
      %s709 = scalar_lea.vmem %s5, %s708
      %v710 = vld [vmem:[%s709] sm:$0x1]
      %v711 = vld [vmem:[%s6 + $0x11] sm:$0x1]
      %v712 = vmul.f32 %v710, %v711
      %v713 = vadd.f32 %v701, %v712
      %s714 = sld [smem:[#allocation6 + %s612]]
      %s715 = scalar_lea.vmem %s5, %s714
      %v716 = vld [vmem:[%s715] sm:$0x1]
      %v717 = vld [vmem:[%s6 + $0x12] sm:$0x1]
      %v718 = vmul.f32 %v716, %v717
      %v719 = vadd.f32 %v707, %v718
      %v720 = vadd.f32 %v719, %v713
      %721 = vst.msk [vmem:[#allocation2 + $0x3] sm:$0x1] %vm345, %v720
      %s722 = sadd.s32 %s221, 4
      %s723 = smul.u32 %s722, 128
      %s724 = sld [smem:[#allocation4 + %s723]]
      %s725 = scalar_lea.vmem %s3, %s724
      %v726 = vld [vmem:[%s725] sm:$0x1]
      %v727 = vld [vmem:[%s6] sm:$0x1]
      %v728 = vmul.f32 %v726, %v727
      %v729 = vadd.f32 %v728, 0.0
      %s730 = sadd.s32 %s723, 1
      %s731 = sld [smem:[#allocation4 + %s730]]
      %s732 = scalar_lea.vmem %s3, %s731
      %v733 = vld [vmem:[%s732] sm:$0x1]
      %v734 = vld [vmem:[%s6 + $0x1] sm:$0x1]
      %v735 = vmul.f32 %v733, %v734
      %v736 = vadd.f32 %v735, 0.0
      %s737 = sadd.s32 %s723, 2
      %s738 = sld [smem:[#allocation4 + %s737]]
      %s739 = scalar_lea.vmem %s3, %s738
      %v740 = vld [vmem:[%s739] sm:$0x1]
      %v741 = vld [vmem:[%s6 + $0x2] sm:$0x1]
      %v742 = vmul.f32 %v740, %v741
      %v743 = vadd.f32 %v729, %v742
      %s744 = sadd.s32 %s723, 3
      %s745 = sld [smem:[#allocation4 + %s744]]
      %s746 = scalar_lea.vmem %s3, %s745
      %v747 = vld [vmem:[%s746] sm:$0x1]
      %v748 = vld [vmem:[%s6 + $0x3] sm:$0x1]
      %v749 = vmul.f32 %v747, %v748
      %v750 = vadd.f32 %v736, %v749
      %s751 = sadd.s32 %s723, 4
      %s752 = sld [smem:[#allocation4 + %s751]]
      %s753 = scalar_lea.vmem %s3, %s752
      %v754 = vld [vmem:[%s753] sm:$0x1]
      %v755 = vld [vmem:[%s6 + $0x4] sm:$0x1]
      %v756 = vmul.f32 %v754, %v755
      %v757 = vadd.f32 %v743, %v756
      %s758 = sadd.s32 %s723, 5
      %s759 = sld [smem:[#allocation4 + %s758]]
      %s760 = scalar_lea.vmem %s3, %s759
      %v761 = vld [vmem:[%s760] sm:$0x1]
      %v762 = vld [vmem:[%s6 + $0x5] sm:$0x1]
      %v763 = vmul.f32 %v761, %v762
      %v764 = vadd.f32 %v750, %v763
      %s765 = sadd.s32 %s723, 6
      %s766 = sld [smem:[#allocation4 + %s765]]
      %s767 = scalar_lea.vmem %s3, %s766
      %v768 = vld [vmem:[%s767] sm:$0x1]
      %v769 = vld [vmem:[%s6 + $0x6] sm:$0x1]
      %v770 = vmul.f32 %v768, %v769
      %v771 = vadd.f32 %v757, %v770
      %s772 = sadd.s32 %s723, 7
      %s773 = sld [smem:[#allocation4 + %s772]]
      %s774 = scalar_lea.vmem %s3, %s773
      %v775 = vld [vmem:[%s774] sm:$0x1]
      %v776 = vld [vmem:[%s6 + $0x7] sm:$0x1]
      %v777 = vmul.f32 %v775, %v776
      %v778 = vadd.f32 %v764, %v777
      %s779 = sld [smem:[#allocation5 + %s723]]
      %s780 = scalar_lea.vmem %s4, %s779
      %v781 = vld [vmem:[%s780] sm:$0x1]
      %v782 = vld [vmem:[%s6 + $0x8] sm:$0x1]
      %v783 = vmul.f32 %v781, %v782
      %v784 = vadd.f32 %v771, %v783
      %s785 = sld [smem:[#allocation5 + %s730]]
      %s786 = scalar_lea.vmem %s4, %s785
      %v787 = vld [vmem:[%s786] sm:$0x1]
      %v788 = vld [vmem:[%s6 + $0x9] sm:$0x1]
      %v789 = vmul.f32 %v787, %v788
      %v790 = vadd.f32 %v778, %v789
      %s791 = sld [smem:[#allocation5 + %s737]]
      %s792 = scalar_lea.vmem %s4, %s791
      %v793 = vld [vmem:[%s792] sm:$0x1]
      %v794 = vld [vmem:[%s6 + $0xa] sm:$0x1]
      %v795 = vmul.f32 %v793, %v794
      %v796 = vadd.f32 %v784, %v795
      %s797 = sld [smem:[#allocation5 + %s744]]
      %s798 = scalar_lea.vmem %s4, %s797
      %v799 = vld [vmem:[%s798] sm:$0x1]
      %v800 = vld [vmem:[%s6 + $0xb] sm:$0x1]
      %v801 = vmul.f32 %v799, %v800
      %v802 = vadd.f32 %v790, %v801
      %s803 = sld [smem:[#allocation5 + %s751]]
      %s804 = scalar_lea.vmem %s4, %s803
      %v805 = vld [vmem:[%s804] sm:$0x1]
      %v806 = vld [vmem:[%s6 + $0xc] sm:$0x1]
      %v807 = vmul.f32 %v805, %v806
      %v808 = vadd.f32 %v796, %v807
      %s809 = sld [smem:[#allocation5 + %s758]]
      %s810 = scalar_lea.vmem %s4, %s809
      %v811 = vld [vmem:[%s810] sm:$0x1]
      %v812 = vld [vmem:[%s6 + $0xd] sm:$0x1]
      %v813 = vmul.f32 %v811, %v812
      %v814 = vadd.f32 %v802, %v813
      %s815 = sld [smem:[#allocation5 + %s765]]
      %s816 = scalar_lea.vmem %s4, %s815
      %v817 = vld [vmem:[%s816] sm:$0x1]
      %v818 = vld [vmem:[%s6 + $0xe] sm:$0x1]
      %v819 = vmul.f32 %v817, %v818
      %v820 = vadd.f32 %v808, %v819
      %s821 = sld [smem:[#allocation5 + %s772]]
      %s822 = scalar_lea.vmem %s4, %s821
      %v823 = vld [vmem:[%s822] sm:$0x1]
      %v824 = vld [vmem:[%s6 + $0xf] sm:$0x1]
      %v825 = vmul.f32 %v823, %v824
      %v826 = vadd.f32 %v814, %v825
      %s827 = sld [smem:[#allocation6 + %s723]]
      %s828 = scalar_lea.vmem %s5, %s827
      %v829 = vld [vmem:[%s828] sm:$0x1]
      %v830 = vld [vmem:[%s6 + $0x10] sm:$0x1]
      %v831 = vmul.f32 %v829, %v830
      %v832 = vadd.f32 %v820, %v831
      %s833 = sld [smem:[#allocation6 + %s730]]
      %s834 = scalar_lea.vmem %s5, %s833
      %v835 = vld [vmem:[%s834] sm:$0x1]
      %v836 = vld [vmem:[%s6 + $0x11] sm:$0x1]
      %v837 = vmul.f32 %v835, %v836
      %v838 = vadd.f32 %v826, %v837
      %s839 = sld [smem:[#allocation6 + %s737]]
      %s840 = scalar_lea.vmem %s5, %s839
      %v841 = vld [vmem:[%s840] sm:$0x1]
      %v842 = vld [vmem:[%s6 + $0x12] sm:$0x1]
      %v843 = vmul.f32 %v841, %v842
      %v844 = vadd.f32 %v832, %v843
      %v845 = vadd.f32 %v844, %v838
      %846 = vst.msk [vmem:[#allocation2 + $0x4] sm:$0x1] %vm345, %v845
      %s847 = sadd.s32 %s221, 5
      %s848 = smul.u32 %s847, 128
      %s849 = sld [smem:[#allocation4 + %s848]]
      %s850 = scalar_lea.vmem %s3, %s849
      %v851 = vld [vmem:[%s850] sm:$0x1]
      %v852 = vld [vmem:[%s6] sm:$0x1]
      %v853 = vmul.f32 %v851, %v852
      %v854 = vadd.f32 %v853, 0.0
      %s855 = sadd.s32 %s848, 1
      %s856 = sld [smem:[#allocation4 + %s855]]
      %s857 = scalar_lea.vmem %s3, %s856
      %v858 = vld [vmem:[%s857] sm:$0x1]
      %v859 = vld [vmem:[%s6 + $0x1] sm:$0x1]
      %v860 = vmul.f32 %v858, %v859
      %v861 = vadd.f32 %v860, 0.0
      %s862 = sadd.s32 %s848, 2
      %s863 = sld [smem:[#allocation4 + %s862]]
      %s864 = scalar_lea.vmem %s3, %s863
      %v865 = vld [vmem:[%s864] sm:$0x1]
      %v866 = vld [vmem:[%s6 + $0x2] sm:$0x1]
      %v867 = vmul.f32 %v865, %v866
      %v868 = vadd.f32 %v854, %v867
      %s869 = sadd.s32 %s848, 3
      %s870 = sld [smem:[#allocation4 + %s869]]
      %s871 = scalar_lea.vmem %s3, %s870
      %v872 = vld [vmem:[%s871] sm:$0x1]
      %v873 = vld [vmem:[%s6 + $0x3] sm:$0x1]
      %v874 = vmul.f32 %v872, %v873
      %v875 = vadd.f32 %v861, %v874
      %s876 = sadd.s32 %s848, 4
      %s877 = sld [smem:[#allocation4 + %s876]]
      %s878 = scalar_lea.vmem %s3, %s877
      %v879 = vld [vmem:[%s878] sm:$0x1]
      %v880 = vld [vmem:[%s6 + $0x4] sm:$0x1]
      %v881 = vmul.f32 %v879, %v880
      %v882 = vadd.f32 %v868, %v881
      %s883 = sadd.s32 %s848, 5
      %s884 = sld [smem:[#allocation4 + %s883]]
      %s885 = scalar_lea.vmem %s3, %s884
      %v886 = vld [vmem:[%s885] sm:$0x1]
      %v887 = vld [vmem:[%s6 + $0x5] sm:$0x1]
      %v888 = vmul.f32 %v886, %v887
      %v889 = vadd.f32 %v875, %v888
      %s890 = sadd.s32 %s848, 6
      %s891 = sld [smem:[#allocation4 + %s890]]
      %s892 = scalar_lea.vmem %s3, %s891
      %v893 = vld [vmem:[%s892] sm:$0x1]
      %v894 = vld [vmem:[%s6 + $0x6] sm:$0x1]
      %v895 = vmul.f32 %v893, %v894
      %v896 = vadd.f32 %v882, %v895
      %s897 = sadd.s32 %s848, 7
      %s898 = sld [smem:[#allocation4 + %s897]]
      %s899 = scalar_lea.vmem %s3, %s898
      %v900 = vld [vmem:[%s899] sm:$0x1]
      %v901 = vld [vmem:[%s6 + $0x7] sm:$0x1]
      %v902 = vmul.f32 %v900, %v901
      %v903 = vadd.f32 %v889, %v902
      %s904 = sld [smem:[#allocation5 + %s848]]
      %s905 = scalar_lea.vmem %s4, %s904
      %v906 = vld [vmem:[%s905] sm:$0x1]
      %v907 = vld [vmem:[%s6 + $0x8] sm:$0x1]
      %v908 = vmul.f32 %v906, %v907
      %v909 = vadd.f32 %v896, %v908
      %s910 = sld [smem:[#allocation5 + %s855]]
      %s911 = scalar_lea.vmem %s4, %s910
      %v912 = vld [vmem:[%s911] sm:$0x1]
      %v913 = vld [vmem:[%s6 + $0x9] sm:$0x1]
      %v914 = vmul.f32 %v912, %v913
      %v915 = vadd.f32 %v903, %v914
      %s916 = sld [smem:[#allocation5 + %s862]]
      %s917 = scalar_lea.vmem %s4, %s916
      %v918 = vld [vmem:[%s917] sm:$0x1]
      %v919 = vld [vmem:[%s6 + $0xa] sm:$0x1]
      %v920 = vmul.f32 %v918, %v919
      %v921 = vadd.f32 %v909, %v920
      %s922 = sld [smem:[#allocation5 + %s869]]
      %s923 = scalar_lea.vmem %s4, %s922
      %v924 = vld [vmem:[%s923] sm:$0x1]
      %v925 = vld [vmem:[%s6 + $0xb] sm:$0x1]
      %v926 = vmul.f32 %v924, %v925
      %v927 = vadd.f32 %v915, %v926
      %s928 = sld [smem:[#allocation5 + %s876]]
      %s929 = scalar_lea.vmem %s4, %s928
      %v930 = vld [vmem:[%s929] sm:$0x1]
      %v931 = vld [vmem:[%s6 + $0xc] sm:$0x1]
      %v932 = vmul.f32 %v930, %v931
      %v933 = vadd.f32 %v921, %v932
      %s934 = sld [smem:[#allocation5 + %s883]]
      %s935 = scalar_lea.vmem %s4, %s934
      %v936 = vld [vmem:[%s935] sm:$0x1]
      %v937 = vld [vmem:[%s6 + $0xd] sm:$0x1]
      %v938 = vmul.f32 %v936, %v937
      %v939 = vadd.f32 %v927, %v938
      %s940 = sld [smem:[#allocation5 + %s890]]
      %s941 = scalar_lea.vmem %s4, %s940
      %v942 = vld [vmem:[%s941] sm:$0x1]
      %v943 = vld [vmem:[%s6 + $0xe] sm:$0x1]
      %v944 = vmul.f32 %v942, %v943
      %v945 = vadd.f32 %v933, %v944
      %s946 = sld [smem:[#allocation5 + %s897]]
      %s947 = scalar_lea.vmem %s4, %s946
      %v948 = vld [vmem:[%s947] sm:$0x1]
      %v949 = vld [vmem:[%s6 + $0xf] sm:$0x1]
      %v950 = vmul.f32 %v948, %v949
      %v951 = vadd.f32 %v939, %v950
      %s952 = sld [smem:[#allocation6 + %s848]]
      %s953 = scalar_lea.vmem %s5, %s952
      %v954 = vld [vmem:[%s953] sm:$0x1]
      %v955 = vld [vmem:[%s6 + $0x10] sm:$0x1]
      %v956 = vmul.f32 %v954, %v955
      %v957 = vadd.f32 %v945, %v956
      %s958 = sld [smem:[#allocation6 + %s855]]
      %s959 = scalar_lea.vmem %s5, %s958
      %v960 = vld [vmem:[%s959] sm:$0x1]
      %v961 = vld [vmem:[%s6 + $0x11] sm:$0x1]
      %v962 = vmul.f32 %v960, %v961
      %v963 = vadd.f32 %v951, %v962
      %s964 = sld [smem:[#allocation6 + %s862]]
      %s965 = scalar_lea.vmem %s5, %s964
      %v966 = vld [vmem:[%s965] sm:$0x1]
      %v967 = vld [vmem:[%s6 + $0x12] sm:$0x1]
      %v968 = vmul.f32 %v966, %v967
      %v969 = vadd.f32 %v957, %v968
      %v970 = vadd.f32 %v969, %v963
      %971 = vst.msk [vmem:[#allocation2 + $0x5] sm:$0x1] %vm345, %v970
      %s972 = sadd.s32 %s221, 6
      %s973 = smul.u32 %s972, 128
      %s974 = sld [smem:[#allocation4 + %s973]]
      %s975 = scalar_lea.vmem %s3, %s974
      %v976 = vld [vmem:[%s975] sm:$0x1]
      %v977 = vld [vmem:[%s6] sm:$0x1]
      %v978 = vmul.f32 %v976, %v977
      %v979 = vadd.f32 %v978, 0.0
      %s980 = sadd.s32 %s973, 1
      %s981 = sld [smem:[#allocation4 + %s980]]
      %s982 = scalar_lea.vmem %s3, %s981
      %v983 = vld [vmem:[%s982] sm:$0x1]
      %v984 = vld [vmem:[%s6 + $0x1] sm:$0x1]
      %v985 = vmul.f32 %v983, %v984
      %v986 = vadd.f32 %v985, 0.0
      %s987 = sadd.s32 %s973, 2
      %s988 = sld [smem:[#allocation4 + %s987]]
      %s989 = scalar_lea.vmem %s3, %s988
      %v990 = vld [vmem:[%s989] sm:$0x1]
      %v991 = vld [vmem:[%s6 + $0x2] sm:$0x1]
      %v992 = vmul.f32 %v990, %v991
      %v993 = vadd.f32 %v979, %v992
      %s994 = sadd.s32 %s973, 3
      %s995 = sld [smem:[#allocation4 + %s994]]
      %s996 = scalar_lea.vmem %s3, %s995
      %v997 = vld [vmem:[%s996] sm:$0x1]
      %v998 = vld [vmem:[%s6 + $0x3] sm:$0x1]
      %v999 = vmul.f32 %v997, %v998
      %v1000 = vadd.f32 %v986, %v999
      %s1001 = sadd.s32 %s973, 4
      %s1002 = sld [smem:[#allocation4 + %s1001]]
      %s1003 = scalar_lea.vmem %s3, %s1002
      %v1004 = vld [vmem:[%s1003] sm:$0x1]
      %v1005 = vld [vmem:[%s6 + $0x4] sm:$0x1]
      %v1006 = vmul.f32 %v1004, %v1005
      %v1007 = vadd.f32 %v993, %v1006
      %s1008 = sadd.s32 %s973, 5
      %s1009 = sld [smem:[#allocation4 + %s1008]]
      %s1010 = scalar_lea.vmem %s3, %s1009
      %v1011 = vld [vmem:[%s1010] sm:$0x1]
      %v1012 = vld [vmem:[%s6 + $0x5] sm:$0x1]
      %v1013 = vmul.f32 %v1011, %v1012
      %v1014 = vadd.f32 %v1000, %v1013
      %s1015 = sadd.s32 %s973, 6
      %s1016 = sld [smem:[#allocation4 + %s1015]]
      %s1017 = scalar_lea.vmem %s3, %s1016
      %v1018 = vld [vmem:[%s1017] sm:$0x1]
      %v1019 = vld [vmem:[%s6 + $0x6] sm:$0x1]
      %v1020 = vmul.f32 %v1018, %v1019
      %v1021 = vadd.f32 %v1007, %v1020
      %s1022 = sadd.s32 %s973, 7
      %s1023 = sld [smem:[#allocation4 + %s1022]]
      %s1024 = scalar_lea.vmem %s3, %s1023
      %v1025 = vld [vmem:[%s1024] sm:$0x1]
      %v1026 = vld [vmem:[%s6 + $0x7] sm:$0x1]
      %v1027 = vmul.f32 %v1025, %v1026
      %v1028 = vadd.f32 %v1014, %v1027
      %s1029 = sld [smem:[#allocation5 + %s973]]
      %s1030 = scalar_lea.vmem %s4, %s1029
      %v1031 = vld [vmem:[%s1030] sm:$0x1]
      %v1032 = vld [vmem:[%s6 + $0x8] sm:$0x1]
      %v1033 = vmul.f32 %v1031, %v1032
      %v1034 = vadd.f32 %v1021, %v1033
      %s1035 = sld [smem:[#allocation5 + %s980]]
      %s1036 = scalar_lea.vmem %s4, %s1035
      %v1037 = vld [vmem:[%s1036] sm:$0x1]
      %v1038 = vld [vmem:[%s6 + $0x9] sm:$0x1]
      %v1039 = vmul.f32 %v1037, %v1038
      %v1040 = vadd.f32 %v1028, %v1039
      %s1041 = sld [smem:[#allocation5 + %s987]]
      %s1042 = scalar_lea.vmem %s4, %s1041
      %v1043 = vld [vmem:[%s1042] sm:$0x1]
      %v1044 = vld [vmem:[%s6 + $0xa] sm:$0x1]
      %v1045 = vmul.f32 %v1043, %v1044
      %v1046 = vadd.f32 %v1034, %v1045
      %s1047 = sld [smem:[#allocation5 + %s994]]
      %s1048 = scalar_lea.vmem %s4, %s1047
      %v1049 = vld [vmem:[%s1048] sm:$0x1]
      %v1050 = vld [vmem:[%s6 + $0xb] sm:$0x1]
      %v1051 = vmul.f32 %v1049, %v1050
      %v1052 = vadd.f32 %v1040, %v1051
      %s1053 = sld [smem:[#allocation5 + %s1001]]
      %s1054 = scalar_lea.vmem %s4, %s1053
      %v1055 = vld [vmem:[%s1054] sm:$0x1]
      %v1056 = vld [vmem:[%s6 + $0xc] sm:$0x1]
      %v1057 = vmul.f32 %v1055, %v1056
      %v1058 = vadd.f32 %v1046, %v1057
      %s1059 = sld [smem:[#allocation5 + %s1008]]
      %s1060 = scalar_lea.vmem %s4, %s1059
      %v1061 = vld [vmem:[%s1060] sm:$0x1]
      %v1062 = vld [vmem:[%s6 + $0xd] sm:$0x1]
      %v1063 = vmul.f32 %v1061, %v1062
      %v1064 = vadd.f32 %v1052, %v1063
      %s1065 = sld [smem:[#allocation5 + %s1015]]
      %s1066 = scalar_lea.vmem %s4, %s1065
      %v1067 = vld [vmem:[%s1066] sm:$0x1]
      %v1068 = vld [vmem:[%s6 + $0xe] sm:$0x1]
      %v1069 = vmul.f32 %v1067, %v1068
      %v1070 = vadd.f32 %v1058, %v1069
      %s1071 = sld [smem:[#allocation5 + %s1022]]
      %s1072 = scalar_lea.vmem %s4, %s1071
      %v1073 = vld [vmem:[%s1072] sm:$0x1]
      %v1074 = vld [vmem:[%s6 + $0xf] sm:$0x1]
      %v1075 = vmul.f32 %v1073, %v1074
      %v1076 = vadd.f32 %v1064, %v1075
      %s1077 = sld [smem:[#allocation6 + %s973]]
      %s1078 = scalar_lea.vmem %s5, %s1077
      %v1079 = vld [vmem:[%s1078] sm:$0x1]
      %v1080 = vld [vmem:[%s6 + $0x10] sm:$0x1]
      %v1081 = vmul.f32 %v1079, %v1080
      %v1082 = vadd.f32 %v1070, %v1081
      %s1083 = sld [smem:[#allocation6 + %s980]]
      %s1084 = scalar_lea.vmem %s5, %s1083
      %v1085 = vld [vmem:[%s1084] sm:$0x1]
      %v1086 = vld [vmem:[%s6 + $0x11] sm:$0x1]
      %v1087 = vmul.f32 %v1085, %v1086
      %v1088 = vadd.f32 %v1076, %v1087
      %s1089 = sld [smem:[#allocation6 + %s987]]
      %s1090 = scalar_lea.vmem %s5, %s1089
      %v1091 = vld [vmem:[%s1090] sm:$0x1]
      %v1092 = vld [vmem:[%s6 + $0x12] sm:$0x1]
      %v1093 = vmul.f32 %v1091, %v1092
      %v1094 = vadd.f32 %v1082, %v1093
      %v1095 = vadd.f32 %v1094, %v1088
      %1096 = vst.msk [vmem:[#allocation2 + $0x6] sm:$0x1] %vm345, %v1095
      %s1097 = sadd.s32 %s221, 7
      %s1098 = smul.u32 %s1097, 128
      %s1099 = sld [smem:[#allocation4 + %s1098]]
      %s1100 = scalar_lea.vmem %s3, %s1099
      %v1101 = vld [vmem:[%s1100] sm:$0x1]
      %v1102 = vld [vmem:[%s6] sm:$0x1]
      %v1103 = vmul.f32 %v1101, %v1102
      %v1104 = vadd.f32 %v1103, 0.0
      %s1105 = sadd.s32 %s1098, 1
      %s1106 = sld [smem:[#allocation4 + %s1105]]
      %s1107 = scalar_lea.vmem %s3, %s1106
      %v1108 = vld [vmem:[%s1107] sm:$0x1]
      %v1109 = vld [vmem:[%s6 + $0x1] sm:$0x1]
      %v1110 = vmul.f32 %v1108, %v1109
      %v1111 = vadd.f32 %v1110, 0.0
      %s1112 = sadd.s32 %s1098, 2
      %s1113 = sld [smem:[#allocation4 + %s1112]]
      %s1114 = scalar_lea.vmem %s3, %s1113
      %v1115 = vld [vmem:[%s1114] sm:$0x1]
      %v1116 = vld [vmem:[%s6 + $0x2] sm:$0x1]
      %v1117 = vmul.f32 %v1115, %v1116
      %v1118 = vadd.f32 %v1104, %v1117
      %s1119 = sadd.s32 %s1098, 3
      %s1120 = sld [smem:[#allocation4 + %s1119]]
      %s1121 = scalar_lea.vmem %s3, %s1120
      %v1122 = vld [vmem:[%s1121] sm:$0x1]
      %v1123 = vld [vmem:[%s6 + $0x3] sm:$0x1]
      %v1124 = vmul.f32 %v1122, %v1123
      %v1125 = vadd.f32 %v1111, %v1124
      %s1126 = sadd.s32 %s1098, 4
      %s1127 = sld [smem:[#allocation4 + %s1126]]
      %s1128 = scalar_lea.vmem %s3, %s1127
      %v1129 = vld [vmem:[%s1128] sm:$0x1]
      %v1130 = vld [vmem:[%s6 + $0x4] sm:$0x1]
      %v1131 = vmul.f32 %v1129, %v1130
      %v1132 = vadd.f32 %v1118, %v1131
      %s1133 = sadd.s32 %s1098, 5
      %s1134 = sld [smem:[#allocation4 + %s1133]]
      %s1135 = scalar_lea.vmem %s3, %s1134
      %v1136 = vld [vmem:[%s1135] sm:$0x1]
      %v1137 = vld [vmem:[%s6 + $0x5] sm:$0x1]
      %v1138 = vmul.f32 %v1136, %v1137
      %v1139 = vadd.f32 %v1125, %v1138
      %s1140 = sadd.s32 %s1098, 6
      %s1141 = sld [smem:[#allocation4 + %s1140]]
      %s1142 = scalar_lea.vmem %s3, %s1141
      %v1143 = vld [vmem:[%s1142] sm:$0x1]
      %v1144 = vld [vmem:[%s6 + $0x6] sm:$0x1]
      %v1145 = vmul.f32 %v1143, %v1144
      %v1146 = vadd.f32 %v1132, %v1145
      %s1147 = sadd.s32 %s1098, 7
      %s1148 = sld [smem:[#allocation4 + %s1147]]
      %s1149 = scalar_lea.vmem %s3, %s1148
      %v1150 = vld [vmem:[%s1149] sm:$0x1]
      %v1151 = vld [vmem:[%s6 + $0x7] sm:$0x1]
      %v1152 = vmul.f32 %v1150, %v1151
      %v1153 = vadd.f32 %v1139, %v1152
      %s1154 = sld [smem:[#allocation5 + %s1098]]
      %s1155 = scalar_lea.vmem %s4, %s1154
      %v1156 = vld [vmem:[%s1155] sm:$0x1]
      %v1157 = vld [vmem:[%s6 + $0x8] sm:$0x1]
      %v1158 = vmul.f32 %v1156, %v1157
      %v1159 = vadd.f32 %v1146, %v1158
      %s1160 = sld [smem:[#allocation5 + %s1105]]
      %s1161 = scalar_lea.vmem %s4, %s1160
      %v1162 = vld [vmem:[%s1161] sm:$0x1]
      %v1163 = vld [vmem:[%s6 + $0x9] sm:$0x1]
      %v1164 = vmul.f32 %v1162, %v1163
      %v1165 = vadd.f32 %v1153, %v1164
      %s1166 = sld [smem:[#allocation5 + %s1112]]
      %s1167 = scalar_lea.vmem %s4, %s1166
      %v1168 = vld [vmem:[%s1167] sm:$0x1]
      %v1169 = vld [vmem:[%s6 + $0xa] sm:$0x1]
      %v1170 = vmul.f32 %v1168, %v1169
      %v1171 = vadd.f32 %v1159, %v1170
      %s1172 = sld [smem:[#allocation5 + %s1119]]
      %s1173 = scalar_lea.vmem %s4, %s1172
      %v1174 = vld [vmem:[%s1173] sm:$0x1]
      %v1175 = vld [vmem:[%s6 + $0xb] sm:$0x1]
      %v1176 = vmul.f32 %v1174, %v1175
      %v1177 = vadd.f32 %v1165, %v1176
      %s1178 = sld [smem:[#allocation5 + %s1126]]
      %s1179 = scalar_lea.vmem %s4, %s1178
      %v1180 = vld [vmem:[%s1179] sm:$0x1]
      %v1181 = vld [vmem:[%s6 + $0xc] sm:$0x1]
      %v1182 = vmul.f32 %v1180, %v1181
      %v1183 = vadd.f32 %v1171, %v1182
      %s1184 = sld [smem:[#allocation5 + %s1133]]
      %s1185 = scalar_lea.vmem %s4, %s1184
      %v1186 = vld [vmem:[%s1185] sm:$0x1]
      %v1187 = vld [vmem:[%s6 + $0xd] sm:$0x1]
      %v1188 = vmul.f32 %v1186, %v1187
      %v1189 = vadd.f32 %v1177, %v1188
      %s1190 = sld [smem:[#allocation5 + %s1140]]
      %s1191 = scalar_lea.vmem %s4, %s1190
      %v1192 = vld [vmem:[%s1191] sm:$0x1]
      %v1193 = vld [vmem:[%s6 + $0xe] sm:$0x1]
      %v1194 = vmul.f32 %v1192, %v1193
      %v1195 = vadd.f32 %v1183, %v1194
      %s1196 = sld [smem:[#allocation5 + %s1147]]
      %s1197 = scalar_lea.vmem %s4, %s1196
      %v1198 = vld [vmem:[%s1197] sm:$0x1]
      %v1199 = vld [vmem:[%s6 + $0xf] sm:$0x1]
      %v1200 = vmul.f32 %v1198, %v1199
      %v1201 = vadd.f32 %v1189, %v1200
      %s1202 = sld [smem:[#allocation6 + %s1098]]
      %s1203 = scalar_lea.vmem %s5, %s1202
      %v1204 = vld [vmem:[%s1203] sm:$0x1]
      %v1205 = vld [vmem:[%s6 + $0x10] sm:$0x1]
      %v1206 = vmul.f32 %v1204, %v1205
      %v1207 = vadd.f32 %v1195, %v1206
      %s1208 = sld [smem:[#allocation6 + %s1105]]
      %s1209 = scalar_lea.vmem %s5, %s1208
      %v1210 = vld [vmem:[%s1209] sm:$0x1]
      %v1211 = vld [vmem:[%s6 + $0x11] sm:$0x1]
      %v1212 = vmul.f32 %v1210, %v1211
      %v1213 = vadd.f32 %v1201, %v1212
      %s1214 = sld [smem:[#allocation6 + %s1112]]
      %s1215 = scalar_lea.vmem %s5, %s1214
      %v1216 = vld [vmem:[%s1215] sm:$0x1]
      %v1217 = vld [vmem:[%s6 + $0x12] sm:$0x1]
      %v1218 = vmul.f32 %v1216, %v1217
      %v1219 = vadd.f32 %v1207, %v1218
      %v1220 = vadd.f32 %v1219, %v1213
      %1221 = vst.msk [vmem:[#allocation2 + $0x7] sm:$0x1] %vm345, %v1220
      %v1222 = vld [vmem:[#allocation2] sm:$0xff]
      %vm1223 = vcmask 261120
      %v1224 = vsel %vm1223, %v1222, 0.0
      %1225 = vadd.xlane.f32.xlu0 %v1224
      %v1226 = vpop.xlane.xlu0 %1225
      %s1227 = sld [smem:[#allocation7]]
      %v1228 = vstv %s1227
      %v1229 = vadd.f32 %v1226, %v1228
      %vm1230 = vcmask 7168
      %1231 = vst.msk [vmem:[%s220] sm:$0xff] %vm1230, %v1229
      %p1232 = scmp.lt.s32.totalorder %s34, 1
      %s1233 = scalar_select %p1232, %s34, 1
      %s1234 = smul.addr %s1233, 8
      %s1235 = scalar_lea.vmem %s8, %s1234
      // Predicated region
      $region41: #{tpu_custom_call.1} parent=39 // pred_check
        %p1236 = pneg %p157
      $region42: #{tpu_custom_call.1} parent=39 // pred_check_branch
        %1238 = sbr.rel (%p1236) target = $region44
      $region43: #{tpu_custom_call.1} parent=39 // pred_region
        _
      $region44: #{tpu_custom_call.1} parent=39 // pred_fallthru
        _
    $region40: #{tpu_custom_call.1} parent=5 // pred_fallthru
      _
    %p1239 = scmp.le.s32.totalorder 2, %s29
    // Predicated region
    $region45: #{tpu_custom_call.1} parent=5 // pred_check
      %p1240 = pneg %p1239
    $region46: #{tpu_custom_call.1} parent=5 // pred_check_branch
      %1242 = sbr.rel (%p1240) target = $region48
    $region47: #{tpu_custom_call.1} parent=5 // pred_region
      %s1243 = ssub.s32 %s29, 2
      // Predicated region
      $region49: #{tpu_custom_call.1} parent=47 // pred_check
        %p1244 = pneg %p163
      $region50: #{tpu_custom_call.1} parent=47 // pred_check_branch
        %1246 = sbr.rel (%p1244) target = $region52
      $region51: #{tpu_custom_call.1} parent=47 // pred_region
        %p1247 = scmp.lt.s32.totalorder %s35, 1
        %s1248 = scalar_select %p1247, %s35, 1
        %s1249 = smul.addr %s1248, 8
        %s1250 = scalar_lea.vmem %s8, %s1249
      $region52: #{tpu_custom_call.1} parent=47 // pred_fallthru
        _
    $region48: #{tpu_custom_call.1} parent=5 // pred_fallthru
      _
  $region6: #{tpu_custom_call.1} parent=0 // loop_footer
    %s33 = sadd.s32 1, %s29
  $region7: #{tpu_custom_call.1} parent=0 // loop_footer_branch
    %28 = sbr.rel target = $region3
  $region8: #{tpu_custom_call.1} parent=0 // loop_exit
    _

</llo_original>
